<compile_context>
chip_gen: v7x
topology: tpu7x:2x2x1
jax: 0.10.0
libtpu: 0.0.40
codegen_flags: <defaults>
</compile_context>

<pallas_src>
import functools

import jax
import jax.numpy as jnp
import numpy as np
from jax.experimental import pallas as pl
from jax.experimental.pallas import tpu as pltpu


_KW = 9                         # width kernel size of every conv
_HALO = 4                       # per-layer halo = (KW - 1) // 2
_NLAYERS = 5
_TOTAL_HALO = _HALO * _NLAYERS  # 20 halo columns on each side of a tile
_BN_EPS = 1e-5
_TW_MAX = 2048                  # max W (lane) tile; sweepable (1024 / 2048)
_MXU_K = 256                    # MXU contraction depth (v6e/v7x; 128 on v5e divides it)


# ---------------------------------------------------------------------------
# Fused Pallas kernel: all five conv(1x9) + affine + ReLU layers per tile.
# ---------------------------------------------------------------------------
def _fused_kernel(x_hbm, w1, w2, w3, w4, w5, b1, b2, b3, b4, b5, o_ref,
                  xbuf, copy_sem, *, tw, w_total):
    # x_hbm : (B, C0p, wr + 40) bf16  raw HBM ref (pl.ANY); window DMA'd manually
    # wN    : (CoutN, 9*CinN)   bf16  conv weight, BN scale folded in (resident)
    # bN    : (CoutN, 1)        f32   fused bias (conv bias + BN shift)
    # o_ref : (1, 8, tw)        f32   final activations, W on lanes
    # xbuf  : (C0p, tw + 40)    bf16  VMEM landing buffer for the input window
    halo = _TOTAL_HALO
    win = tw + 2 * halo
    b = pl.program_id(0)
    t0 = pl.program_id(1) * tw                     # absolute start column of tile

    # Fetch this tile's overlapping halo'd input window straight from HBM
    # (overlapping windows can't be expressed with a Blocked index_map; manual
    # DMA here removes the old wrapper-side pre-windowing copy).
    start = pl.multiple_of(t0, 128)                # lane-aligned whenever nw > 1
    cp = pltpu.make_async_copy(x_hbm.at[b, :, pl.ds(start, win)], xbuf, copy_sem)
    cp.start()

    # One column-position row per tile (hoisted out of per-layer masking; JAX
    # does not CSE broadcast_in_dim/iota).  pos[0, c] = absolute column index
    # of window column c.  Computed while the input DMA is in flight.
    pos = (t0 - halo) + jax.lax.broadcasted_iota(jnp.int32, (1, win), 1)

    def conv_affine_relu(a, w_ref, b_ref):
        # a: (Cin_p, win_l) bf16  ->  (Cout, win_l - 8) f32
        cin_p = w_ref.shape[1] // _KW
        wout = a.shape[1] - (_KW - 1)
        # K-chunked im2col + accumulate: each chunk is exactly one MXU-depth
        # (256) contraction and its weight slice is lane-aligned, so chunking
        # adds no K-padding passes while letting the col build of chunk j+1
        # overlap chunk j's matmul.  Layers whose cin_p doesn't divide 256
        # (layer 1, cin_p = 56) stay unchunked (a split would add a K pass).
        tpc = (_MXU_K // cin_p) if (_MXU_K % cin_p == 0) else _KW
        y = None
        j = 0
        while j < _KW:
            nt = min(tpc, _KW - j)
            col = jnp.concatenate(
                [a[:, t:t + wout] for t in range(j, j + nt)], axis=0)
            part = jnp.dot(w_ref[:, j * cin_p:(j + nt) * cin_p], col,
                           preferred_element_type=jnp.float32)
            y = part if y is None else y + part
            j += nt
        return jnp.maximum(y + b_ref[...], 0.0)

    def mask_cols(y, m):
        # Zero columns whose absolute position lies outside [0, W): exactly the
        # zero "same"-padding the next fused conv layer expects.  The (1, wout)
        # keep-row broadcasts over Cout.
        p = pos[:, halo - m: halo - m + y.shape[1]]
        keep = jnp.logical_and(p >= 0, p < w_total)
        return jnp.where(keep, y, 0.0).astype(jnp.bfloat16)

    cp.wait()
    x = xbuf[...]                                      # (C0p, tw + 40)
    a = mask_cols(conv_affine_relu(x, w1, b1), 16)     # (128, tw + 32)
    a = mask_cols(conv_affine_relu(a, w2, b2), 12)     # (64,  tw + 24)
    a = mask_cols(conv_affine_relu(a, w3, b3), 8)      # (128, tw + 16)
    a = mask_cols(conv_affine_relu(a, w4, b4), 4)      # (64,  tw + 8)
    y = conv_affine_relu(a, w5, b5)                    # (8,   tw)
    o_ref[0] = y.astype(o_ref.dtype)


# ---------------------------------------------------------------------------
# Tile selection: biggest lane tile (amortizes halo/lane padding/per-step
# overhead), but keep >= 2 grid tiles when B == 1 so both v7x TensorCores work.
# ---------------------------------------------------------------------------
def _pick_tile(w_total, batch):
    if w_total > _TW_MAX:
        tw = _TW_MAX                                     # multiple of 128
    elif batch == 1 and w_total >= 256:
        tw = (((w_total + 1) // 2) + 127) // 128 * 128   # ~W/2, 128-aligned
    else:
        tw = w_total                                     # single full-width tile
    nw = -(-w_total // tw)
    return tw, nw


# ---------------------------------------------------------------------------
# Forward pass wrapper
# ---------------------------------------------------------------------------
def basic_conv_forward(x_nchw, kernel_params):
    """x_nchw: (B, 1, 50, W) f32.  Returns (B, 8, 1, W) f32 (PyTorch NCHW)."""
    wmats = [p[0] for p in kernel_params]
    bcols = [p[1] for p in kernel_params]
    B, C, H, W = x_nchw.shape
    assert C == 1 and H == 50, "conv1 kernel is (50, 9) with no H padding"
    c0p = wmats[0].shape[1] // _KW        # layer-1 input rows, padded 50 -> 56

    halo = _TOTAL_HALO
    tw, nw = _pick_tile(W, B)
    wr = nw * tw

    # (B, 1, 50, W) -> (B, 56, wr + 2*halo): H rows become sublane "channels",
    # W stays on lanes; zero-pad rows 50..55, the halo and the round-up region.
    # (Layer 1's "same" padding comes from these real zeros; deeper layers use
    # mask_cols.)  No pre-windowing copy: the kernel fetches its own window.
    x = x_nchw[:, 0].astype(jnp.bfloat16)
    x = jnp.pad(x, ((0, 0), (0, c0p - H), (halo, halo + wr - W)))

    kern = functools.partial(_fused_kernel, tw=tw, w_total=W)
    resident = dict(pipeline_mode=pl.Buffered(1))   # constant blocks: 1 buffer
    out = pl.pallas_call(
        kern,
        out_shape=jax.ShapeDtypeStruct((B, 8, wr), jnp.float32),
        grid=(B, nw),
        in_specs=(
            [pl.BlockSpec(memory_space=pl.ANY)]     # raw HBM input, manual DMA
            + [pl.BlockSpec(w.shape, lambda b, i: (0, 0), **resident)
               for w in wmats]
            + [pl.BlockSpec(v.shape, lambda b, i: (0, 0), **resident)
               for v in bcols]),
        out_specs=pl.BlockSpec((1, 8, tw), lambda b, i: (b, 0, i)),
        scratch_shapes=[
            pltpu.VMEM((c0p, tw + 2 * halo), jnp.bfloat16),
            pltpu.SemaphoreType.DMA(()),
        ],
        compiler_params=pltpu.CompilerParams(
            dimension_semantics=("parallel", "parallel"),
            vmem_limit_bytes=32 * 1024 * 1024),
    )(x, *wmats, *bcols)

    return out[:, :, :W][:, :, None, :]               # (B, 8, 1, W)


# ---------------------------------------------------------------------------
# Deterministic parameter construction (PyTorch layouts) + kernel-layout fold
# ---------------------------------------------------------------------------
_LAYER_SPECS = [
    # (Cin, Cout, kh, has_bn)
    (1, 128, 50, True),
    (128, 64, 1, True),
    (64, 128, 1, True),
    (128, 64, 1, False),
    (64, 8, 1, False),
]


def init_params(key):
    torch_layers, kernel_params = [], []
    for (cin, cout, kh, has_bn), lk in zip(
            _LAYER_SPECS, jax.random.split(key, len(_LAYER_SPECS))):
        sk = jax.random.split(lk, 6)
        fan_in = cin * kh * _KW
        w = jax.random.normal(sk[0], (cout, cin, kh, _KW), jnp.float32) / np.sqrt(fan_in)
        b = 0.1 * jax.random.normal(sk[1], (cout,), jnp.float32)
        if has_bn:
            gamma = 1.0 + 0.1 * jax.random.normal(sk[2], (cout,), jnp.float32)
            beta = 0.1 * jax.random.normal(sk[3], (cout,), jnp.float32)
            mean = 0.1 * jax.random.normal(sk[4], (cout,), jnp.float32)
            var = jax.random.uniform(sk[5], (cout,), jnp.float32, 0.5, 1.5)
            bn = (gamma, beta, mean, var)
            scale = gamma * jax.lax.rsqrt(var + _BN_EPS)
            bias = beta + (b - mean) * scale
        else:
            bn = None
            scale = jnp.ones((cout,), jnp.float32)
            bias = b
        torch_layers.append({"w": w, "b": b, "bn": bn})

        # OIHW -> (Cout, kw, Cin*kh): conv1's 50 H-rows collapse into input
        # channels.  Sublane-pad the channel axis to a multiple of 8, fold in
        # the BN scale, cast to bf16.  Wmat[o, j*Cp + c] = w[o, c, j].
        c_eff = cin * kh
        w_eff = jnp.transpose(w.reshape(cout, c_eff, _KW), (0, 2, 1))
        c_pad = (-c_eff) % 8
        w_eff = jnp.pad(w_eff, ((0, 0), (0, 0), (0, c_pad)))
        wmat = (w_eff.reshape(cout, _KW * (c_eff + c_pad))
                * scale[:, None]).astype(jnp.bfloat16)
        kernel_params.append((wmat, bias.reshape(cout, 1).astype(jnp.float32)))
    return torch_layers, kernel_params


# ---------------------------------------------------------------------------
# Pure-JAX f32 reference (mirrors PyTorch semantics, BN in eval mode)
# ---------------------------------------------------------------------------
def reference_forward(x, torch_layers):
    h = x
    for p in torch_layers:
        h = jax.lax.conv_general_dilated(
            h, p["w"], window_strides=(1, 1),
            padding=((0, 0), (4, 4)),
            dimension_numbers=("NCHW", "OIHW", "NCHW"))
        h = h + p["b"][None, :, None, None]
        if p["bn"] is not None:
            g, bt, m, v = p["bn"]
            h = (g[None, :, None, None] * (h - m[None, :, None, None])
                 * jax.lax.rsqrt(v + _BN_EPS)[None, :, None, None]
                 + bt[None, :, None, None])
        h = jnp.maximum(h, 0.0)
    return h


if __name__ == "__main__":
    key = jax.random.PRNGKey(0)
    k_x, k_p, k_x2 = jax.random.split(key, 3)
    torch_layers, kernel_params = init_params(k_p)
    fwd = jax.jit(basic_conv_forward)

    # Small valid input: conv1 needs H == 50 (kernel height 50, no H padding).
    x = jax.random.normal(k_x, (2, 1, 50, 16), jnp.float32)
    out = jax.block_until_ready(fwd(x, kernel_params))
    ref = jax.block_until_ready(reference_forward(x, torch_layers))
    assert out.shape == (2, 8, 1, 16), out.shape
    # bf16 storage with f32 accumulation -> ~1% numerical difference vs the
    # f32 reference; 4e-2 gives comfortable margin.
    np.testing.assert_allclose(np.asarray(out), np.asarray(ref),
                               rtol=4e-2, atol=4e-2)

    # Second check: exercises the multi-tile path (nw > 1, masking across tile
    # boundaries) and the B == 1 megacore width-split.
    x2 = jax.random.normal(k_x2, (1, 1, 50, 300), jnp.float32)
    out2 = jax.block_until_ready(fwd(x2, kernel_params))
    ref2 = jax.block_until_ready(reference_forward(x2, torch_layers))
    assert out2.shape == (1, 8, 1, 300), out2.shape
    np.testing.assert_allclose(np.asarray(out2), np.asarray(ref2),
                               rtol=4e-2, atol=4e-2)

    print("KERNEL_OK")
</pallas_src>

<mosaic_0001>
module attributes {stable_mosaic.version = 11 : i64} {
  func.func @_fused_kernel(%arg0: i32, %arg1: i32, %arg2: memref<2x56x56xbf16, #tpu.memory_space<any>>, %arg3: memref<128x504xbf16, #tpu.memory_space<vmem>>, %arg4: memref<64x1152xbf16, #tpu.memory_space<vmem>>, %arg5: memref<128x576xbf16, #tpu.memory_space<vmem>>, %arg6: memref<64x1152xbf16, #tpu.memory_space<vmem>>, %arg7: memref<8x576xbf16, #tpu.memory_space<vmem>>, %arg8: memref<128x1xf32, #tpu.memory_space<vmem>>, %arg9: memref<64x1xf32, #tpu.memory_space<vmem>>, %arg10: memref<128x1xf32, #tpu.memory_space<vmem>>, %arg11: memref<64x1xf32, #tpu.memory_space<vmem>>, %arg12: memref<8x1xf32, #tpu.memory_space<vmem>>, %arg13: memref<1x8x16xf32, #tpu.memory_space<vmem>>, %arg14: memref<56x56xbf16, #tpu.memory_space<vmem>>, %arg15: memref<!tpu.dma_semaphore, #tpu.memory_space<semaphore_mem>>) attributes {dimension_semantics = [#tpu.dimension_semantics<parallel>, #tpu.dimension_semantics<parallel>], iteration_bounds = array<i64: 2, 1>, scalar_prefetch = 0 : i64, scratch_operands = 2 : i64, tpu.core_type = #tpu.core_type<tc>, window_params = [{}, {pipeline_mode = #tpu.pipeline_mode<synchronous>, transform_indices = @transform_1, window_bounds = array<i64: 128, 504>}, {pipeline_mode = #tpu.pipeline_mode<synchronous>, transform_indices = @transform_2, window_bounds = array<i64: 64, 1152>}, {pipeline_mode = #tpu.pipeline_mode<synchronous>, transform_indices = @transform_3, window_bounds = array<i64: 128, 576>}, {pipeline_mode = #tpu.pipeline_mode<synchronous>, transform_indices = @transform_4, window_bounds = array<i64: 64, 1152>}, {pipeline_mode = #tpu.pipeline_mode<synchronous>, transform_indices = @transform_5, window_bounds = array<i64: 8, 576>}, {pipeline_mode = #tpu.pipeline_mode<synchronous>, transform_indices = @transform_6, window_bounds = array<i64: 128, 1>}, {pipeline_mode = #tpu.pipeline_mode<synchronous>, transform_indices = @transform_7, window_bounds = array<i64: 64, 1>}, {pipeline_mode = #tpu.pipeline_mode<synchronous>, transform_indices = @transform_8, window_bounds = array<i64: 128, 1>}, {pipeline_mode = #tpu.pipeline_mode<synchronous>, transform_indices = @transform_9, window_bounds = array<i64: 64, 1>}, {pipeline_mode = #tpu.pipeline_mode<synchronous>, transform_indices = @transform_10, window_bounds = array<i64: 8, 1>}, {transform_indices = @transform_11, window_bounds = array<i64: 1, 8, 16>}]} {
    %c16_i32 = arith.constant 16 : i32
    %0 = arith.muli %arg1, %c16_i32 : i32
    %1 = tpu.assume_multiple %0, 128 : i32
    %c0_i32 = arith.constant 0 : i32
    %2 = tpu.memref_slice %arg2[%arg0, %c0_i32, %1] : memref<2x56x56xbf16, #tpu.memory_space<any>> -> memref<1x56x56xbf16, #tpu.memory_space<any>>
    %3 = tpu.memref_squeeze %2 : memref<1x56x56xbf16, #tpu.memory_space<any>> -> memref<56x56xbf16, #tpu.memory_space<any>>
    tpu.enqueue_dma source(%3 : memref<56x56xbf16, #tpu.memory_space<any>>) target(%arg14 : memref<56x56xbf16, #tpu.memory_space<vmem>>) target_semaphore(%arg15 : memref<!tpu.dma_semaphore, #tpu.memory_space<semaphore_mem>>)
    %c20_i32 = arith.constant 20 : i32
    %4 = arith.subi %0, %c20_i32 : i32
    %5 = tpu.iota {dimensions = array<i32: 1>} : vector<1x56xi32>
    %6 = vector.broadcast %4 : i32 to vector<1x56xi32>
    %7 = arith.addi %6, %5 : vector<1x56xi32>
    %c0_i32_0 = arith.constant 0 : i32
    %8 = tpu.memref_slice %arg2[%arg0, %c0_i32_0, %1] : memref<2x56x56xbf16, #tpu.memory_space<any>> -> memref<1x56x56xbf16, #tpu.memory_space<any>>
    %9 = tpu.memref_squeeze %8 : memref<1x56x56xbf16, #tpu.memory_space<any>> -> memref<56x56xbf16, #tpu.memory_space<any>>
    tpu.wait_dma2 semaphore(%arg15 : memref<!tpu.dma_semaphore, #tpu.memory_space<semaphore_mem>>) src(%9 : memref<56x56xbf16, #tpu.memory_space<any>>) dst(%arg14 : memref<56x56xbf16, #tpu.memory_space<vmem>>)
    %c0 = arith.constant 0 : index
    %c0_1 = arith.constant 0 : index
    %10 = vector.load %arg14[%c0, %c0_1] : memref<56x56xbf16, #tpu.memory_space<vmem>>, vector<56x56xbf16>
    %11 = vector.extract_strided_slice %10 {offsets = [0, 0], sizes = [56, 48], strides = [1, 1]} : vector<56x56xbf16> to vector<56x48xbf16>
    %12 = vector.extract_strided_slice %10 {offsets = [0, 1], sizes = [56, 48], strides = [1, 1]} : vector<56x56xbf16> to vector<56x48xbf16>
    %13 = vector.extract_strided_slice %10 {offsets = [0, 2], sizes = [56, 48], strides = [1, 1]} : vector<56x56xbf16> to vector<56x48xbf16>
    %14 = vector.extract_strided_slice %10 {offsets = [0, 3], sizes = [56, 48], strides = [1, 1]} : vector<56x56xbf16> to vector<56x48xbf16>
    %15 = vector.extract_strided_slice %10 {offsets = [0, 4], sizes = [56, 48], strides = [1, 1]} : vector<56x56xbf16> to vector<56x48xbf16>
    %16 = vector.extract_strided_slice %10 {offsets = [0, 5], sizes = [56, 48], strides = [1, 1]} : vector<56x56xbf16> to vector<56x48xbf16>
    %17 = vector.extract_strided_slice %10 {offsets = [0, 6], sizes = [56, 48], strides = [1, 1]} : vector<56x56xbf16> to vector<56x48xbf16>
    %18 = vector.extract_strided_slice %10 {offsets = [0, 7], sizes = [56, 48], strides = [1, 1]} : vector<56x56xbf16> to vector<56x48xbf16>
    %19 = vector.extract_strided_slice %10 {offsets = [0, 8], sizes = [56, 48], strides = [1, 1]} : vector<56x56xbf16> to vector<56x48xbf16>
    %20 = tpu.concatenate %11, %12, %13, %14, %15, %16, %17, %18, %19 in 0 : vector<56x48xbf16>, vector<56x48xbf16>, vector<56x48xbf16>, vector<56x48xbf16>, vector<56x48xbf16>, vector<56x48xbf16>, vector<56x48xbf16>, vector<56x48xbf16>, vector<56x48xbf16> -> vector<504x48xbf16>
    %c0_2 = arith.constant 0 : index
    %c0_3 = arith.constant 0 : index
    %21 = vector.load %arg3[%c0_2, %c0_3] : memref<128x504xbf16, #tpu.memory_space<vmem>>, vector<128x504xbf16>
    %cst = arith.constant dense<0.000000e+00> : vector<128x48xf32>
    %22 = tpu.matmul %21, %20, %cst {dimension_numbers = #tpu.dot_dimension_numbers<[1], [0], [0], [1], [0, 0, 1, 1], [], []>} : vector<128x504xbf16>, vector<504x48xbf16>, vector<128x48xf32> -> vector<128x48xf32>
    %c0_4 = arith.constant 0 : index
    %c0_5 = arith.constant 0 : index
    %23 = vector.load %arg8[%c0_4, %c0_5] : memref<128x1xf32, #tpu.memory_space<vmem>>, vector<128x1xf32>
    %24 = vector.broadcast %23 : vector<128x1xf32> to vector<128x48xf32>
    %25 = arith.addf %22, %24 : vector<128x48xf32>
    %cst_6 = arith.constant 0.000000e+00 : f32
    %26 = vector.broadcast %cst_6 : f32 to vector<128x48xf32>
    %27 = arith.maximumf %25, %26 : vector<128x48xf32>
    %28 = vector.extract_strided_slice %7 {offsets = [0, 4], sizes = [1, 48], strides = [1, 1]} : vector<1x56xi32> to vector<1x48xi32>
    %c0_i32_7 = arith.constant 0 : i32
    %29 = vector.broadcast %c0_i32_7 : i32 to vector<1x48xi32>
    %30 = arith.cmpi sge, %28, %29 : vector<1x48xi32>
    %c16_i32_8 = arith.constant 16 : i32
    %31 = vector.broadcast %c16_i32_8 : i32 to vector<1x48xi32>
    %32 = arith.cmpi slt, %28, %31 : vector<1x48xi32>
    %33 = arith.andi %30, %32 : vector<1x48xi1>
    %cst_9 = arith.constant 0.000000e+00 : f32
    %34 = vector.shape_cast %33 : vector<1x48xi1> to vector<1x48xi1>
    %35 = vector.broadcast %34 : vector<1x48xi1> to vector<128x48xi1>
    %36 = vector.broadcast %cst_9 : f32 to vector<128x48xf32>
    %37 = arith.select %35, %27, %36 : vector<128x48xi1>, vector<128x48xf32>
    %38 = arith.truncf %37 : vector<128x48xf32> to vector<128x48xbf16>
    %39 = vector.extract_strided_slice %38 {offsets = [0, 0], sizes = [128, 40], strides = [1, 1]} : vector<128x48xbf16> to vector<128x40xbf16>
    %40 = vector.extract_strided_slice %38 {offsets = [0, 1], sizes = [128, 40], strides = [1, 1]} : vector<128x48xbf16> to vector<128x40xbf16>
    %41 = tpu.concatenate %39, %40 in 0 : vector<128x40xbf16>, vector<128x40xbf16> -> vector<256x40xbf16>
    %c0_10 = arith.constant 0 : index
    %c0_11 = arith.constant 0 : index
    %42 = vector.load %arg4[%c0_10, %c0_11] : memref<64x1152xbf16, #tpu.memory_space<vmem>>, vector<64x256xbf16>
    %cst_12 = arith.constant dense<0.000000e+00> : vector<64x40xf32>
    %43 = tpu.matmul %42, %41, %cst_12 {dimension_numbers = #tpu.dot_dimension_numbers<[1], [0], [0], [1], [0, 0, 1, 1], [], []>} : vector<64x256xbf16>, vector<256x40xbf16>, vector<64x40xf32> -> vector<64x40xf32>
    %44 = vector.extract_strided_slice %38 {offsets = [0, 2], sizes = [128, 40], strides = [1, 1]} : vector<128x48xbf16> to vector<128x40xbf16>
    %45 = vector.extract_strided_slice %38 {offsets = [0, 3], sizes = [128, 40], strides = [1, 1]} : vector<128x48xbf16> to vector<128x40xbf16>
    %46 = tpu.concatenate %44, %45 in 0 : vector<128x40xbf16>, vector<128x40xbf16> -> vector<256x40xbf16>
    %c0_13 = arith.constant 0 : index
    %c256 = arith.constant 256 : index
    %47 = vector.load %arg4[%c0_13, %c256] : memref<64x1152xbf16, #tpu.memory_space<vmem>>, vector<64x256xbf16>
    %cst_14 = arith.constant dense<0.000000e+00> : vector<64x40xf32>
    %48 = tpu.matmul %47, %46, %cst_14 {dimension_numbers = #tpu.dot_dimension_numbers<[1], [0], [0], [1], [0, 0, 1, 1], [], []>} : vector<64x256xbf16>, vector<256x40xbf16>, vector<64x40xf32> -> vector<64x40xf32>
    %49 = arith.addf %43, %48 : vector<64x40xf32>
    %50 = vector.extract_strided_slice %38 {offsets = [0, 4], sizes = [128, 40], strides = [1, 1]} : vector<128x48xbf16> to vector<128x40xbf16>
    %51 = vector.extract_strided_slice %38 {offsets = [0, 5], sizes = [128, 40], strides = [1, 1]} : vector<128x48xbf16> to vector<128x40xbf16>
    %52 = tpu.concatenate %50, %51 in 0 : vector<128x40xbf16>, vector<128x40xbf16> -> vector<256x40xbf16>
    %c0_15 = arith.constant 0 : index
    %c512 = arith.constant 512 : index
    %53 = vector.load %arg4[%c0_15, %c512] : memref<64x1152xbf16, #tpu.memory_space<vmem>>, vector<64x256xbf16>
    %cst_16 = arith.constant dense<0.000000e+00> : vector<64x40xf32>
    %54 = tpu.matmul %53, %52, %cst_16 {dimension_numbers = #tpu.dot_dimension_numbers<[1], [0], [0], [1], [0, 0, 1, 1], [], []>} : vector<64x256xbf16>, vector<256x40xbf16>, vector<64x40xf32> -> vector<64x40xf32>
    %55 = arith.addf %49, %54 : vector<64x40xf32>
    %56 = vector.extract_strided_slice %38 {offsets = [0, 6], sizes = [128, 40], strides = [1, 1]} : vector<128x48xbf16> to vector<128x40xbf16>
    %57 = vector.extract_strided_slice %38 {offsets = [0, 7], sizes = [128, 40], strides = [1, 1]} : vector<128x48xbf16> to vector<128x40xbf16>
    %58 = tpu.concatenate %56, %57 in 0 : vector<128x40xbf16>, vector<128x40xbf16> -> vector<256x40xbf16>
    %c0_17 = arith.constant 0 : index
    %c768 = arith.constant 768 : index
    %59 = vector.load %arg4[%c0_17, %c768] : memref<64x1152xbf16, #tpu.memory_space<vmem>>, vector<64x256xbf16>
    %cst_18 = arith.constant dense<0.000000e+00> : vector<64x40xf32>
    %60 = tpu.matmul %59, %58, %cst_18 {dimension_numbers = #tpu.dot_dimension_numbers<[1], [0], [0], [1], [0, 0, 1, 1], [], []>} : vector<64x256xbf16>, vector<256x40xbf16>, vector<64x40xf32> -> vector<64x40xf32>
    %61 = arith.addf %55, %60 : vector<64x40xf32>
    %62 = vector.extract_strided_slice %38 {offsets = [0, 8], sizes = [128, 40], strides = [1, 1]} : vector<128x48xbf16> to vector<128x40xbf16>
    %c0_19 = arith.constant 0 : index
    %c1024 = arith.constant 1024 : index
    %63 = vector.load %arg4[%c0_19, %c1024] : memref<64x1152xbf16, #tpu.memory_space<vmem>>, vector<64x128xbf16>
    %cst_20 = arith.constant dense<0.000000e+00> : vector<64x40xf32>
    %64 = tpu.matmul %63, %62, %cst_20 {dimension_numbers = #tpu.dot_dimension_numbers<[1], [0], [0], [1], [0, 0, 1, 1], [], []>} : vector<64x128xbf16>, vector<128x40xbf16>, vector<64x40xf32> -> vector<64x40xf32>
    %65 = arith.addf %61, %64 : vector<64x40xf32>
    %c0_21 = arith.constant 0 : index
    %c0_22 = arith.constant 0 : index
    %66 = vector.load %arg9[%c0_21, %c0_22] : memref<64x1xf32, #tpu.memory_space<vmem>>, vector<64x1xf32>
    %67 = vector.broadcast %66 : vector<64x1xf32> to vector<64x40xf32>
    %68 = arith.addf %65, %67 : vector<64x40xf32>
    %cst_23 = arith.constant 0.000000e+00 : f32
    %69 = vector.broadcast %cst_23 : f32 to vector<64x40xf32>
    %70 = arith.maximumf %68, %69 : vector<64x40xf32>
    %71 = vector.extract_strided_slice %7 {offsets = [0, 8], sizes = [1, 40], strides = [1, 1]} : vector<1x56xi32> to vector<1x40xi32>
    %c0_i32_24 = arith.constant 0 : i32
    %72 = vector.broadcast %c0_i32_24 : i32 to vector<1x40xi32>
    %73 = arith.cmpi sge, %71, %72 : vector<1x40xi32>
    %c16_i32_25 = arith.constant 16 : i32
    %74 = vector.broadcast %c16_i32_25 : i32 to vector<1x40xi32>
    %75 = arith.cmpi slt, %71, %74 : vector<1x40xi32>
    %76 = arith.andi %73, %75 : vector<1x40xi1>
    %cst_26 = arith.constant 0.000000e+00 : f32
    %77 = vector.shape_cast %76 : vector<1x40xi1> to vector<1x40xi1>
    %78 = vector.broadcast %77 : vector<1x40xi1> to vector<64x40xi1>
    %79 = vector.broadcast %cst_26 : f32 to vector<64x40xf32>
    %80 = arith.select %78, %70, %79 : vector<64x40xi1>, vector<64x40xf32>
    %81 = arith.truncf %80 : vector<64x40xf32> to vector<64x40xbf16>
    %82 = vector.extract_strided_slice %81 {offsets = [0, 0], sizes = [64, 32], strides = [1, 1]} : vector<64x40xbf16> to vector<64x32xbf16>
    %83 = vector.extract_strided_slice %81 {offsets = [0, 1], sizes = [64, 32], strides = [1, 1]} : vector<64x40xbf16> to vector<64x32xbf16>
    %84 = vector.extract_strided_slice %81 {offsets = [0, 2], sizes = [64, 32], strides = [1, 1]} : vector<64x40xbf16> to vector<64x32xbf16>
    %85 = vector.extract_strided_slice %81 {offsets = [0, 3], sizes = [64, 32], strides = [1, 1]} : vector<64x40xbf16> to vector<64x32xbf16>
    %86 = tpu.concatenate %82, %83, %84, %85 in 0 : vector<64x32xbf16>, vector<64x32xbf16>, vector<64x32xbf16>, vector<64x32xbf16> -> vector<256x32xbf16>
    %c0_27 = arith.constant 0 : index
    %c0_28 = arith.constant 0 : index
    %87 = vector.load %arg5[%c0_27, %c0_28] : memref<128x576xbf16, #tpu.memory_space<vmem>>, vector<128x256xbf16>
    %cst_29 = arith.constant dense<0.000000e+00> : vector<128x32xf32>
    %88 = tpu.matmul %87, %86, %cst_29 {dimension_numbers = #tpu.dot_dimension_numbers<[1], [0], [0], [1], [0, 0, 1, 1], [], []>} : vector<128x256xbf16>, vector<256x32xbf16>, vector<128x32xf32> -> vector<128x32xf32>
    %89 = vector.extract_strided_slice %81 {offsets = [0, 4], sizes = [64, 32], strides = [1, 1]} : vector<64x40xbf16> to vector<64x32xbf16>
    %90 = vector.extract_strided_slice %81 {offsets = [0, 5], sizes = [64, 32], strides = [1, 1]} : vector<64x40xbf16> to vector<64x32xbf16>
    %91 = vector.extract_strided_slice %81 {offsets = [0, 6], sizes = [64, 32], strides = [1, 1]} : vector<64x40xbf16> to vector<64x32xbf16>
    %92 = vector.extract_strided_slice %81 {offsets = [0, 7], sizes = [64, 32], strides = [1, 1]} : vector<64x40xbf16> to vector<64x32xbf16>
    %93 = tpu.concatenate %89, %90, %91, %92 in 0 : vector<64x32xbf16>, vector<64x32xbf16>, vector<64x32xbf16>, vector<64x32xbf16> -> vector<256x32xbf16>
    %c0_30 = arith.constant 0 : index
    %c256_31 = arith.constant 256 : index
    %94 = vector.load %arg5[%c0_30, %c256_31] : memref<128x576xbf16, #tpu.memory_space<vmem>>, vector<128x256xbf16>
    %cst_32 = arith.constant dense<0.000000e+00> : vector<128x32xf32>
    %95 = tpu.matmul %94, %93, %cst_32 {dimension_numbers = #tpu.dot_dimension_numbers<[1], [0], [0], [1], [0, 0, 1, 1], [], []>} : vector<128x256xbf16>, vector<256x32xbf16>, vector<128x32xf32> -> vector<128x32xf32>
    %96 = arith.addf %88, %95 : vector<128x32xf32>
    %97 = vector.extract_strided_slice %81 {offsets = [0, 8], sizes = [64, 32], strides = [1, 1]} : vector<64x40xbf16> to vector<64x32xbf16>
    %c0_33 = arith.constant 0 : index
    %c512_34 = arith.constant 512 : index
    %98 = vector.load %arg5[%c0_33, %c512_34] : memref<128x576xbf16, #tpu.memory_space<vmem>>, vector<128x64xbf16>
    %cst_35 = arith.constant dense<0.000000e+00> : vector<128x32xf32>
    %99 = tpu.matmul %98, %97, %cst_35 {dimension_numbers = #tpu.dot_dimension_numbers<[1], [0], [0], [1], [0, 0, 1, 1], [], []>} : vector<128x64xbf16>, vector<64x32xbf16>, vector<128x32xf32> -> vector<128x32xf32>
    %100 = arith.addf %96, %99 : vector<128x32xf32>
    %c0_36 = arith.constant 0 : index
    %c0_37 = arith.constant 0 : index
    %101 = vector.load %arg10[%c0_36, %c0_37] : memref<128x1xf32, #tpu.memory_space<vmem>>, vector<128x1xf32>
    %102 = vector.broadcast %101 : vector<128x1xf32> to vector<128x32xf32>
    %103 = arith.addf %100, %102 : vector<128x32xf32>
    %cst_38 = arith.constant 0.000000e+00 : f32
    %104 = vector.broadcast %cst_38 : f32 to vector<128x32xf32>
    %105 = arith.maximumf %103, %104 : vector<128x32xf32>
    %106 = vector.extract_strided_slice %7 {offsets = [0, 12], sizes = [1, 32], strides = [1, 1]} : vector<1x56xi32> to vector<1x32xi32>
    %c0_i32_39 = arith.constant 0 : i32
    %107 = vector.broadcast %c0_i32_39 : i32 to vector<1x32xi32>
    %108 = arith.cmpi sge, %106, %107 : vector<1x32xi32>
    %c16_i32_40 = arith.constant 16 : i32
    %109 = vector.broadcast %c16_i32_40 : i32 to vector<1x32xi32>
    %110 = arith.cmpi slt, %106, %109 : vector<1x32xi32>
    %111 = arith.andi %108, %110 : vector<1x32xi1>
    %cst_41 = arith.constant 0.000000e+00 : f32
    %112 = vector.shape_cast %111 : vector<1x32xi1> to vector<1x32xi1>
    %113 = vector.broadcast %112 : vector<1x32xi1> to vector<128x32xi1>
    %114 = vector.broadcast %cst_41 : f32 to vector<128x32xf32>
    %115 = arith.select %113, %105, %114 : vector<128x32xi1>, vector<128x32xf32>
    %116 = arith.truncf %115 : vector<128x32xf32> to vector<128x32xbf16>
    %117 = vector.extract_strided_slice %116 {offsets = [0, 0], sizes = [128, 24], strides = [1, 1]} : vector<128x32xbf16> to vector<128x24xbf16>
    %118 = vector.extract_strided_slice %116 {offsets = [0, 1], sizes = [128, 24], strides = [1, 1]} : vector<128x32xbf16> to vector<128x24xbf16>
    %119 = tpu.concatenate %117, %118 in 0 : vector<128x24xbf16>, vector<128x24xbf16> -> vector<256x24xbf16>
    %c0_42 = arith.constant 0 : index
    %c0_43 = arith.constant 0 : index
    %120 = vector.load %arg6[%c0_42, %c0_43] : memref<64x1152xbf16, #tpu.memory_space<vmem>>, vector<64x256xbf16>
    %cst_44 = arith.constant dense<0.000000e+00> : vector<64x24xf32>
    %121 = tpu.matmul %120, %119, %cst_44 {dimension_numbers = #tpu.dot_dimension_numbers<[1], [0], [0], [1], [0, 0, 1, 1], [], []>} : vector<64x256xbf16>, vector<256x24xbf16>, vector<64x24xf32> -> vector<64x24xf32>
    %122 = vector.extract_strided_slice %116 {offsets = [0, 2], sizes = [128, 24], strides = [1, 1]} : vector<128x32xbf16> to vector<128x24xbf16>
    %123 = vector.extract_strided_slice %116 {offsets = [0, 3], sizes = [128, 24], strides = [1, 1]} : vector<128x32xbf16> to vector<128x24xbf16>
    %124 = tpu.concatenate %122, %123 in 0 : vector<128x24xbf16>, vector<128x24xbf16> -> vector<256x24xbf16>
    %c0_45 = arith.constant 0 : index
    %c256_46 = arith.constant 256 : index
    %125 = vector.load %arg6[%c0_45, %c256_46] : memref<64x1152xbf16, #tpu.memory_space<vmem>>, vector<64x256xbf16>
    %cst_47 = arith.constant dense<0.000000e+00> : vector<64x24xf32>
    %126 = tpu.matmul %125, %124, %cst_47 {dimension_numbers = #tpu.dot_dimension_numbers<[1], [0], [0], [1], [0, 0, 1, 1], [], []>} : vector<64x256xbf16>, vector<256x24xbf16>, vector<64x24xf32> -> vector<64x24xf32>
    %127 = arith.addf %121, %126 : vector<64x24xf32>
    %128 = vector.extract_strided_slice %116 {offsets = [0, 4], sizes = [128, 24], strides = [1, 1]} : vector<128x32xbf16> to vector<128x24xbf16>
    %129 = vector.extract_strided_slice %116 {offsets = [0, 5], sizes = [128, 24], strides = [1, 1]} : vector<128x32xbf16> to vector<128x24xbf16>
    %130 = tpu.concatenate %128, %129 in 0 : vector<128x24xbf16>, vector<128x24xbf16> -> vector<256x24xbf16>
    %c0_48 = arith.constant 0 : index
    %c512_49 = arith.constant 512 : index
    %131 = vector.load %arg6[%c0_48, %c512_49] : memref<64x1152xbf16, #tpu.memory_space<vmem>>, vector<64x256xbf16>
    %cst_50 = arith.constant dense<0.000000e+00> : vector<64x24xf32>
    %132 = tpu.matmul %131, %130, %cst_50 {dimension_numbers = #tpu.dot_dimension_numbers<[1], [0], [0], [1], [0, 0, 1, 1], [], []>} : vector<64x256xbf16>, vector<256x24xbf16>, vector<64x24xf32> -> vector<64x24xf32>
    %133 = arith.addf %127, %132 : vector<64x24xf32>
    %134 = vector.extract_strided_slice %116 {offsets = [0, 6], sizes = [128, 24], strides = [1, 1]} : vector<128x32xbf16> to vector<128x24xbf16>
    %135 = vector.extract_strided_slice %116 {offsets = [0, 7], sizes = [128, 24], strides = [1, 1]} : vector<128x32xbf16> to vector<128x24xbf16>
    %136 = tpu.concatenate %134, %135 in 0 : vector<128x24xbf16>, vector<128x24xbf16> -> vector<256x24xbf16>
    %c0_51 = arith.constant 0 : index
    %c768_52 = arith.constant 768 : index
    %137 = vector.load %arg6[%c0_51, %c768_52] : memref<64x1152xbf16, #tpu.memory_space<vmem>>, vector<64x256xbf16>
    %cst_53 = arith.constant dense<0.000000e+00> : vector<64x24xf32>
    %138 = tpu.matmul %137, %136, %cst_53 {dimension_numbers = #tpu.dot_dimension_numbers<[1], [0], [0], [1], [0, 0, 1, 1], [], []>} : vector<64x256xbf16>, vector<256x24xbf16>, vector<64x24xf32> -> vector<64x24xf32>
    %139 = arith.addf %133, %138 : vector<64x24xf32>
    %140 = vector.extract_strided_slice %116 {offsets = [0, 8], sizes = [128, 24], strides = [1, 1]} : vector<128x32xbf16> to vector<128x24xbf16>
    %c0_54 = arith.constant 0 : index
    %c1024_55 = arith.constant 1024 : index
    %141 = vector.load %arg6[%c0_54, %c1024_55] : memref<64x1152xbf16, #tpu.memory_space<vmem>>, vector<64x128xbf16>
    %cst_56 = arith.constant dense<0.000000e+00> : vector<64x24xf32>
    %142 = tpu.matmul %141, %140, %cst_56 {dimension_numbers = #tpu.dot_dimension_numbers<[1], [0], [0], [1], [0, 0, 1, 1], [], []>} : vector<64x128xbf16>, vector<128x24xbf16>, vector<64x24xf32> -> vector<64x24xf32>
    %143 = arith.addf %139, %142 : vector<64x24xf32>
    %c0_57 = arith.constant 0 : index
    %c0_58 = arith.constant 0 : index
    %144 = vector.load %arg11[%c0_57, %c0_58] : memref<64x1xf32, #tpu.memory_space<vmem>>, vector<64x1xf32>
    %145 = vector.broadcast %144 : vector<64x1xf32> to vector<64x24xf32>
    %146 = arith.addf %143, %145 : vector<64x24xf32>
    %cst_59 = arith.constant 0.000000e+00 : f32
    %147 = vector.broadcast %cst_59 : f32 to vector<64x24xf32>
    %148 = arith.maximumf %146, %147 : vector<64x24xf32>
    %149 = vector.extract_strided_slice %7 {offsets = [0, 16], sizes = [1, 24], strides = [1, 1]} : vector<1x56xi32> to vector<1x24xi32>
    %c0_i32_60 = arith.constant 0 : i32
    %150 = vector.broadcast %c0_i32_60 : i32 to vector<1x24xi32>
    %151 = arith.cmpi sge, %149, %150 : vector<1x24xi32>
    %c16_i32_61 = arith.constant 16 : i32
    %152 = vector.broadcast %c16_i32_61 : i32 to vector<1x24xi32>
    %153 = arith.cmpi slt, %149, %152 : vector<1x24xi32>
    %154 = arith.andi %151, %153 : vector<1x24xi1>
    %cst_62 = arith.constant 0.000000e+00 : f32
    %155 = vector.shape_cast %154 : vector<1x24xi1> to vector<1x24xi1>
    %156 = vector.broadcast %155 : vector<1x24xi1> to vector<64x24xi1>
    %157 = vector.broadcast %cst_62 : f32 to vector<64x24xf32>
    %158 = arith.select %156, %148, %157 : vector<64x24xi1>, vector<64x24xf32>
    %159 = arith.truncf %158 : vector<64x24xf32> to vector<64x24xbf16>
    %160 = vector.extract_strided_slice %159 {offsets = [0, 0], sizes = [64, 16], strides = [1, 1]} : vector<64x24xbf16> to vector<64x16xbf16>
    %161 = vector.extract_strided_slice %159 {offsets = [0, 1], sizes = [64, 16], strides = [1, 1]} : vector<64x24xbf16> to vector<64x16xbf16>
    %162 = vector.extract_strided_slice %159 {offsets = [0, 2], sizes = [64, 16], strides = [1, 1]} : vector<64x24xbf16> to vector<64x16xbf16>
    %163 = vector.extract_strided_slice %159 {offsets = [0, 3], sizes = [64, 16], strides = [1, 1]} : vector<64x24xbf16> to vector<64x16xbf16>
    %164 = tpu.concatenate %160, %161, %162, %163 in 0 : vector<64x16xbf16>, vector<64x16xbf16>, vector<64x16xbf16>, vector<64x16xbf16> -> vector<256x16xbf16>
    %c0_63 = arith.constant 0 : index
    %c0_64 = arith.constant 0 : index
    %165 = vector.load %arg7[%c0_63, %c0_64] : memref<8x576xbf16, #tpu.memory_space<vmem>>, vector<8x256xbf16>
    %cst_65 = arith.constant dense<0.000000e+00> : vector<8x16xf32>
    %166 = tpu.matmul %165, %164, %cst_65 {dimension_numbers = #tpu.dot_dimension_numbers<[1], [0], [0], [1], [0, 0, 1, 1], [], []>} : vector<8x256xbf16>, vector<256x16xbf16>, vector<8x16xf32> -> vector<8x16xf32>
    %167 = vector.extract_strided_slice %159 {offsets = [0, 4], sizes = [64, 16], strides = [1, 1]} : vector<64x24xbf16> to vector<64x16xbf16>
    %168 = vector.extract_strided_slice %159 {offsets = [0, 5], sizes = [64, 16], strides = [1, 1]} : vector<64x24xbf16> to vector<64x16xbf16>
    %169 = vector.extract_strided_slice %159 {offsets = [0, 6], sizes = [64, 16], strides = [1, 1]} : vector<64x24xbf16> to vector<64x16xbf16>
    %170 = vector.extract_strided_slice %159 {offsets = [0, 7], sizes = [64, 16], strides = [1, 1]} : vector<64x24xbf16> to vector<64x16xbf16>
    %171 = tpu.concatenate %167, %168, %169, %170 in 0 : vector<64x16xbf16>, vector<64x16xbf16>, vector<64x16xbf16>, vector<64x16xbf16> -> vector<256x16xbf16>
    %c0_66 = arith.constant 0 : index
    %c256_67 = arith.constant 256 : index
    %172 = vector.load %arg7[%c0_66, %c256_67] : memref<8x576xbf16, #tpu.memory_space<vmem>>, vector<8x256xbf16>
    %cst_68 = arith.constant dense<0.000000e+00> : vector<8x16xf32>
    %173 = tpu.matmul %172, %171, %cst_68 {dimension_numbers = #tpu.dot_dimension_numbers<[1], [0], [0], [1], [0, 0, 1, 1], [], []>} : vector<8x256xbf16>, vector<256x16xbf16>, vector<8x16xf32> -> vector<8x16xf32>
    %174 = arith.addf %166, %173 : vector<8x16xf32>
    %175 = vector.extract_strided_slice %159 {offsets = [0, 8], sizes = [64, 16], strides = [1, 1]} : vector<64x24xbf16> to vector<64x16xbf16>
    %c0_69 = arith.constant 0 : index
    %c512_70 = arith.constant 512 : index
    %176 = vector.load %arg7[%c0_69, %c512_70] : memref<8x576xbf16, #tpu.memory_space<vmem>>, vector<8x64xbf16>
    %cst_71 = arith.constant dense<0.000000e+00> : vector<8x16xf32>
    %177 = tpu.matmul %176, %175, %cst_71 {dimension_numbers = #tpu.dot_dimension_numbers<[1], [0], [0], [1], [0, 0, 1, 1], [], []>} : vector<8x64xbf16>, vector<64x16xbf16>, vector<8x16xf32> -> vector<8x16xf32>
    %178 = arith.addf %174, %177 : vector<8x16xf32>
    %c0_72 = arith.constant 0 : index
    %c0_73 = arith.constant 0 : index
    %179 = vector.load %arg12[%c0_72, %c0_73] : memref<8x1xf32, #tpu.memory_space<vmem>>, vector<8x1xf32>
    %180 = vector.broadcast %179 : vector<8x1xf32> to vector<8x16xf32>
    %181 = arith.addf %178, %180 : vector<8x16xf32>
    %cst_74 = arith.constant 0.000000e+00 : f32
    %182 = vector.broadcast %cst_74 : f32 to vector<8x16xf32>
    %183 = arith.maximumf %181, %182 : vector<8x16xf32>
    %c0_75 = arith.constant 0 : index
    %c0_76 = arith.constant 0 : index
    %c0_77 = arith.constant 0 : index
    %184 = vector.load %arg13[%c0_75, %c0_76, %c0_77] : memref<1x8x16xf32, #tpu.memory_space<vmem>>, vector<1x8x16xf32>
    %185 = vector.shape_cast %184 : vector<1x8x16xf32> to vector<8x16xf32>
    %186 = vector.shape_cast %183 : vector<8x16xf32> to vector<1x8x16xf32>
    tpu.vector_store %arg13[%c0_75, %c0_76, %c0_77], %186 {strides = array<i32>} : memref<1x8x16xf32, #tpu.memory_space<vmem>>, vector<1x8x16xf32>,
    return
  }
  func.func @transform_1(%arg0: i32, %arg1: i32) -> (i32, i32) {
    %c0_i32 = arith.constant 0 : i32
    %c0_i32_0 = arith.constant 0 : i32
    %c0_i32_1 = arith.constant 0 : i32
    return %c0_i32, %c0_i32_0 : i32, i32
  }
  func.func @transform_2(%arg0: i32, %arg1: i32) -> (i32, i32) {
    %c0_i32 = arith.constant 0 : i32
    %c0_i32_0 = arith.constant 0 : i32
    %c0_i32_1 = arith.constant 0 : i32
    return %c0_i32, %c0_i32_0 : i32, i32
  }
  func.func @transform_3(%arg0: i32, %arg1: i32) -> (i32, i32) {
    %c0_i32 = arith.constant 0 : i32
    %c0_i32_0 = arith.constant 0 : i32
    %c0_i32_1 = arith.constant 0 : i32
    return %c0_i32, %c0_i32_0 : i32, i32
  }
  func.func @transform_4(%arg0: i32, %arg1: i32) -> (i32, i32) {
    %c0_i32 = arith.constant 0 : i32
    %c0_i32_0 = arith.constant 0 : i32
    %c0_i32_1 = arith.constant 0 : i32
    return %c0_i32, %c0_i32_0 : i32, i32
  }
  func.func @transform_5(%arg0: i32, %arg1: i32) -> (i32, i32) {
    %c0_i32 = arith.constant 0 : i32
    %c0_i32_0 = arith.constant 0 : i32
    %c0_i32_1 = arith.constant 0 : i32
    return %c0_i32, %c0_i32_0 : i32, i32
  }
  func.func @transform_6(%arg0: i32, %arg1: i32) -> (i32, i32) {
    %c0_i32 = arith.constant 0 : i32
    %c0_i32_0 = arith.constant 0 : i32
    %c0_i32_1 = arith.constant 0 : i32
    return %c0_i32, %c0_i32_0 : i32, i32
  }
  func.func @transform_7(%arg0: i32, %arg1: i32) -> (i32, i32) {
    %c0_i32 = arith.constant 0 : i32
    %c0_i32_0 = arith.constant 0 : i32
    %c0_i32_1 = arith.constant 0 : i32
    return %c0_i32, %c0_i32_0 : i32, i32
  }
  func.func @transform_8(%arg0: i32, %arg1: i32) -> (i32, i32) {
    %c0_i32 = arith.constant 0 : i32
    %c0_i32_0 = arith.constant 0 : i32
    %c0_i32_1 = arith.constant 0 : i32
    return %c0_i32, %c0_i32_0 : i32, i32
  }
  func.func @transform_9(%arg0: i32, %arg1: i32) -> (i32, i32) {
    %c0_i32 = arith.constant 0 : i32
    %c0_i32_0 = arith.constant 0 : i32
    %c0_i32_1 = arith.constant 0 : i32
    return %c0_i32, %c0_i32_0 : i32, i32
  }
  func.func @transform_10(%arg0: i32, %arg1: i32) -> (i32, i32) {
    %c0_i32 = arith.constant 0 : i32
    %c0_i32_0 = arith.constant 0 : i32
    %c0_i32_1 = arith.constant 0 : i32
    return %c0_i32, %c0_i32_0 : i32, i32
  }
  func.func @transform_11(%arg0: i32, %arg1: i32) -> (i32, i32, i32) {
    %c0_i32 = arith.constant 0 : i32
    %c0_i32_0 = arith.constant 0 : i32
    return %arg0, %c0_i32, %arg1 : i32, i32, i32
  }
}

</mosaic_0001>

<llo_original>
// kernel: basic_conv_forward.1
$region0: #{basic_conv_forward.1}
  #allocation0 [shape = 'u32[]', space=smem, size = 0x4, offset = 0x4, fixed_abs, tag = 'smem constant byte address 0x4 - core index']
  #allocation1 [shape = 'u32[144,128]{1,0:T(1,128)}', space=vmem, size = 0x12000, scoped, tag = 'internal scratch']
  #allocation2 [shape = 'bf16[56,56]{1,0:T(8,128)(2,1)}', space=vmem, size = 0x3800, scoped, tag = 'scratch operand']
  #allocation3 [shape = 's32[1]{0}', space=sflag, size = 0x4, scoped, tag = 'scratch operand']
  #allocation6 [shape = 's32[]', space=sflag, size = 0x4, offset = 0, fixed_abs, tag = 'sflag constant byte address 0x0 - dummy sync flag']
  %s0 = inlined_call_operand.vmem [shape: bf16[2,56,56], index: 0, kind: input, shape index: {}]
  %s1 = inlined_call_operand.vmem [shape: bf16[128,504], index: 1, kind: input, shape index: {}]
  %s2 = inlined_call_operand.vmem [shape: bf16[64,1152], index: 2, kind: input, shape index: {}]
  %s3 = inlined_call_operand.vmem [shape: bf16[128,576], index: 3, kind: input, shape index: {}]
  %s4 = inlined_call_operand.vmem [shape: bf16[64,1152], index: 4, kind: input, shape index: {}]
  %s5 = inlined_call_operand.vmem [shape: bf16[8,576], index: 5, kind: input, shape index: {}]
  %s6 = inlined_call_operand.vmem [shape: f32[128,1], index: 6, kind: input, shape index: {}]
  %s7 = inlined_call_operand.vmem [shape: f32[64,1], index: 7, kind: input, shape index: {}]
  %s8 = inlined_call_operand.vmem [shape: f32[128,1], index: 8, kind: input, shape index: {}]
  %s9 = inlined_call_operand.vmem [shape: f32[64,1], index: 9, kind: input, shape index: {}]
  %s10 = inlined_call_operand.vmem [shape: f32[8,1], index: 10, kind: input, shape index: {}]
  %s11 = inlined_call_operand.hbm [shape: f32[2,8,16], index: 11, kind: output, shape index: {}]
  %s12 = sld [smem:[#allocation0]]
  $region110: #{basic_conv_forward.1} parent=0
    _
  %s14 = ssub.s32 1, %s12
  %s15 = scalar_select 0, %s14, %s12
  $region1: #{basic_conv_forward.1} parent=0
    #allocation4 [shape = 'u8[8192]{0}', space=vmem, size = 0x2000, scoped, tag = 'output window, operand 0']
    #allocation5 [shape = 's32[2]{0}', space=sflag, size = 0x8, scoped, tag = 'scoped memory for basic_conv_forward.1']
    %16 = vsyncpa [#allocation5], 0
    %s17 = scalar_lea.sflag [#allocation5], 1
    %18 = vsyncpa %s17, 0
    loop: start=0, step=1, limit=4
    $region2: #{basic_conv_forward.1} parent=1 // loop_pre_header
      _
    $region3: #{basic_conv_forward.1} parent=1 // loop_header
      %s20 = sphi 0, %s24
      %p21 = scmp.ge.s32.totalorder %s20, 4
      %s27 = sphi 0, %s39
      %s28 = sphi 0, %s35
      %s29 = sphi 0, %s27
      %s30 = sphi 0, %s28
      %s31 = sphi 0, %s29
      %s32 = sphi 0, %s30
      %s40 = sphi 0, %s40
      %s42 = sphi 0, %s40
      %s43 = sphi 0, %s42
      %s57 = sphi 0, %s43
      %s61 = sphi 0, %s61
      %s63 = sphi 0, %s61
      %s64 = sphi 0, %s63
      %s78 = sphi 0, %s64
      %s82 = sphi 0, %s82
      %s84 = sphi 0, %s82
      %s85 = sphi 0, %s84
      %s99 = sphi 0, %s85
      %s103 = sphi 0, %s103
      %s105 = sphi 0, %s103
      %s106 = sphi 0, %s105
      %s120 = sphi 0, %s106
      %s124 = sphi 0, %s124
      %s126 = sphi 0, %s124
      %s127 = sphi 0, %s126
      %s141 = sphi 0, %s127
      %s145 = sphi 0, %s145
      %s147 = sphi 0, %s145
      %s148 = sphi 0, %s147
      %s162 = sphi 0, %s148
      %s166 = sphi 0, %s166
      %s168 = sphi 0, %s166
      %s169 = sphi 0, %s168
      %s183 = sphi 0, %s169
      %s187 = sphi 0, %s187
      %s189 = sphi 0, %s187
      %s190 = sphi 0, %s189
      %s204 = sphi 0, %s190
      %s208 = sphi 0, %s208
      %s210 = sphi 0, %s208
      %s211 = sphi 0, %s210
      %s225 = sphi 0, %s211
      %s229 = sphi 0, %s229
      %s231 = sphi 0, %s229
      %s232 = sphi 0, %s231
      %s246 = sphi 0, %s232
      %s254 = sphi 0, %s256
      %s257 = sphi 0, %s254
      %s258 = sphi 0, %s257
      %s274 = sphi 0, %s258
    $region4: #{basic_conv_forward.1} parent=1 // loop_header_branch
      %23 = sbr.rel (%p21) target = $region8
    $region5: #{basic_conv_forward.1} parent=1 // loop_body
      %s25 = ssub.s32 %s20, 1
      %s26 = ssub.s32 %s20, 2
      %s33 = sadd.s32 1, %s28
      %p34 = scmp.ge.s32.totalorder %s33, 1
      %s35 = scalar_select %p34, 0, %s33
      %s36 = sadd.s32 1, %s27
      %s37 = scalar_select %p34, %s36, %s27
      %p38 = scmp.ge.s32.totalorder %s37, 2
      %s39 = scalar_select %p38, 0, %s37
      %s41 = sadd.s32 %s40, 1
      %p44 = scmp.eq.s32.totalorder %s20, 1
      %p45 = scmp.ne.s32.totalorder %s40, %s42
      %p46 = scmp.eq.s32.totalorder %s20, 0
      %p47 = por %p45, %p46
      %p48 = scmp.ne.s32.totalorder %s40, %s42
      %p49 = scmp.eq.s32.totalorder %s25, 1
      %p50 = por %p48, %p49
      %p51 = scmp.ne.s32.totalorder %s42, %s43
      %p52 = scmp.eq.s32.totalorder %s25, 0
      %p53 = por %p51, %p52
      %p54 = scmp.ne.s32.totalorder %s42, %s43
      %p55 = scmp.eq.s32.totalorder %s26, 1
      %p56 = por %p54, %p55
      %p58 = scmp.ne.s32.totalorder %s43, %s57
      %p59 = scmp.eq.s32.totalorder %s26, 0
      %p60 = por %p58, %p59
      %s62 = sadd.s32 %s61, 1
      %p65 = scmp.eq.s32.totalorder %s20, 1
      %p66 = scmp.ne.s32.totalorder %s61, %s63
      %p67 = scmp.eq.s32.totalorder %s20, 0
      %p68 = por %p66, %p67
      %p69 = scmp.ne.s32.totalorder %s61, %s63
      %p70 = scmp.eq.s32.totalorder %s25, 1
      %p71 = por %p69, %p70
      %p72 = scmp.ne.s32.totalorder %s63, %s64
      %p73 = scmp.eq.s32.totalorder %s25, 0
      %p74 = por %p72, %p73
      %p75 = scmp.ne.s32.totalorder %s63, %s64
      %p76 = scmp.eq.s32.totalorder %s26, 1
      %p77 = por %p75, %p76
      %p79 = scmp.ne.s32.totalorder %s64, %s78
      %p80 = scmp.eq.s32.totalorder %s26, 0
      %p81 = por %p79, %p80
      %s83 = sadd.s32 %s82, 1
      %p86 = scmp.eq.s32.totalorder %s20, 1
      %p87 = scmp.ne.s32.totalorder %s82, %s84
      %p88 = scmp.eq.s32.totalorder %s20, 0
      %p89 = por %p87, %p88
      %p90 = scmp.ne.s32.totalorder %s82, %s84
      %p91 = scmp.eq.s32.totalorder %s25, 1
      %p92 = por %p90, %p91
      %p93 = scmp.ne.s32.totalorder %s84, %s85
      %p94 = scmp.eq.s32.totalorder %s25, 0
      %p95 = por %p93, %p94
      %p96 = scmp.ne.s32.totalorder %s84, %s85
      %p97 = scmp.eq.s32.totalorder %s26, 1
      %p98 = por %p96, %p97
      %p100 = scmp.ne.s32.totalorder %s85, %s99
      %p101 = scmp.eq.s32.totalorder %s26, 0
      %p102 = por %p100, %p101
      %s104 = sadd.s32 %s103, 1
      %p107 = scmp.eq.s32.totalorder %s20, 1
      %p108 = scmp.ne.s32.totalorder %s103, %s105
      %p109 = scmp.eq.s32.totalorder %s20, 0
      %p110 = por %p108, %p109
      %p111 = scmp.ne.s32.totalorder %s103, %s105
      %p112 = scmp.eq.s32.totalorder %s25, 1
      %p113 = por %p111, %p112
      %p114 = scmp.ne.s32.totalorder %s105, %s106
      %p115 = scmp.eq.s32.totalorder %s25, 0
      %p116 = por %p114, %p115
      %p117 = scmp.ne.s32.totalorder %s105, %s106
      %p118 = scmp.eq.s32.totalorder %s26, 1
      %p119 = por %p117, %p118
      %p121 = scmp.ne.s32.totalorder %s106, %s120
      %p122 = scmp.eq.s32.totalorder %s26, 0
      %p123 = por %p121, %p122
      %s125 = sadd.s32 %s124, 1
      %p128 = scmp.eq.s32.totalorder %s20, 1
      %p129 = scmp.ne.s32.totalorder %s124, %s126
      %p130 = scmp.eq.s32.totalorder %s20, 0
      %p131 = por %p129, %p130
      %p132 = scmp.ne.s32.totalorder %s124, %s126
      %p133 = scmp.eq.s32.totalorder %s25, 1
      %p134 = por %p132, %p133
      %p135 = scmp.ne.s32.totalorder %s126, %s127
      %p136 = scmp.eq.s32.totalorder %s25, 0
      %p137 = por %p135, %p136
      %p138 = scmp.ne.s32.totalorder %s126, %s127
      %p139 = scmp.eq.s32.totalorder %s26, 1
      %p140 = por %p138, %p139
      %p142 = scmp.ne.s32.totalorder %s127, %s141
      %p143 = scmp.eq.s32.totalorder %s26, 0
      %p144 = por %p142, %p143
      %s146 = sadd.s32 %s145, 1
      %p149 = scmp.eq.s32.totalorder %s20, 1
      %p150 = scmp.ne.s32.totalorder %s145, %s147
      %p151 = scmp.eq.s32.totalorder %s20, 0
      %p152 = por %p150, %p151
      %p153 = scmp.ne.s32.totalorder %s145, %s147
      %p154 = scmp.eq.s32.totalorder %s25, 1
      %p155 = por %p153, %p154
      %p156 = scmp.ne.s32.totalorder %s147, %s148
      %p157 = scmp.eq.s32.totalorder %s25, 0
      %p158 = por %p156, %p157
      %p159 = scmp.ne.s32.totalorder %s147, %s148
      %p160 = scmp.eq.s32.totalorder %s26, 1
      %p161 = por %p159, %p160
      %p163 = scmp.ne.s32.totalorder %s148, %s162
      %p164 = scmp.eq.s32.totalorder %s26, 0
      %p165 = por %p163, %p164
      %s167 = sadd.s32 %s166, 1
      %p170 = scmp.eq.s32.totalorder %s20, 1
      %p171 = scmp.ne.s32.totalorder %s166, %s168
      %p172 = scmp.eq.s32.totalorder %s20, 0
      %p173 = por %p171, %p172
      %p174 = scmp.ne.s32.totalorder %s166, %s168
      %p175 = scmp.eq.s32.totalorder %s25, 1
      %p176 = por %p174, %p175
      %p177 = scmp.ne.s32.totalorder %s168, %s169
      %p178 = scmp.eq.s32.totalorder %s25, 0
      %p179 = por %p177, %p178
      %p180 = scmp.ne.s32.totalorder %s168, %s169
      %p181 = scmp.eq.s32.totalorder %s26, 1
      %p182 = por %p180, %p181
      %p184 = scmp.ne.s32.totalorder %s169, %s183
      %p185 = scmp.eq.s32.totalorder %s26, 0
      %p186 = por %p184, %p185
      %s188 = sadd.s32 %s187, 1
      %p191 = scmp.eq.s32.totalorder %s20, 1
      %p192 = scmp.ne.s32.totalorder %s187, %s189
      %p193 = scmp.eq.s32.totalorder %s20, 0
      %p194 = por %p192, %p193
      %p195 = scmp.ne.s32.totalorder %s187, %s189
      %p196 = scmp.eq.s32.totalorder %s25, 1
      %p197 = por %p195, %p196
      %p198 = scmp.ne.s32.totalorder %s189, %s190
      %p199 = scmp.eq.s32.totalorder %s25, 0
      %p200 = por %p198, %p199
      %p201 = scmp.ne.s32.totalorder %s189, %s190
      %p202 = scmp.eq.s32.totalorder %s26, 1
      %p203 = por %p201, %p202
      %p205 = scmp.ne.s32.totalorder %s190, %s204
      %p206 = scmp.eq.s32.totalorder %s26, 0
      %p207 = por %p205, %p206
      %s209 = sadd.s32 %s208, 1
      %p212 = scmp.eq.s32.totalorder %s20, 1
      %p213 = scmp.ne.s32.totalorder %s208, %s210
      %p214 = scmp.eq.s32.totalorder %s20, 0
      %p215 = por %p213, %p214
      %p216 = scmp.ne.s32.totalorder %s208, %s210
      %p217 = scmp.eq.s32.totalorder %s25, 1
      %p218 = por %p216, %p217
      %p219 = scmp.ne.s32.totalorder %s210, %s211
      %p220 = scmp.eq.s32.totalorder %s25, 0
      %p221 = por %p219, %p220
      %p222 = scmp.ne.s32.totalorder %s210, %s211
      %p223 = scmp.eq.s32.totalorder %s26, 1
      %p224 = por %p222, %p223
      %p226 = scmp.ne.s32.totalorder %s211, %s225
      %p227 = scmp.eq.s32.totalorder %s26, 0
      %p228 = por %p226, %p227
      %s230 = sadd.s32 %s229, 1
      %p233 = scmp.eq.s32.totalorder %s20, 1
      %p234 = scmp.ne.s32.totalorder %s229, %s231
      %p235 = scmp.eq.s32.totalorder %s20, 0
      %p236 = por %p234, %p235
      %p237 = scmp.ne.s32.totalorder %s229, %s231
      %p238 = scmp.eq.s32.totalorder %s25, 1
      %p239 = por %p237, %p238
      %p240 = scmp.ne.s32.totalorder %s231, %s232
      %p241 = scmp.eq.s32.totalorder %s25, 0
      %p242 = por %p240, %p241
      %p243 = scmp.ne.s32.totalorder %s231, %s232
      %p244 = scmp.eq.s32.totalorder %s26, 1
      %p245 = por %p243, %p244
      %p247 = scmp.ne.s32.totalorder %s232, %s246
      %p248 = scmp.eq.s32.totalorder %s26, 0
      %p249 = por %p247, %p248
      %s250 = ssub.s32 %s27, %s39
      %s251 = ssub.s32 %s28, %s35
      %s252 = sor.u32 %s250, %s251
      %p253 = scmp.eq.s32.totalorder %s252, 0
      %s255 = sadd.s32 %s254, 1
      %s256 = scalar_select %p253, %s254, %s255
      %p259 = pneg %p253
      %p260 = scmp.eq.s32.totalorder %s20, 1
      %p261 = por %p259, %p260
      %p262 = scmp.ne.s32.totalorder %s254, %s257
      %p263 = scmp.eq.s32.totalorder %s20, 0
      %p264 = por %p262, %p263
      %p265 = scmp.ne.s32.totalorder %s254, %s257
      %p266 = scmp.eq.s32.totalorder %s25, 1
      %p267 = por %p265, %p266
      %p268 = scmp.ne.s32.totalorder %s257, %s258
      %p269 = scmp.eq.s32.totalorder %s25, 0
      %p270 = por %p268, %p269
      %p271 = scmp.ne.s32.totalorder %s257, %s258
      %p272 = scmp.eq.s32.totalorder %s26, 1
      %p273 = por %p271, %p272
      %p275 = scmp.ne.s32.totalorder %s258, %s274
      %p276 = scmp.eq.s32.totalorder %s26, 0
      %p277 = por %p275, %p276
      %p278 = scmp.le.s32.totalorder 1, %s20
      %p279 = scmp.lt.s32.totalorder %s20, 3
      %p280 = pnand %p278, %p279
      %p281 = pneg %p280
      // Predicated region
      $region9: #{basic_conv_forward.1} parent=5 // pred_check
        _
      $region10: #{basic_conv_forward.1} parent=5 // pred_check_branch
        %283 = sbr.rel (%p280) target = $region12
      $region11: #{basic_conv_forward.1} parent=5 // pred_region
        %s284 = ssub.s32 %s20, 1
        // Predicated region
        $region13: #{basic_conv_forward.1} parent=11 // pred_check
          %p285 = pneg %p53
        $region14: #{basic_conv_forward.1} parent=11 // pred_check_branch
          %287 = sbr.rel (%p285) target = $region16
        $region15: #{basic_conv_forward.1} parent=11 // pred_region
          _
        $region16: #{basic_conv_forward.1} parent=11 // pred_fallthru
          _
        // Predicated region
        $region17: #{basic_conv_forward.1} parent=11 // pred_check
          %p288 = pneg %p74
        $region18: #{basic_conv_forward.1} parent=11 // pred_check_branch
          %290 = sbr.rel (%p288) target = $region20
        $region19: #{basic_conv_forward.1} parent=11 // pred_region
          _
        $region20: #{basic_conv_forward.1} parent=11 // pred_fallthru
          _
        // Predicated region
        $region21: #{basic_conv_forward.1} parent=11 // pred_check
          %p291 = pneg %p95
        $region22: #{basic_conv_forward.1} parent=11 // pred_check_branch
          %293 = sbr.rel (%p291) target = $region24
        $region23: #{basic_conv_forward.1} parent=11 // pred_region
          _
        $region24: #{basic_conv_forward.1} parent=11 // pred_fallthru
          _
        // Predicated region
        $region25: #{basic_conv_forward.1} parent=11 // pred_check
          %p294 = pneg %p116
        $region26: #{basic_conv_forward.1} parent=11 // pred_check_branch
          %296 = sbr.rel (%p294) target = $region28
        $region27: #{basic_conv_forward.1} parent=11 // pred_region
          _
        $region28: #{basic_conv_forward.1} parent=11 // pred_fallthru
          _
        // Predicated region
        $region29: #{basic_conv_forward.1} parent=11 // pred_check
          %p297 = pneg %p137
        $region30: #{basic_conv_forward.1} parent=11 // pred_check_branch
          %299 = sbr.rel (%p297) target = $region32
        $region31: #{basic_conv_forward.1} parent=11 // pred_region
          _
        $region32: #{basic_conv_forward.1} parent=11 // pred_fallthru
          _
        // Predicated region
        $region33: #{basic_conv_forward.1} parent=11 // pred_check
          %p300 = pneg %p158
        $region34: #{basic_conv_forward.1} parent=11 // pred_check_branch
          %302 = sbr.rel (%p300) target = $region36
        $region35: #{basic_conv_forward.1} parent=11 // pred_region
          _
        $region36: #{basic_conv_forward.1} parent=11 // pred_fallthru
          _
        // Predicated region
        $region37: #{basic_conv_forward.1} parent=11 // pred_check
          %p303 = pneg %p179
        $region38: #{basic_conv_forward.1} parent=11 // pred_check_branch
          %305 = sbr.rel (%p303) target = $region40
        $region39: #{basic_conv_forward.1} parent=11 // pred_region
          _
        $region40: #{basic_conv_forward.1} parent=11 // pred_fallthru
          _
        // Predicated region
        $region41: #{basic_conv_forward.1} parent=11 // pred_check
          %p306 = pneg %p200
        $region42: #{basic_conv_forward.1} parent=11 // pred_check_branch
          %308 = sbr.rel (%p306) target = $region44
        $region43: #{basic_conv_forward.1} parent=11 // pred_region
          _
        $region44: #{basic_conv_forward.1} parent=11 // pred_fallthru
          _
        // Predicated region
        $region45: #{basic_conv_forward.1} parent=11 // pred_check
          %p309 = pneg %p221
        $region46: #{basic_conv_forward.1} parent=11 // pred_check_branch
          %311 = sbr.rel (%p309) target = $region48
        $region47: #{basic_conv_forward.1} parent=11 // pred_region
          _
        $region48: #{basic_conv_forward.1} parent=11 // pred_fallthru
          _
        // Predicated region
        $region49: #{basic_conv_forward.1} parent=11 // pred_check
          %p312 = pneg %p242
        $region50: #{basic_conv_forward.1} parent=11 // pred_check_branch
          %314 = sbr.rel (%p312) target = $region52
        $region51: #{basic_conv_forward.1} parent=11 // pred_region
          _
        $region52: #{basic_conv_forward.1} parent=11 // pred_fallthru
          _
      $region12: #{basic_conv_forward.1} parent=5 // pred_fallthru
        _
      %p315 = scmp.lt.s32.totalorder %s20, 2
      // Predicated region
      $region53: #{basic_conv_forward.1} parent=5 // pred_check
        %p316 = pneg %p315
      $region54: #{basic_conv_forward.1} parent=5 // pred_check_branch
        %318 = sbr.rel (%p316) target = $region56
      $region55: #{basic_conv_forward.1} parent=5 // pred_region
        _
      $region56: #{basic_conv_forward.1} parent=5 // pred_fallthru
        _
      %p319 = scmp.le.s32.totalorder 1, %s20
      %p320 = scmp.lt.s32.totalorder %s20, 3
      %p321 = pnand %p319, %p320
      %p322 = pneg %p321
      // Predicated region
      $region57: #{basic_conv_forward.1} parent=5 // pred_check
        _
      $region58: #{basic_conv_forward.1} parent=5 // pred_check_branch
        %324 = sbr.rel (%p321) target = $region60
      $region59: #{basic_conv_forward.1} parent=5 // pred_region
        %s325 = ssub.s32 %s20, 1
        %p326 = pneg %p53
        %p327 = pneg %p50
        %p328 = pneg %p74
        %p329 = pneg %p71
        %p330 = pneg %p95
        %p331 = pneg %p92
        %p332 = pneg %p116
        %p333 = pneg %p113
        %p334 = pneg %p137
        %p335 = pneg %p134
        %p336 = pneg %p158
        %p337 = pneg %p155
        %p338 = pneg %p179
        %p339 = pneg %p176
        %p340 = pneg %p200
        %p341 = pneg %p197
        %p342 = pneg %p221
        %p343 = pneg %p218
        %p344 = pneg %p242
        %p345 = pneg %p239
        %p346 = pneg %p270
        %p347 = pneg %p267
        %s348 = sand.u32 %s257, 1
        %s349 = scalar_lea.sflag [#allocation5], %s348
        %s350 = sand.u32 %s257, 1
        %s351 = smul.addr %s350, 8
        %s352 = scalar_lea.vmem [#allocation4], %s351
        %s354 = smul.u32 %s30, 16
        %s355 = sshra.s32 %s354, 7
        %s356 = sand.u32 %s354, 127
        %s357 = smul.u32 %s29, 7
        %s358 = sadd.s32 %s355, %s357
        %s359 = smul.addr %s358, 4
        %s360 = scalar_lea.vmem %s0, %s359
        %p362 = scmp.lt.u32.totalorder 28, 8
        %p363 = pneg %p362
        // Predicated region
        $region61: #{basic_conv_forward.1} parent=59 // pred_check
          _
        $region62: #{basic_conv_forward.1} parent=59 // pred_check_branch
          %365 = sbr.rel (%p362) target = $region64
        $region63: #{basic_conv_forward.1} parent=59 // pred_region
          %s380 = sand.u32 28, 7
          %p381 = scmp.eq.s32.totalorder %s380, 0
          %p382 = pneg %p381
          // Predicated region
          $region76: #{basic_conv_forward.1} parent=63 // pred_check
            _
          $region77: #{basic_conv_forward.1} parent=63 // pred_check_branch
            %384 = sbr.rel (%p381) target = $region79
          $region78: #{basic_conv_forward.1} parent=63 // pred_region
            %s385 = sand.u32 28, 7
            %s386 = ssub.s32 28, %s385
            %s387 = scalar_lea.vmem %s360, %s386
            %s388 = ssub.s32 28, %s385
            %s389 = scalar_lea.vmem [#allocation2], %s388
            loop: start=0, step=1, limit=1
            $region80: #{basic_conv_forward.1} parent=78 // loop_pre_header
              _
            $region81: #{basic_conv_forward.1} parent=78 // loop_header
              %s391 = sphi 0, %s395
              %p392 = scmp.ge.s32.totalorder %s391, 1
              %s396 = sphi %s360, %s360
              %s397 = sphi [#allocation2], [#allocation2]
            $region82: #{basic_conv_forward.1} parent=78 // loop_header_branch
              %394 = sbr.rel (%p392) target = $region86
            $region83: #{basic_conv_forward.1} parent=78 // loop_body
              %v398 = vld [vmem:[%s396] sm:$0xff]
              %399 = vst [vmem:[%s397] sm:$0xff] %v398
              %v400 = vld [vmem:[%s396 + $0x8] sm:$0xff]
              %401 = vst [vmem:[%s397 + $0x8] sm:$0xff] %v400
              %v402 = vld [vmem:[%s396 + $0x10] sm:$0xff]
              %403 = vst [vmem:[%s397 + $0x10] sm:$0xff] %v402
            $region84: #{basic_conv_forward.1} parent=78 // loop_footer
              %s395 = sadd.s32 1, %s391
            $region85: #{basic_conv_forward.1} parent=78 // loop_footer_branch
              %390 = sbr.rel target = $region81
            $region86: #{basic_conv_forward.1} parent=78 // loop_exit
              _
            %s404 = sshllo.u32 0, %s385
            loop: start=0, step=1, limit=1
            $region87: #{basic_conv_forward.1} parent=78 // loop_pre_header
              _
            $region88: #{basic_conv_forward.1} parent=78 // loop_header
              %s406 = sphi 0, %s410
              %p407 = scmp.ge.s32.totalorder %s406, 1
              %s411 = sphi %s387, %s387
              %s412 = sphi %s389, %s389
            $region89: #{basic_conv_forward.1} parent=78 // loop_header_branch
              %409 = sbr.rel (%p407) target = $region93
            $region90: #{basic_conv_forward.1} parent=78 // loop_body
              %v413 = vld [vmem:[%s411] sm:%s404]
              %414 = vst [vmem:[%s412] sm:%s404] %v413
            $region91: #{basic_conv_forward.1} parent=78 // loop_footer
              %s410 = sadd.s32 1, %s406
            $region92: #{basic_conv_forward.1} parent=78 // loop_footer_branch
              %405 = sbr.rel target = $region88
            $region93: #{basic_conv_forward.1} parent=78 // loop_exit
              _
          $region79: #{basic_conv_forward.1} parent=63 // pred_fallthru
            _
        $region64: #{basic_conv_forward.1} parent=59 // pred_fallthru
          _
        // Predicated region
        $region65: #{basic_conv_forward.1} parent=59 // pred_check
          %p366 = pneg %p362
        $region66: #{basic_conv_forward.1} parent=59 // pred_check_branch
          %368 = sbr.rel (%p366) target = $region68
        $region67: #{basic_conv_forward.1} parent=59 // pred_region
          %s369 = sshllo.u32 0, 28
          loop: start=0, step=1, limit=1
          $region69: #{basic_conv_forward.1} parent=67 // loop_pre_header
            _
          $region70: #{basic_conv_forward.1} parent=67 // loop_header
            %s371 = sphi 0, %s375
            %p372 = scmp.ge.s32.totalorder %s371, 1
            %s376 = sphi %s360, %s360
            %s377 = sphi [#allocation2], [#allocation2]
          $region71: #{basic_conv_forward.1} parent=67 // loop_header_branch
            %374 = sbr.rel (%p372) target = $region75
          $region72: #{basic_conv_forward.1} parent=67 // loop_body
            %v378 = vld [vmem:[%s376] sm:%s369]
            %379 = vst [vmem:[%s377] sm:%s369] %v378
          $region73: #{basic_conv_forward.1} parent=67 // loop_footer
            %s375 = sadd.s32 1, %s371
          $region74: #{basic_conv_forward.1} parent=67 // loop_footer_branch
            %370 = sbr.rel target = $region70
          $region75: #{basic_conv_forward.1} parent=67 // loop_exit
            _
        $region68: #{basic_conv_forward.1} parent=59 // pred_fallthru
          _
        // Predicated region
        $region94: #{basic_conv_forward.1} parent=59 // pred_check
          _
        $region95: #{basic_conv_forward.1} parent=59 // pred_check_branch
          %417 = sbr.rel (0) target = $region97
        $region96: #{basic_conv_forward.1} parent=59 // pred_region
          %418 = vsyncadd [#allocation3], 448
        $region97: #{basic_conv_forward.1} parent=59 // pred_fallthru
          _
        %s419 = ssub.s32 %s354, 20
        %v420 = vlaneseq
        %v421 = vand.u32 %v420, 127
        %v422 = vstv %s419
        %v423 = vadd.s32 %v422, %v421
        %s424 = smul.u32 4, 7
        %s425 = smul.u32 %s424, 1
        %s426 = sshll.u32 %s425, 4
        %427 = dma.done [#allocation3], %s426
        %v428 = vld [vmem:[#allocation2] sm:$0xf]
        %v429 = vld [vmem:[#allocation2 + $0x4] sm:$0xf]
        %v430 = vld [vmem:[#allocation2 + $0x8] sm:$0xf]
        %v431 = vld [vmem:[#allocation2 + $0xc] sm:$0xf]
        %v432 = vld [vmem:[#allocation2 + $0x10] sm:$0xf]
        %v433 = vld [vmem:[#allocation2 + $0x14] sm:$0xf]
        %v434 = vld [vmem:[#allocation2 + $0x18] sm:$0xf]
        %v442 = vunpack.c.l.b16 %v428
        %v443 = vunpack.c.l.b16 %v429
        %v444 = vunpack.c.l.b16 %v430
        %v445 = vunpack.c.l.b16 %v431
        %v446 = vunpack.c.l.b16 %v432
        %v447 = vunpack.c.l.b16 %v433
        %v448 = vunpack.c.l.b16 %v434
        %v449 = vpack.c.b16 %v443, %v442
        %v450 = vpack.c.b16 %v445, %v444
        %v451 = vpack.c.b16 %v447, %v446
        %v452 = vpack.c.b16 %v448, %v448
        %v456 = vpack.c.b16 %v442, %v442
        %v457 = vpack.c.b16 %v444, %v443
        %v458 = vpack.c.b16 %v446, %v445
        %v459 = vpack.c.b16 %v448, %v447
        %460 = vrot.lane.b32.xlu0 %v456, 127
        %v461 = vpop.permute.xlu0 %460
        %462 = vrot.lane.b32.xlu0 %v457, 127
        %v463 = vpop.permute.xlu0 %462
        %464 = vrot.lane.b32.xlu0 %v458, 127
        %v465 = vpop.permute.xlu0 %464
        %466 = vrot.lane.b32.xlu0 %v459, 127
        %v467 = vpop.permute.xlu0 %466
        %471 = vrot.lane.b32.xlu0 %v449, 126
        %v472 = vpop.permute.xlu0 %471
        %473 = vrot.lane.b32.xlu0 %v450, 126
        %v474 = vpop.permute.xlu0 %473
        %475 = vrot.lane.b32.xlu0 %v451, 126
        %v476 = vpop.permute.xlu0 %475
        %477 = vrot.lane.b32.xlu0 %v452, 126
        %v478 = vpop.permute.xlu0 %477
        %482 = vrot.lane.b32.xlu0 %v456, 125
        %v483 = vpop.permute.xlu0 %482
        %484 = vrot.lane.b32.xlu0 %v457, 125
        %v485 = vpop.permute.xlu0 %484
        %486 = vrot.lane.b32.xlu0 %v458, 125
        %v487 = vpop.permute.xlu0 %486
        %488 = vrot.lane.b32.xlu0 %v459, 125
        %v489 = vpop.permute.xlu0 %488
        %493 = vrot.lane.b32.xlu0 %v449, 124
        %v494 = vpop.permute.xlu0 %493
        %495 = vrot.lane.b32.xlu0 %v450, 124
        %v496 = vpop.permute.xlu0 %495
        %497 = vrot.lane.b32.xlu0 %v451, 124
        %v498 = vpop.permute.xlu0 %497
        %499 = vrot.lane.b32.xlu0 %v452, 124
        %v500 = vpop.permute.xlu0 %499
        %504 = vrot.lane.b32.xlu0 %v456, 123
        %v505 = vpop.permute.xlu0 %504
        %506 = vrot.lane.b32.xlu0 %v457, 123
        %v507 = vpop.permute.xlu0 %506
        %508 = vrot.lane.b32.xlu0 %v458, 123
        %v509 = vpop.permute.xlu0 %508
        %510 = vrot.lane.b32.xlu0 %v459, 123
        %v511 = vpop.permute.xlu0 %510
        %515 = vrot.lane.b32.xlu0 %v449, 122
        %v516 = vpop.permute.xlu0 %515
        %517 = vrot.lane.b32.xlu0 %v450, 122
        %v518 = vpop.permute.xlu0 %517
        %519 = vrot.lane.b32.xlu0 %v451, 122
        %v520 = vpop.permute.xlu0 %519
        %521 = vrot.lane.b32.xlu0 %v452, 122
        %v522 = vpop.permute.xlu0 %521
        %526 = vrot.lane.b32.xlu0 %v456, 121
        %v527 = vpop.permute.xlu0 %526
        %528 = vrot.lane.b32.xlu0 %v457, 121
        %v529 = vpop.permute.xlu0 %528
        %530 = vrot.lane.b32.xlu0 %v458, 121
        %v531 = vpop.permute.xlu0 %530
        %532 = vrot.lane.b32.xlu0 %v459, 121
        %v533 = vpop.permute.xlu0 %532
        %537 = vrot.lane.b32.xlu0 %v449, 120
        %v538 = vpop.permute.xlu0 %537
        %539 = vrot.lane.b32.xlu0 %v450, 120
        %v540 = vpop.permute.xlu0 %539
        %541 = vrot.lane.b32.xlu0 %v451, 120
        %v542 = vpop.permute.xlu0 %541
        %543 = vrot.lane.b32.xlu0 %v452, 120
        %v544 = vpop.permute.xlu0 %543
        %vm548 = vcmask 1043456
        %v551 = vsel %vm548, %v452, %v461
        %v555 = vsel %vm548, %v478, %v483
        %v559 = vsel %vm548, %v500, %v505
        %v563 = vsel %vm548, %v522, %v527
        %v565 = vld [vmem:[%s1] sm:$0xff]
        %v566 = vld [vmem:[%s1 + $0x8] sm:$0xff]
        %v567 = vld [vmem:[%s1 + $0x10] sm:$0xff]
        %v568 = vld [vmem:[%s1 + $0x18] sm:$0xff]
        %v569 = vld [vmem:[%s1 + $0x20] sm:$0xff]
        %v570 = vld [vmem:[%s1 + $0x28] sm:$0xff]
        %v571 = vld [vmem:[%s1 + $0x30] sm:$0xff]
        %v572 = vld [vmem:[%s1 + $0x38] sm:$0xff]
        %v573 = vld [vmem:[%s1 + $0x40] sm:$0xff]
        %v574 = vld [vmem:[%s1 + $0x48] sm:$0xff]
        %v575 = vld [vmem:[%s1 + $0x50] sm:$0xff]
        %v576 = vld [vmem:[%s1 + $0x58] sm:$0xff]
        %v577 = vld [vmem:[%s1 + $0x60] sm:$0xff]
        %v578 = vld [vmem:[%s1 + $0x68] sm:$0xff]
        %v579 = vld [vmem:[%s1 + $0x70] sm:$0xff]
        %v580 = vld [vmem:[%s1 + $0x78] sm:$0xff]
        %v581 = vld [vmem:[%s1 + $0x80] sm:$0xff]
        %v582 = vld [vmem:[%s1 + $0x88] sm:$0xff]
        %v583 = vld [vmem:[%s1 + $0x90] sm:$0xff]
        %v584 = vld [vmem:[%s1 + $0x98] sm:$0xff]
        %v585 = vld [vmem:[%s1 + $0xa0] sm:$0xff]
        %v586 = vld [vmem:[%s1 + $0xa8] sm:$0xff]
        %v587 = vld [vmem:[%s1 + $0xb0] sm:$0xff]
        %v588 = vld [vmem:[%s1 + $0xb8] sm:$0xff]
        %v589 = vld [vmem:[%s1 + $0xc0] sm:$0xff]
        %v590 = vld [vmem:[%s1 + $0xc8] sm:$0xff]
        %v591 = vld [vmem:[%s1 + $0xd0] sm:$0xff]
        %v592 = vld [vmem:[%s1 + $0xd8] sm:$0xff]
        %v593 = vld [vmem:[%s1 + $0xe0] sm:$0xff]
        %v594 = vld [vmem:[%s1 + $0xe8] sm:$0xff]
        %v595 = vld [vmem:[%s1 + $0xf0] sm:$0xff]
        %v596 = vld [vmem:[%s1 + $0xf8] sm:$0xff]
        %v597 = vld [vmem:[%s6] sm:$0xff]
        %v598 = vld [vmem:[%s6 + $0x8] sm:$0xff]
        %v599 = vld [vmem:[%s6 + $0x10] sm:$0xff]
        %v600 = vld [vmem:[%s6 + $0x18] sm:$0xff]
        %v601 = vld [vmem:[%s6 + $0x20] sm:$0xff]
        %v602 = vld [vmem:[%s6 + $0x28] sm:$0xff]
        %v603 = vld [vmem:[%s6 + $0x30] sm:$0xff]
        %v604 = vld [vmem:[%s6 + $0x38] sm:$0xff]
        %v605 = vld [vmem:[%s6 + $0x40] sm:$0xff]
        %v606 = vld [vmem:[%s6 + $0x48] sm:$0xff]
        %v607 = vld [vmem:[%s6 + $0x50] sm:$0xff]
        %v608 = vld [vmem:[%s6 + $0x58] sm:$0xff]
        %v609 = vld [vmem:[%s6 + $0x60] sm:$0xff]
        %v610 = vld [vmem:[%s6 + $0x68] sm:$0xff]
        %v611 = vld [vmem:[%s6 + $0x70] sm:$0xff]
        %v612 = vld [vmem:[%s6 + $0x78] sm:$0xff]
        %614 = vset.pattern.permute.xlu0 0
        %615 = vperm.xlu0 %614, %v597
        %v616 = vpop.permute.xlu0 %615
        %619 = vset.pattern.permute.xlu0 0
        %620 = vperm.xlu0 %619, %v598
        %v621 = vpop.permute.xlu0 %620
        %624 = vset.pattern.permute.xlu0 0
        %625 = vperm.xlu0 %624, %v599
        %v626 = vpop.permute.xlu0 %625
        %629 = vset.pattern.permute.xlu0 0
        %630 = vperm.xlu0 %629, %v600
        %v631 = vpop.permute.xlu0 %630
        %634 = vset.pattern.permute.xlu0 0
        %635 = vperm.xlu0 %634, %v601
        %v636 = vpop.permute.xlu0 %635
        %639 = vset.pattern.permute.xlu0 0
        %640 = vperm.xlu0 %639, %v602
        %v641 = vpop.permute.xlu0 %640
        %644 = vset.pattern.permute.xlu0 0
        %645 = vperm.xlu0 %644, %v603
        %v646 = vpop.permute.xlu0 %645
        %649 = vset.pattern.permute.xlu0 0
        %650 = vperm.xlu0 %649, %v604
        %v651 = vpop.permute.xlu0 %650
        %654 = vset.pattern.permute.xlu0 0
        %655 = vperm.xlu0 %654, %v605
        %v656 = vpop.permute.xlu0 %655
        %659 = vset.pattern.permute.xlu0 0
        %660 = vperm.xlu0 %659, %v606
        %v661 = vpop.permute.xlu0 %660
        %664 = vset.pattern.permute.xlu0 0
        %665 = vperm.xlu0 %664, %v607
        %v666 = vpop.permute.xlu0 %665
        %669 = vset.pattern.permute.xlu0 0
        %670 = vperm.xlu0 %669, %v608
        %v671 = vpop.permute.xlu0 %670
        %674 = vset.pattern.permute.xlu0 0
        %675 = vperm.xlu0 %674, %v609
        %v676 = vpop.permute.xlu0 %675
        %679 = vset.pattern.permute.xlu0 0
        %680 = vperm.xlu0 %679, %v610
        %v681 = vpop.permute.xlu0 %680
        %684 = vset.pattern.permute.xlu0 0
        %685 = vperm.xlu0 %684, %v611
        %v686 = vpop.permute.xlu0 %685
        %689 = vset.pattern.permute.xlu0 0
        %690 = vperm.xlu0 %689, %v612
        %v691 = vpop.permute.xlu0 %690
        %v725 = vunpack.c.l.b16 %v565
        %v726 = vunpack.c.h.b16 %v565
        %v727 = vunpack.c.l.b16 %v566
        %v728 = vunpack.c.h.b16 %v566
        %v729 = vunpack.c.l.b16 %v567
        %v730 = vunpack.c.h.b16 %v567
        %v731 = vunpack.c.l.b16 %v568
        %v732 = vunpack.c.h.b16 %v568
        %v733 = vunpack.c.l.b16 %v569
        %v734 = vunpack.c.h.b16 %v569
        %v735 = vunpack.c.l.b16 %v570
        %v736 = vunpack.c.h.b16 %v570
        %v737 = vunpack.c.l.b16 %v571
        %v738 = vunpack.c.h.b16 %v571
        %v739 = vunpack.c.l.b16 %v572
        %v740 = vunpack.c.h.b16 %v572
        %v741 = vunpack.c.l.b16 %v573
        %v742 = vunpack.c.h.b16 %v573
        %v743 = vunpack.c.l.b16 %v574
        %v744 = vunpack.c.h.b16 %v574
        %v745 = vunpack.c.l.b16 %v575
        %v746 = vunpack.c.h.b16 %v575
        %v747 = vunpack.c.l.b16 %v576
        %v748 = vunpack.c.h.b16 %v576
        %v749 = vunpack.c.l.b16 %v577
        %v750 = vunpack.c.h.b16 %v577
        %v751 = vunpack.c.l.b16 %v578
        %v752 = vunpack.c.h.b16 %v578
        %v753 = vunpack.c.l.b16 %v579
        %v754 = vunpack.c.h.b16 %v579
        %v755 = vunpack.c.l.b16 %v580
        %v756 = vunpack.c.h.b16 %v580
        %v757 = vunpack.c.l.b16 %v581
        %v758 = vunpack.c.h.b16 %v581
        %v759 = vunpack.c.l.b16 %v582
        %v760 = vunpack.c.h.b16 %v582
        %v761 = vunpack.c.l.b16 %v583
        %v762 = vunpack.c.h.b16 %v583
        %v763 = vunpack.c.l.b16 %v584
        %v764 = vunpack.c.h.b16 %v584
        %v765 = vunpack.c.l.b16 %v585
        %v766 = vunpack.c.h.b16 %v585
        %v767 = vunpack.c.l.b16 %v586
        %v768 = vunpack.c.h.b16 %v586
        %v769 = vunpack.c.l.b16 %v587
        %v770 = vunpack.c.h.b16 %v587
        %v771 = vunpack.c.l.b16 %v588
        %v772 = vunpack.c.h.b16 %v588
        %v773 = vunpack.c.l.b16 %v589
        %v774 = vunpack.c.h.b16 %v589
        %v775 = vunpack.c.l.b16 %v590
        %v776 = vunpack.c.h.b16 %v590
        %v777 = vunpack.c.l.b16 %v591
        %v778 = vunpack.c.h.b16 %v591
        %v779 = vunpack.c.l.b16 %v592
        %v780 = vunpack.c.h.b16 %v592
        %v781 = vunpack.c.l.b16 %v593
        %v782 = vunpack.c.h.b16 %v593
        %v783 = vunpack.c.l.b16 %v594
        %v784 = vunpack.c.h.b16 %v594
        %v785 = vunpack.c.l.b16 %v595
        %v786 = vunpack.c.h.b16 %v595
        %v787 = vunpack.c.l.b16 %v596
        %v788 = vunpack.c.h.b16 %v596
        %v789 = vpack.c.b16 %v729, %v725
        %v790 = vpack.c.b16 %v730, %v726
        %v791 = vpack.c.b16 %v731, %v727
        %v792 = vpack.c.b16 %v732, %v728
        %v793 = vpack.c.b16 %v737, %v733
        %v794 = vpack.c.b16 %v738, %v734
        %v795 = vpack.c.b16 %v739, %v735
        %v796 = vpack.c.b16 %v740, %v736
        %v797 = vpack.c.b16 %v745, %v741
        %v798 = vpack.c.b16 %v746, %v742
        %v799 = vpack.c.b16 %v747, %v743
        %v800 = vpack.c.b16 %v748, %v744
        %v801 = vpack.c.b16 %v753, %v749
        %v802 = vpack.c.b16 %v754, %v750
        %v803 = vpack.c.b16 %v755, %v751
        %v804 = vpack.c.b16 %v756, %v752
        %v805 = vpack.c.b16 %v761, %v757
        %v806 = vpack.c.b16 %v762, %v758
        %v807 = vpack.c.b16 %v763, %v759
        %v808 = vpack.c.b16 %v764, %v760
        %v809 = vpack.c.b16 %v769, %v765
        %v810 = vpack.c.b16 %v770, %v766
        %v811 = vpack.c.b16 %v771, %v767
        %v812 = vpack.c.b16 %v772, %v768
        %v813 = vpack.c.b16 %v777, %v773
        %v814 = vpack.c.b16 %v778, %v774
        %v815 = vpack.c.b16 %v779, %v775
        %v816 = vpack.c.b16 %v780, %v776
        %v817 = vpack.c.b16 %v785, %v781
        %v818 = vpack.c.b16 %v786, %v782
        %v819 = vpack.c.b16 %v787, %v783
        %v820 = vpack.c.b16 %v788, %v784
        %vm845 = vcmask 982016
        %v847 = vsel %vm845, %v792, 0
        %v850 = vsel %vm845, %v796, 0
        %v853 = vsel %vm845, %v800, 0
        %v856 = vsel %vm845, %v804, 0
        %v859 = vsel %vm845, %v808, 0
        %v862 = vsel %vm845, %v812, 0
        %v865 = vsel %vm845, %v816, 0
        %v868 = vsel %vm845, %v820, 0
        %v871 = vsel %vm548, %v544, 0
        %873 = vmatprep.subr.bf16.mxu0 0
        %874 = vmatpush1.bf16.msra.mxu0 %v449
        %875 = vmatprep.subr.bf16.mxu0 0
        %876 = vmatpush1.bf16.msra.mxu0 %v450
        %877 = vmatprep.subr.bf16.mxu0 0
        %878 = vmatpush1.bf16.msra.mxu0 %v451
        %879 = vmatprep.subr.bf16.mxu0 0
        %880 = vmatpush1.bf16.msra.mxu0 %v551
        %881 = vmatprep.subr.bf16.mxu0 0
        %882 = vmatpush1.bf16.msra.mxu0 %v463
        %883 = vmatprep.subr.bf16.mxu0 0
        %884 = vmatpush1.bf16.msra.mxu0 %v465
        %885 = vmatprep.subr.bf16.mxu0 0
        %886 = vmatpush1.bf16.msra.mxu0 %v467
        %887 = vmatprep.subr.bf16.mxu0 0
        %888 = vmatpush1.bf16.msra.mxu0 %v472
        %889 = vmatprep.subr.bf16.mxu0 0
        %890 = vmatpush1.bf16.msra.mxu0 %v474
        %891 = vmatprep.subr.bf16.mxu0 0
        %892 = vmatpush1.bf16.msra.mxu0 %v476
        %893 = vmatprep.subr.bf16.mxu0 0
        %894 = vmatpush1.bf16.msra.mxu0 %v555
        %895 = vmatprep.subr.bf16.mxu0 0
        %896 = vmatpush1.bf16.msra.mxu0 %v485
        %897 = vmatprep.subr.bf16.mxu0 0
        %898 = vmatpush1.bf16.msra.mxu0 %v487
        %899 = vmatprep.subr.bf16.mxu0 0
        %900 = vmatpush1.bf16.msra.mxu0 %v489
        %901 = vmatprep.subr.bf16.mxu0 0
        %902 = vmatpush1.bf16.msra.mxu0 %v494
        %903 = vmatprep.subr.bf16.mxu0 0
        %904 = vmatpush1.bf16.msra.mxu0 %v496
        %905 = vmatprep.mubr.bf16.mxu0 %v790
        %906 = vmatmul.mubr.bf16.gmra.mrb[0].mxu0 %v789
        %v907 = vpop.f32.mrb[0].mxu0
        %v908 = vadd.f32 %v616, %v907
        %v909 = vpop.f32.mrb[0].mxu0
        %v910 = vpop.f32.mrb[0].mxu0
        %v911 = vadd.f32 %v621, %v910
        %v912 = vpop.f32.mrb[0].mxu0
        %913 = vmatprep.mubr.bf16.mxu0 %v794
        %914 = vmatmul.mubr.bf16.gmra.mrb[0].mxu0 %v793
        %v915 = vpop.f32.mrb[0].mxu0
        %v916 = vadd.f32 %v626, %v915
        %v917 = vpop.f32.mrb[0].mxu0
        %v918 = vpop.f32.mrb[0].mxu0
        %v919 = vadd.f32 %v631, %v918
        %v920 = vpop.f32.mrb[0].mxu0
        %921 = vmatprep.mubr.bf16.mxu0 %v798
        %922 = vmatmul.mubr.bf16.gmra.mrb[0].mxu0 %v797
        %v923 = vpop.f32.mrb[0].mxu0
        %v924 = vadd.f32 %v636, %v923
        %v925 = vpop.f32.mrb[0].mxu0
        %v926 = vpop.f32.mrb[0].mxu0
        %v927 = vadd.f32 %v641, %v926
        %v928 = vpop.f32.mrb[0].mxu0
        %929 = vmatprep.mubr.bf16.mxu0 %v802
        %930 = vmatmul.mubr.bf16.gmra.mrb[0].mxu0 %v801
        %v931 = vpop.f32.mrb[0].mxu0
        %v932 = vadd.f32 %v646, %v931
        %v933 = vpop.f32.mrb[0].mxu0
        %v934 = vpop.f32.mrb[0].mxu0
        %v935 = vadd.f32 %v651, %v934
        %v936 = vpop.f32.mrb[0].mxu0
        %937 = vmatprep.mubr.bf16.mxu0 %v806
        %938 = vmatmul.mubr.bf16.gmra.mrb[0].mxu0 %v805
        %v939 = vpop.f32.mrb[0].mxu0
        %v940 = vadd.f32 %v656, %v939
        %v941 = vpop.f32.mrb[0].mxu0
        %v942 = vpop.f32.mrb[0].mxu0
        %v943 = vadd.f32 %v661, %v942
        %v944 = vpop.f32.mrb[0].mxu0
        %945 = vmatprep.mubr.bf16.mxu0 %v810
        %946 = vmatmul.mubr.bf16.gmra.mrb[0].mxu0 %v809
        %v947 = vpop.f32.mrb[0].mxu0
        %v948 = vadd.f32 %v666, %v947
        %v949 = vpop.f32.mrb[0].mxu0
        %v950 = vpop.f32.mrb[0].mxu0
        %v951 = vadd.f32 %v671, %v950
        %v952 = vpop.f32.mrb[0].mxu0
        %953 = vmatprep.mubr.bf16.mxu0 %v814
        %954 = vmatmul.mubr.bf16.gmra.mrb[0].mxu0 %v813
        %v955 = vpop.f32.mrb[0].mxu0
        %v956 = vadd.f32 %v676, %v955
        %v957 = vpop.f32.mrb[0].mxu0
        %v958 = vpop.f32.mrb[0].mxu0
        %v959 = vadd.f32 %v681, %v958
        %v960 = vpop.f32.mrb[0].mxu0
        %961 = vmatprep.mubr.bf16.mxu0 %v818
        %962 = vmatmul.mubr.bf16.gmra.mrb[0].mxu0 %v817
        %v963 = vpop.f32.mrb[0].mxu0
        %v964 = vadd.f32 %v686, %v963
        %v965 = vpop.f32.mrb[0].mxu0
        %v966 = vpop.f32.mrb[0].mxu0
        %v967 = vadd.f32 %v691, %v966
        %v968 = vpop.f32.mrb[0].mxu0
        %969 = vdwg.mxu0
        %970 = vmatprep.subr.bf16.mxu0 0
        %971 = vmatpush1.bf16.msra.mxu0 %v498
        %972 = vmatprep.subr.bf16.mxu0 0
        %973 = vmatpush1.bf16.msra.mxu0 %v559
        %974 = vmatprep.subr.bf16.mxu0 0
        %975 = vmatpush1.bf16.msra.mxu0 %v507
        %976 = vmatprep.subr.bf16.mxu0 0
        %977 = vmatpush1.bf16.msra.mxu0 %v509
        %978 = vmatprep.subr.bf16.mxu0 0
        %979 = vmatpush1.bf16.msra.mxu0 %v511
        %980 = vmatprep.subr.bf16.mxu0 0
        %981 = vmatpush1.bf16.msra.mxu0 %v516
        %982 = vmatprep.subr.bf16.mxu0 0
        %983 = vmatpush1.bf16.msra.mxu0 %v518
        %984 = vmatprep.subr.bf16.mxu0 0
        %985 = vmatpush1.bf16.msra.mxu0 %v520
        %986 = vmatprep.subr.bf16.mxu0 0
        %987 = vmatpush1.bf16.msra.mxu0 %v563
        %988 = vmatprep.subr.bf16.mxu0 0
        %989 = vmatpush1.bf16.msra.mxu0 %v529
        %990 = vmatprep.subr.bf16.mxu0 0
        %991 = vmatpush1.bf16.msra.mxu0 %v531
        %992 = vmatprep.subr.bf16.mxu0 0
        %993 = vmatpush1.bf16.msra.mxu0 %v533
        %994 = vmatprep.subr.bf16.mxu0 0
        %995 = vmatpush1.bf16.msra.mxu0 %v538
        %996 = vmatprep.subr.bf16.mxu0 0
        %997 = vmatpush1.bf16.msra.mxu0 %v540
        %998 = vmatprep.subr.bf16.mxu0 0
        %999 = vmatpush1.bf16.msra.mxu0 %v542
        %1000 = vmatprep.subr.bf16.mxu0 0
        %1001 = vmatpush1.bf16.msra.mxu0 %v871
        %1002 = vmatprep.mubr.bf16.mxu0 %v847
        %1003 = vmatmul.mubr.bf16.gmra.mrb[0].mxu0 %v791
        %v1004 = vpop.f32.mrb[0].mxu0
        %v1005 = vadd.f32 %v908, %v1004
        %v1006 = vpop.f32.mrb[0].mxu0
        %v1007 = vpop.f32.mrb[0].mxu0
        %v1008 = vadd.f32 %v911, %v1007
        %v1009 = vpop.f32.mrb[0].mxu0
        %1010 = vmatprep.mubr.bf16.mxu0 %v850
        %1011 = vmatmul.mubr.bf16.gmra.mrb[0].mxu0 %v795
        %v1012 = vpop.f32.mrb[0].mxu0
        %v1013 = vadd.f32 %v916, %v1012
        %v1014 = vpop.f32.mrb[0].mxu0
        %v1015 = vpop.f32.mrb[0].mxu0
        %v1016 = vadd.f32 %v919, %v1015
        %v1017 = vpop.f32.mrb[0].mxu0
        %1018 = vmatprep.mubr.bf16.mxu0 %v853
        %1019 = vmatmul.mubr.bf16.gmra.mrb[0].mxu0 %v799
        %v1020 = vpop.f32.mrb[0].mxu0
        %v1021 = vadd.f32 %v924, %v1020
        %v1022 = vpop.f32.mrb[0].mxu0
        %v1023 = vpop.f32.mrb[0].mxu0
        %v1024 = vadd.f32 %v927, %v1023
        %v1025 = vpop.f32.mrb[0].mxu0
        %1026 = vmatprep.mubr.bf16.mxu0 %v856
        %1027 = vmatmul.mubr.bf16.gmra.mrb[0].mxu0 %v803
        %v1028 = vpop.f32.mrb[0].mxu0
        %v1029 = vadd.f32 %v932, %v1028
        %v1030 = vpop.f32.mrb[0].mxu0
        %v1031 = vpop.f32.mrb[0].mxu0
        %v1032 = vadd.f32 %v935, %v1031
        %v1033 = vpop.f32.mrb[0].mxu0
        %1034 = vmatprep.mubr.bf16.mxu0 %v859
        %1035 = vmatmul.mubr.bf16.gmra.mrb[0].mxu0 %v807
        %v1036 = vpop.f32.mrb[0].mxu0
        %v1037 = vadd.f32 %v940, %v1036
        %v1038 = vpop.f32.mrb[0].mxu0
        %v1039 = vpop.f32.mrb[0].mxu0
        %v1040 = vadd.f32 %v943, %v1039
        %v1041 = vpop.f32.mrb[0].mxu0
        %1042 = vmatprep.mubr.bf16.mxu0 %v862
        %1043 = vmatmul.mubr.bf16.gmra.mrb[0].mxu0 %v811
        %v1044 = vpop.f32.mrb[0].mxu0
        %v1045 = vadd.f32 %v948, %v1044
        %v1046 = vpop.f32.mrb[0].mxu0
        %v1047 = vpop.f32.mrb[0].mxu0
        %v1048 = vadd.f32 %v951, %v1047
        %v1049 = vpop.f32.mrb[0].mxu0
        %1050 = vmatprep.mubr.bf16.mxu0 %v865
        %1051 = vmatmul.mubr.bf16.gmra.mrb[0].mxu0 %v815
        %v1052 = vpop.f32.mrb[0].mxu0
        %v1053 = vadd.f32 %v956, %v1052
        %v1054 = vpop.f32.mrb[0].mxu0
        %v1055 = vpop.f32.mrb[0].mxu0
        %v1056 = vadd.f32 %v959, %v1055
        %v1057 = vpop.f32.mrb[0].mxu0
        %1058 = vmatprep.mubr.bf16.mxu0 %v868
        %1059 = vmatmul.mubr.bf16.gmra.mrb[0].mxu0 %v819
        %v1060 = vpop.f32.mrb[0].mxu0
        %v1061 = vadd.f32 %v964, %v1060
        %v1062 = vpop.f32.mrb[0].mxu0
        %v1063 = vpop.f32.mrb[0].mxu0
        %v1064 = vadd.f32 %v967, %v1063
        %v1065 = vpop.f32.mrb[0].mxu0
        %1066 = vdwg.mxu0
        %v1067 = vmax.f32 %v1005, 0.0
        %v1068 = vmax.f32 %v1008, 0.0
        %v1069 = vmax.f32 %v1013, 0.0
        %v1070 = vmax.f32 %v1016, 0.0
        %v1071 = vmax.f32 %v1021, 0.0
        %v1072 = vmax.f32 %v1024, 0.0
        %v1073 = vmax.f32 %v1029, 0.0
        %v1074 = vmax.f32 %v1032, 0.0
        %v1075 = vmax.f32 %v1037, 0.0
        %v1076 = vmax.f32 %v1040, 0.0
        %v1077 = vmax.f32 %v1045, 0.0
        %v1078 = vmax.f32 %v1048, 0.0
        %v1079 = vmax.f32 %v1053, 0.0
        %v1080 = vmax.f32 %v1056, 0.0
        %v1081 = vmax.f32 %v1061, 0.0
        %v1082 = vmax.f32 %v1064, 0.0
        %vm1083 = vcmp.ge.s32.totalorder %v423, 0
        %vm1084 = vcmp.lt.s32.totalorder %v423, 16
        %vm1085 = vmand %vm1083, %vm1084
        %v1086 = vsel %vm1085, 1, 0
        %vm1087 = vcmp.eq.s32.totalorder %v1086, 1
        %1104 = vrot.lane.b32.xlu0 %v1067, 4
        %v1105 = vpop.permute.xlu0 %1104
        %1106 = vrot.lane.b32.xlu0 %v1068, 4
        %v1107 = vpop.permute.xlu0 %1106
        %1108 = vrot.lane.b32.xlu0 %v1069, 4
        %v1109 = vpop.permute.xlu0 %1108
        %1110 = vrot.lane.b32.xlu0 %v1070, 4
        %v1111 = vpop.permute.xlu0 %1110
        %1112 = vrot.lane.b32.xlu0 %v1071, 4
        %v1113 = vpop.permute.xlu0 %1112
        %1114 = vrot.lane.b32.xlu0 %v1072, 4
        %v1115 = vpop.permute.xlu0 %1114
        %1116 = vrot.lane.b32.xlu0 %v1073, 4
        %v1117 = vpop.permute.xlu0 %1116
        %1118 = vrot.lane.b32.xlu0 %v1074, 4
        %v1119 = vpop.permute.xlu0 %1118
        %1120 = vrot.lane.b32.xlu0 %v1075, 4
        %v1121 = vpop.permute.xlu0 %1120
        %1122 = vrot.lane.b32.xlu0 %v1076, 4
        %v1123 = vpop.permute.xlu0 %1122
        %1124 = vrot.lane.b32.xlu0 %v1077, 4
        %v1125 = vpop.permute.xlu0 %1124
        %1126 = vrot.lane.b32.xlu0 %v1078, 4
        %v1127 = vpop.permute.xlu0 %1126
        %1128 = vrot.lane.b32.xlu0 %v1079, 4
        %v1129 = vpop.permute.xlu0 %1128
        %1130 = vrot.lane.b32.xlu0 %v1080, 4
        %v1131 = vpop.permute.xlu0 %1130
        %1132 = vrot.lane.b32.xlu0 %v1081, 4
        %v1133 = vpop.permute.xlu0 %1132
        %1134 = vrot.lane.b32.xlu0 %v1082, 4
        %v1135 = vpop.permute.xlu0 %1134
        %v1152 = vsel %vm1087, %v1105, 0.0
        %v1153 = vsel %vm1087, %v1107, 0.0
        %v1154 = vsel %vm1087, %v1109, 0.0
        %v1155 = vsel %vm1087, %v1111, 0.0
        %v1156 = vsel %vm1087, %v1113, 0.0
        %v1157 = vsel %vm1087, %v1115, 0.0
        %v1158 = vsel %vm1087, %v1117, 0.0
        %v1159 = vsel %vm1087, %v1119, 0.0
        %v1160 = vsel %vm1087, %v1121, 0.0
        %v1161 = vsel %vm1087, %v1123, 0.0
        %v1162 = vsel %vm1087, %v1125, 0.0
        %v1163 = vsel %vm1087, %v1127, 0.0
        %v1164 = vsel %vm1087, %v1129, 0.0
        %v1165 = vsel %vm1087, %v1131, 0.0
        %v1166 = vsel %vm1087, %v1133, 0.0
        %v1167 = vsel %vm1087, %v1135, 0.0
        %v1168 = vpack.c.bf16 %v1153, %v1152
        %v1169 = vpack.c.bf16 %v1155, %v1154
        %v1170 = vpack.c.bf16 %v1157, %v1156
        %v1171 = vpack.c.bf16 %v1159, %v1158
        %v1172 = vpack.c.bf16 %v1161, %v1160
        %v1173 = vpack.c.bf16 %v1163, %v1162
        %v1174 = vpack.c.bf16 %v1165, %v1164
        %v1175 = vpack.c.bf16 %v1167, %v1166
        %1184 = vrot.lane.b32.xlu0 %v1168, 127
        %v1185 = vpop.permute.xlu0 %1184
        %1186 = vrot.lane.b32.xlu0 %v1169, 127
        %v1187 = vpop.permute.xlu0 %1186
        %1188 = vrot.lane.b32.xlu0 %v1170, 127
        %v1189 = vpop.permute.xlu0 %1188
        %1190 = vrot.lane.b32.xlu0 %v1171, 127
        %v1191 = vpop.permute.xlu0 %1190
        %1192 = vrot.lane.b32.xlu0 %v1172, 127
        %v1193 = vpop.permute.xlu0 %1192
        %1194 = vrot.lane.b32.xlu0 %v1173, 127
        %v1195 = vpop.permute.xlu0 %1194
        %1196 = vrot.lane.b32.xlu0 %v1174, 127
        %v1197 = vpop.permute.xlu0 %1196
        %1198 = vrot.lane.b32.xlu0 %v1175, 127
        %v1199 = vpop.permute.xlu0 %1198
        %v1200 = vld [vmem:[%s2] sm:$0xff]
        %v1201 = vld [vmem:[%s2 + $0x24] sm:$0xff]
        %v1202 = vld [vmem:[%s2 + $0x48] sm:$0xff]
        %v1203 = vld [vmem:[%s2 + $0x6c] sm:$0xff]
        %v1204 = vld [vmem:[%s2 + $0x90] sm:$0xff]
        %v1205 = vld [vmem:[%s2 + $0xb4] sm:$0xff]
        %v1206 = vld [vmem:[%s2 + $0xd8] sm:$0xff]
        %v1207 = vld [vmem:[%s2 + $0xfc] sm:$0xff]
        %v1208 = vld [vmem:[%s2 + $0x8] sm:$0xff]
        %v1209 = vld [vmem:[%s2 + $0x2c] sm:$0xff]
        %v1210 = vld [vmem:[%s2 + $0x50] sm:$0xff]
        %v1211 = vld [vmem:[%s2 + $0x74] sm:$0xff]
        %v1212 = vld [vmem:[%s2 + $0x98] sm:$0xff]
        %v1213 = vld [vmem:[%s2 + $0xbc] sm:$0xff]
        %v1214 = vld [vmem:[%s2 + $0xe0] sm:$0xff]
        %v1215 = vld [vmem:[%s2 + $0x104] sm:$0xff]
        %v1224 = vunpack.c.l.b16 %v1208
        %v1225 = vunpack.c.h.b16 %v1208
        %v1226 = vunpack.c.l.b16 %v1209
        %v1227 = vunpack.c.h.b16 %v1209
        %v1228 = vunpack.c.l.b16 %v1210
        %v1229 = vunpack.c.h.b16 %v1210
        %v1230 = vunpack.c.l.b16 %v1211
        %v1231 = vunpack.c.h.b16 %v1211
        %v1232 = vunpack.c.l.b16 %v1212
        %v1233 = vunpack.c.h.b16 %v1212
        %v1234 = vunpack.c.l.b16 %v1213
        %v1235 = vunpack.c.h.b16 %v1213
        %v1236 = vunpack.c.l.b16 %v1214
        %v1237 = vunpack.c.h.b16 %v1214
        %v1238 = vunpack.c.l.b16 %v1215
        %v1239 = vunpack.c.h.b16 %v1215
        %v1240 = vpack.c.b16 %v1226, %v1224
        %v1241 = vpack.c.b16 %v1227, %v1225
        %v1242 = vpack.c.b16 %v1230, %v1228
        %v1243 = vpack.c.b16 %v1231, %v1229
        %v1244 = vpack.c.b16 %v1234, %v1232
        %v1245 = vpack.c.b16 %v1235, %v1233
        %v1246 = vpack.c.b16 %v1238, %v1236
        %v1247 = vpack.c.b16 %v1239, %v1237
        %1256 = vrot.lane.b32.xlu0 %v1168, 122
        %v1257 = vpop.permute.xlu0 %1256
        %1258 = vrot.lane.b32.xlu0 %v1169, 122
        %v1259 = vpop.permute.xlu0 %1258
        %1260 = vrot.lane.b32.xlu0 %v1170, 122
        %v1261 = vpop.permute.xlu0 %1260
        %1262 = vrot.lane.b32.xlu0 %v1171, 122
        %v1263 = vpop.permute.xlu0 %1262
        %1264 = vrot.lane.b32.xlu0 %v1172, 122
        %v1265 = vpop.permute.xlu0 %1264
        %1266 = vrot.lane.b32.xlu0 %v1173, 122
        %v1267 = vpop.permute.xlu0 %1266
        %1268 = vrot.lane.b32.xlu0 %v1174, 122
        %v1269 = vpop.permute.xlu0 %1268
        %1270 = vrot.lane.b32.xlu0 %v1175, 122
        %v1271 = vpop.permute.xlu0 %1270
        %1272 = vrot.lane.b32.xlu0 %v1185, 122
        %v1273 = vpop.permute.xlu0 %1272
        %1274 = vrot.lane.b32.xlu0 %v1187, 122
        %v1275 = vpop.permute.xlu0 %1274
        %1276 = vrot.lane.b32.xlu0 %v1189, 122
        %v1277 = vpop.permute.xlu0 %1276
        %1278 = vrot.lane.b32.xlu0 %v1191, 122
        %v1279 = vpop.permute.xlu0 %1278
        %1280 = vrot.lane.b32.xlu0 %v1193, 122
        %v1281 = vpop.permute.xlu0 %1280
        %1282 = vrot.lane.b32.xlu0 %v1195, 122
        %v1283 = vpop.permute.xlu0 %1282
        %1284 = vrot.lane.b32.xlu0 %v1197, 122
        %v1285 = vpop.permute.xlu0 %1284
        %1286 = vrot.lane.b32.xlu0 %v1199, 122
        %v1287 = vpop.permute.xlu0 %1286
        %1304 = vmatprep.subr.bf16.mxu0 0
        %1305 = vmatpush1.bf16.msra.mxu0 %v1257
        %1306 = vmatprep.subr.bf16.mxu0 0
        %1307 = vmatpush1.bf16.msra.mxu0 %v1259
        %1308 = vmatprep.subr.bf16.mxu0 0
        %1309 = vmatpush1.bf16.msra.mxu0 %v1261
        %1310 = vmatprep.subr.bf16.mxu0 0
        %1311 = vmatpush1.bf16.msra.mxu0 %v1263
        %1312 = vmatprep.subr.bf16.mxu0 0
        %1313 = vmatpush1.bf16.msra.mxu0 %v1265
        %1314 = vmatprep.subr.bf16.mxu0 0
        %1315 = vmatpush1.bf16.msra.mxu0 %v1267
        %1316 = vmatprep.subr.bf16.mxu0 0
        %1317 = vmatpush1.bf16.msra.mxu0 %v1269
        %1318 = vmatprep.subr.bf16.mxu0 0
        %1319 = vmatpush1.bf16.msra.mxu0 %v1271
        %1320 = vmatprep.subr.bf16.mxu0 0
        %1321 = vmatpush1.bf16.msra.mxu0 %v1273
        %1322 = vmatprep.subr.bf16.mxu0 0
        %1323 = vmatpush1.bf16.msra.mxu0 %v1275
        %1324 = vmatprep.subr.bf16.mxu0 0
        %1325 = vmatpush1.bf16.msra.mxu0 %v1277
        %1326 = vmatprep.subr.bf16.mxu0 0
        %1327 = vmatpush1.bf16.msra.mxu0 %v1279
        %1328 = vmatprep.subr.bf16.mxu0 0
        %1329 = vmatpush1.bf16.msra.mxu0 %v1281
        %1330 = vmatprep.subr.bf16.mxu0 0
        %1331 = vmatpush1.bf16.msra.mxu0 %v1283
        %1332 = vmatprep.subr.bf16.mxu0 0
        %1333 = vmatpush1.bf16.msra.mxu0 %v1285
        %1334 = vmatprep.subr.bf16.mxu0 0
        %1335 = vmatpush1.bf16.msra.mxu0 %v1287
        %1336 = vmatprep.mubr.bf16.mxu0 %v1241
        %1337 = vmatmul.mubr.bf16.gmra.mrb[0].mxu0 %v1240
        %v1338 = vpop.f32.mrb[0].mxu0
        %v1339 = vadd.f32 0.0, %v1338
        %v1340 = vpop.f32.mrb[0].mxu0
        %v1341 = vpop.f32.mrb[0].mxu0
        %v1342 = vadd.f32 0.0, %v1341
        %v1343 = vpop.f32.mrb[0].mxu0
        %1344 = vmatprep.mubr.bf16.mxu0 %v1243
        %1345 = vmatmul.mubr.bf16.gmra.mrb[0].mxu0 %v1242
        %v1346 = vpop.f32.mrb[0].mxu0
        %v1347 = vadd.f32 0.0, %v1346
        %v1348 = vpop.f32.mrb[0].mxu0
        %v1349 = vpop.f32.mrb[0].mxu0
        %v1350 = vadd.f32 0.0, %v1349
        %v1351 = vpop.f32.mrb[0].mxu0
        %1352 = vmatprep.mubr.bf16.mxu0 %v1245
        %1353 = vmatmul.mubr.bf16.gmra.mrb[0].mxu0 %v1244
        %v1354 = vpop.f32.mrb[0].mxu0
        %v1355 = vadd.f32 0.0, %v1354
        %v1356 = vpop.f32.mrb[0].mxu0
        %v1357 = vpop.f32.mrb[0].mxu0
        %v1358 = vadd.f32 0.0, %v1357
        %v1359 = vpop.f32.mrb[0].mxu0
        %1360 = vmatprep.mubr.bf16.mxu0 %v1247
        %1361 = vmatmul.mubr.bf16.gmra.mrb[0].mxu0 %v1246
        %v1362 = vpop.f32.mrb[0].mxu0
        %v1363 = vadd.f32 0.0, %v1362
        %v1364 = vpop.f32.mrb[0].mxu0
        %v1365 = vpop.f32.mrb[0].mxu0
        %v1366 = vadd.f32 0.0, %v1365
        %v1367 = vpop.f32.mrb[0].mxu0
        %1368 = vdwg.mxu0
        %v1377 = vunpack.c.l.b16 %v1200
        %v1378 = vunpack.c.h.b16 %v1200
        %v1379 = vunpack.c.l.b16 %v1201
        %v1380 = vunpack.c.h.b16 %v1201
        %v1381 = vunpack.c.l.b16 %v1202
        %v1382 = vunpack.c.h.b16 %v1202
        %v1383 = vunpack.c.l.b16 %v1203
        %v1384 = vunpack.c.h.b16 %v1203
        %v1385 = vunpack.c.l.b16 %v1204
        %v1386 = vunpack.c.h.b16 %v1204
        %v1387 = vunpack.c.l.b16 %v1205
        %v1388 = vunpack.c.h.b16 %v1205
        %v1389 = vunpack.c.l.b16 %v1206
        %v1390 = vunpack.c.h.b16 %v1206
        %v1391 = vunpack.c.l.b16 %v1207
        %v1392 = vunpack.c.h.b16 %v1207
        %v1393 = vpack.c.b16 %v1379, %v1377
        %v1394 = vpack.c.b16 %v1380, %v1378
        %v1395 = vpack.c.b16 %v1383, %v1381
        %v1396 = vpack.c.b16 %v1384, %v1382
        %v1397 = vpack.c.b16 %v1387, %v1385
        %v1398 = vpack.c.b16 %v1388, %v1386
        %v1399 = vpack.c.b16 %v1391, %v1389
        %v1400 = vpack.c.b16 %v1392, %v1390
        %1409 = vrot.lane.b32.xlu0 %v1168, 124
        %v1410 = vpop.permute.xlu0 %1409
        %1411 = vrot.lane.b32.xlu0 %v1169, 124
        %v1412 = vpop.permute.xlu0 %1411
        %1413 = vrot.lane.b32.xlu0 %v1170, 124
        %v1414 = vpop.permute.xlu0 %1413
        %1415 = vrot.lane.b32.xlu0 %v1171, 124
        %v1416 = vpop.permute.xlu0 %1415
        %1417 = vrot.lane.b32.xlu0 %v1172, 124
        %v1418 = vpop.permute.xlu0 %1417
        %1419 = vrot.lane.b32.xlu0 %v1173, 124
        %v1420 = vpop.permute.xlu0 %1419
        %1421 = vrot.lane.b32.xlu0 %v1174, 124
        %v1422 = vpop.permute.xlu0 %1421
        %1423 = vrot.lane.b32.xlu0 %v1175, 124
        %v1424 = vpop.permute.xlu0 %1423
        %1425 = vrot.lane.b32.xlu0 %v1185, 124
        %v1426 = vpop.permute.xlu0 %1425
        %1427 = vrot.lane.b32.xlu0 %v1187, 124
        %v1428 = vpop.permute.xlu0 %1427
        %1429 = vrot.lane.b32.xlu0 %v1189, 124
        %v1430 = vpop.permute.xlu0 %1429
        %1431 = vrot.lane.b32.xlu0 %v1191, 124
        %v1432 = vpop.permute.xlu0 %1431
        %1433 = vrot.lane.b32.xlu0 %v1193, 124
        %v1434 = vpop.permute.xlu0 %1433
        %1435 = vrot.lane.b32.xlu0 %v1195, 124
        %v1436 = vpop.permute.xlu0 %1435
        %1437 = vrot.lane.b32.xlu0 %v1197, 124
        %v1438 = vpop.permute.xlu0 %1437
        %1439 = vrot.lane.b32.xlu0 %v1199, 124
        %v1440 = vpop.permute.xlu0 %1439
        %1457 = vmatprep.subr.bf16.mxu0 0
        %1458 = vmatpush1.bf16.msra.mxu0 %v1410
        %1459 = vmatprep.subr.bf16.mxu0 0
        %1460 = vmatpush1.bf16.msra.mxu0 %v1412
        %1461 = vmatprep.subr.bf16.mxu0 0
        %1462 = vmatpush1.bf16.msra.mxu0 %v1414
        %1463 = vmatprep.subr.bf16.mxu0 0
        %1464 = vmatpush1.bf16.msra.mxu0 %v1416
        %1465 = vmatprep.subr.bf16.mxu0 0
        %1466 = vmatpush1.bf16.msra.mxu0 %v1418
        %1467 = vmatprep.subr.bf16.mxu0 0
        %1468 = vmatpush1.bf16.msra.mxu0 %v1420
        %1469 = vmatprep.subr.bf16.mxu0 0
        %1470 = vmatpush1.bf16.msra.mxu0 %v1422
        %1471 = vmatprep.subr.bf16.mxu0 0
        %1472 = vmatpush1.bf16.msra.mxu0 %v1424
        %1473 = vmatprep.subr.bf16.mxu0 0
        %1474 = vmatpush1.bf16.msra.mxu0 %v1426
        %1475 = vmatprep.subr.bf16.mxu0 0
        %1476 = vmatpush1.bf16.msra.mxu0 %v1428
        %1477 = vmatprep.subr.bf16.mxu0 0
        %1478 = vmatpush1.bf16.msra.mxu0 %v1430
        %1479 = vmatprep.subr.bf16.mxu0 0
        %1480 = vmatpush1.bf16.msra.mxu0 %v1432
        %1481 = vmatprep.subr.bf16.mxu0 0
        %1482 = vmatpush1.bf16.msra.mxu0 %v1434
        %1483 = vmatprep.subr.bf16.mxu0 0
        %1484 = vmatpush1.bf16.msra.mxu0 %v1436
        %1485 = vmatprep.subr.bf16.mxu0 0
        %1486 = vmatpush1.bf16.msra.mxu0 %v1438
        %1487 = vmatprep.subr.bf16.mxu0 0
        %1488 = vmatpush1.bf16.msra.mxu0 %v1440
        %1489 = vmatprep.mubr.bf16.mxu0 %v1394
        %1490 = vmatmul.mubr.bf16.gmra.mrb[0].mxu0 %v1393
        %v1491 = vpop.f32.mrb[0].mxu0
        %v1492 = vadd.f32 %v1339, %v1491
        %v1493 = vpop.f32.mrb[0].mxu0
        %v1494 = vpop.f32.mrb[0].mxu0
        %v1495 = vadd.f32 %v1342, %v1494
        %v1496 = vpop.f32.mrb[0].mxu0
        %1497 = vmatprep.mubr.bf16.mxu0 %v1396
        %1498 = vmatmul.mubr.bf16.gmra.mrb[0].mxu0 %v1395
        %v1499 = vpop.f32.mrb[0].mxu0
        %v1500 = vadd.f32 %v1347, %v1499
        %v1501 = vpop.f32.mrb[0].mxu0
        %v1502 = vpop.f32.mrb[0].mxu0
        %v1503 = vadd.f32 %v1350, %v1502
        %v1504 = vpop.f32.mrb[0].mxu0
        %1505 = vmatprep.mubr.bf16.mxu0 %v1398
        %1506 = vmatmul.mubr.bf16.gmra.mrb[0].mxu0 %v1397
        %v1507 = vpop.f32.mrb[0].mxu0
        %v1508 = vadd.f32 %v1355, %v1507
        %v1509 = vpop.f32.mrb[0].mxu0
        %v1510 = vpop.f32.mrb[0].mxu0
        %v1511 = vadd.f32 %v1358, %v1510
        %v1512 = vpop.f32.mrb[0].mxu0
        %1513 = vmatprep.mubr.bf16.mxu0 %v1400
        %1514 = vmatmul.mubr.bf16.gmra.mrb[0].mxu0 %v1399
        %v1515 = vpop.f32.mrb[0].mxu0
        %v1516 = vadd.f32 %v1363, %v1515
        %v1517 = vpop.f32.mrb[0].mxu0
        %v1518 = vpop.f32.mrb[0].mxu0
        %v1519 = vadd.f32 %v1366, %v1518
        %v1520 = vpop.f32.mrb[0].mxu0
        %1521 = vdwg.mxu0
        %v1522 = vld [vmem:[%s2 + $0x10] sm:$0xff]
        %v1523 = vld [vmem:[%s2 + $0x34] sm:$0xff]
        %v1524 = vld [vmem:[%s2 + $0x58] sm:$0xff]
        %v1525 = vld [vmem:[%s2 + $0x7c] sm:$0xff]
        %v1526 = vld [vmem:[%s2 + $0xa0] sm:$0xff]
        %v1527 = vld [vmem:[%s2 + $0xc4] sm:$0xff]
        %v1528 = vld [vmem:[%s2 + $0xe8] sm:$0xff]
        %v1529 = vld [vmem:[%s2 + $0x10c] sm:$0xff]
        %v1538 = vunpack.c.l.b16 %v1522
        %v1539 = vunpack.c.h.b16 %v1522
        %v1540 = vunpack.c.l.b16 %v1523
        %v1541 = vunpack.c.h.b16 %v1523
        %v1542 = vunpack.c.l.b16 %v1524
        %v1543 = vunpack.c.h.b16 %v1524
        %v1544 = vunpack.c.l.b16 %v1525
        %v1545 = vunpack.c.h.b16 %v1525
        %v1546 = vunpack.c.l.b16 %v1526
        %v1547 = vunpack.c.h.b16 %v1526
        %v1548 = vunpack.c.l.b16 %v1527
        %v1549 = vunpack.c.h.b16 %v1527
        %v1550 = vunpack.c.l.b16 %v1528
        %v1551 = vunpack.c.h.b16 %v1528
        %v1552 = vunpack.c.l.b16 %v1529
        %v1553 = vunpack.c.h.b16 %v1529
        %v1554 = vpack.c.b16 %v1540, %v1538
        %v1555 = vpack.c.b16 %v1541, %v1539
        %v1556 = vpack.c.b16 %v1544, %v1542
        %v1557 = vpack.c.b16 %v1545, %v1543
        %v1558 = vpack.c.b16 %v1548, %v1546
        %v1559 = vpack.c.b16 %v1549, %v1547
        %v1560 = vpack.c.b16 %v1552, %v1550
        %v1561 = vpack.c.b16 %v1553, %v1551
        %1570 = vrot.lane.b32.xlu0 %v1168, 120
        %v1571 = vpop.permute.xlu0 %1570
        %1572 = vrot.lane.b32.xlu0 %v1169, 120
        %v1573 = vpop.permute.xlu0 %1572
        %1574 = vrot.lane.b32.xlu0 %v1170, 120
        %v1575 = vpop.permute.xlu0 %1574
        %1576 = vrot.lane.b32.xlu0 %v1171, 120
        %v1577 = vpop.permute.xlu0 %1576
        %1578 = vrot.lane.b32.xlu0 %v1172, 120
        %v1579 = vpop.permute.xlu0 %1578
        %1580 = vrot.lane.b32.xlu0 %v1173, 120
        %v1581 = vpop.permute.xlu0 %1580
        %1582 = vrot.lane.b32.xlu0 %v1174, 120
        %v1583 = vpop.permute.xlu0 %1582
        %1584 = vrot.lane.b32.xlu0 %v1175, 120
        %v1585 = vpop.permute.xlu0 %1584
        %1586 = vrot.lane.b32.xlu0 %v1185, 120
        %v1587 = vpop.permute.xlu0 %1586
        %1588 = vrot.lane.b32.xlu0 %v1187, 120
        %v1589 = vpop.permute.xlu0 %1588
        %1590 = vrot.lane.b32.xlu0 %v1189, 120
        %v1591 = vpop.permute.xlu0 %1590
        %1592 = vrot.lane.b32.xlu0 %v1191, 120
        %v1593 = vpop.permute.xlu0 %1592
        %1594 = vrot.lane.b32.xlu0 %v1193, 120
        %v1595 = vpop.permute.xlu0 %1594
        %1596 = vrot.lane.b32.xlu0 %v1195, 120
        %v1597 = vpop.permute.xlu0 %1596
        %1598 = vrot.lane.b32.xlu0 %v1197, 120
        %v1599 = vpop.permute.xlu0 %1598
        %1600 = vrot.lane.b32.xlu0 %v1199, 120
        %v1601 = vpop.permute.xlu0 %1600
        %1618 = vmatprep.subr.bf16.mxu0 0
        %1619 = vmatpush1.bf16.msra.mxu0 %v1571
        %1620 = vmatprep.subr.bf16.mxu0 0
        %1621 = vmatpush1.bf16.msra.mxu0 %v1573
        %1622 = vmatprep.subr.bf16.mxu0 0
        %1623 = vmatpush1.bf16.msra.mxu0 %v1575
        %1624 = vmatprep.subr.bf16.mxu0 0
        %1625 = vmatpush1.bf16.msra.mxu0 %v1577
        %1626 = vmatprep.subr.bf16.mxu0 0
        %1627 = vmatpush1.bf16.msra.mxu0 %v1579
        %1628 = vmatprep.subr.bf16.mxu0 0
        %1629 = vmatpush1.bf16.msra.mxu0 %v1581
        %1630 = vmatprep.subr.bf16.mxu0 0
        %1631 = vmatpush1.bf16.msra.mxu0 %v1583
        %1632 = vmatprep.subr.bf16.mxu0 0
        %1633 = vmatpush1.bf16.msra.mxu0 %v1585
        %1634 = vmatprep.subr.bf16.mxu0 0
        %1635 = vmatpush1.bf16.msra.mxu0 %v1587
        %1636 = vmatprep.subr.bf16.mxu0 0
        %1637 = vmatpush1.bf16.msra.mxu0 %v1589
        %1638 = vmatprep.subr.bf16.mxu0 0
        %1639 = vmatpush1.bf16.msra.mxu0 %v1591
        %1640 = vmatprep.subr.bf16.mxu0 0
        %1641 = vmatpush1.bf16.msra.mxu0 %v1593
        %1642 = vmatprep.subr.bf16.mxu0 0
        %1643 = vmatpush1.bf16.msra.mxu0 %v1595
        %1644 = vmatprep.subr.bf16.mxu0 0
        %1645 = vmatpush1.bf16.msra.mxu0 %v1597
        %1646 = vmatprep.subr.bf16.mxu0 0
        %1647 = vmatpush1.bf16.msra.mxu0 %v1599
        %1648 = vmatprep.subr.bf16.mxu0 0
        %1649 = vmatpush1.bf16.msra.mxu0 %v1601
        %1650 = vmatprep.mubr.bf16.mxu0 %v1555
        %1651 = vmatmul.mubr.bf16.gmra.mrb[0].mxu0 %v1554
        %v1652 = vpop.f32.mrb[0].mxu0
        %v1653 = vadd.f32 0.0, %v1652
        %v1654 = vpop.f32.mrb[0].mxu0
        %v1655 = vpop.f32.mrb[0].mxu0
        %v1656 = vadd.f32 0.0, %v1655
        %v1657 = vpop.f32.mrb[0].mxu0
        %1658 = vmatprep.mubr.bf16.mxu0 %v1557
        %1659 = vmatmul.mubr.bf16.gmra.mrb[0].mxu0 %v1556
        %v1660 = vpop.f32.mrb[0].mxu0
        %v1661 = vadd.f32 0.0, %v1660
        %v1662 = vpop.f32.mrb[0].mxu0
        %v1663 = vpop.f32.mrb[0].mxu0
        %v1664 = vadd.f32 0.0, %v1663
        %v1665 = vpop.f32.mrb[0].mxu0
        %1666 = vmatprep.mubr.bf16.mxu0 %v1559
        %1667 = vmatmul.mubr.bf16.gmra.mrb[0].mxu0 %v1558
        %v1668 = vpop.f32.mrb[0].mxu0
        %v1669 = vadd.f32 0.0, %v1668
        %v1670 = vpop.f32.mrb[0].mxu0
        %v1671 = vpop.f32.mrb[0].mxu0
        %v1672 = vadd.f32 0.0, %v1671
        %v1673 = vpop.f32.mrb[0].mxu0
        %1674 = vmatprep.mubr.bf16.mxu0 %v1561
        %1675 = vmatmul.mubr.bf16.gmra.mrb[0].mxu0 %v1560
        %v1676 = vpop.f32.mrb[0].mxu0
        %v1677 = vadd.f32 0.0, %v1676
        %v1678 = vpop.f32.mrb[0].mxu0
        %v1679 = vpop.f32.mrb[0].mxu0
        %v1680 = vadd.f32 0.0, %v1679
        %v1681 = vpop.f32.mrb[0].mxu0
        %1682 = vdwg.mxu0
        %v1683 = vadd.f32 %v1492, %v1653
        %v1684 = vadd.f32 %v1495, %v1656
        %v1685 = vadd.f32 %v1500, %v1661
        %v1686 = vadd.f32 %v1503, %v1664
        %v1687 = vadd.f32 %v1508, %v1669
        %v1688 = vadd.f32 %v1511, %v1672
        %v1689 = vadd.f32 %v1516, %v1677
        %v1690 = vadd.f32 %v1519, %v1680
        %v1691 = vld [vmem:[%s2 + $0x18] sm:$0xff]
        %v1692 = vld [vmem:[%s2 + $0x3c] sm:$0xff]
        %v1693 = vld [vmem:[%s2 + $0x60] sm:$0xff]
        %v1694 = vld [vmem:[%s2 + $0x84] sm:$0xff]
        %v1695 = vld [vmem:[%s2 + $0xa8] sm:$0xff]
        %v1696 = vld [vmem:[%s2 + $0xcc] sm:$0xff]
        %v1697 = vld [vmem:[%s2 + $0xf0] sm:$0xff]
        %v1698 = vld [vmem:[%s2 + $0x114] sm:$0xff]
        %v1707 = vunpack.c.l.b16 %v1691
        %v1708 = vunpack.c.h.b16 %v1691
        %v1709 = vunpack.c.l.b16 %v1692
        %v1710 = vunpack.c.h.b16 %v1692
        %v1711 = vunpack.c.l.b16 %v1693
        %v1712 = vunpack.c.h.b16 %v1693
        %v1713 = vunpack.c.l.b16 %v1694
        %v1714 = vunpack.c.h.b16 %v1694
        %v1715 = vunpack.c.l.b16 %v1695
        %v1716 = vunpack.c.h.b16 %v1695
        %v1717 = vunpack.c.l.b16 %v1696
        %v1718 = vunpack.c.h.b16 %v1696
        %v1719 = vunpack.c.l.b16 %v1697
        %v1720 = vunpack.c.h.b16 %v1697
        %v1721 = vunpack.c.l.b16 %v1698
        %v1722 = vunpack.c.h.b16 %v1698
        %v1723 = vpack.c.b16 %v1709, %v1707
        %v1724 = vpack.c.b16 %v1710, %v1708
        %v1725 = vpack.c.b16 %v1713, %v1711
        %v1726 = vpack.c.b16 %v1714, %v1712
        %v1727 = vpack.c.b16 %v1717, %v1715
        %v1728 = vpack.c.b16 %v1718, %v1716
        %v1729 = vpack.c.b16 %v1721, %v1719
        %v1730 = vpack.c.b16 %v1722, %v1720
        %1739 = vrot.lane.b32.xlu0 %v1168, 118
        %v1740 = vpop.permute.xlu0 %1739
        %1741 = vrot.lane.b32.xlu0 %v1169, 118
        %v1742 = vpop.permute.xlu0 %1741
        %1743 = vrot.lane.b32.xlu0 %v1170, 118
        %v1744 = vpop.permute.xlu0 %1743
        %1745 = vrot.lane.b32.xlu0 %v1171, 118
        %v1746 = vpop.permute.xlu0 %1745
        %1747 = vrot.lane.b32.xlu0 %v1172, 118
        %v1748 = vpop.permute.xlu0 %1747
        %1749 = vrot.lane.b32.xlu0 %v1173, 118
        %v1750 = vpop.permute.xlu0 %1749
        %1751 = vrot.lane.b32.xlu0 %v1174, 118
        %v1752 = vpop.permute.xlu0 %1751
        %1753 = vrot.lane.b32.xlu0 %v1175, 118
        %v1754 = vpop.permute.xlu0 %1753
        %1755 = vrot.lane.b32.xlu0 %v1185, 118
        %v1756 = vpop.permute.xlu0 %1755
        %1757 = vrot.lane.b32.xlu0 %v1187, 118
        %v1758 = vpop.permute.xlu0 %1757
        %1759 = vrot.lane.b32.xlu0 %v1189, 118
        %v1760 = vpop.permute.xlu0 %1759
        %1761 = vrot.lane.b32.xlu0 %v1191, 118
        %v1762 = vpop.permute.xlu0 %1761
        %1763 = vrot.lane.b32.xlu0 %v1193, 118
        %v1764 = vpop.permute.xlu0 %1763
        %1765 = vrot.lane.b32.xlu0 %v1195, 118
        %v1766 = vpop.permute.xlu0 %1765
        %1767 = vrot.lane.b32.xlu0 %v1197, 118
        %v1768 = vpop.permute.xlu0 %1767
        %1769 = vrot.lane.b32.xlu0 %v1199, 118
        %v1770 = vpop.permute.xlu0 %1769
        %1787 = vmatprep.subr.bf16.mxu0 0
        %1788 = vmatpush1.bf16.msra.mxu0 %v1740
        %1789 = vmatprep.subr.bf16.mxu0 0
        %1790 = vmatpush1.bf16.msra.mxu0 %v1742
        %1791 = vmatprep.subr.bf16.mxu0 0
        %1792 = vmatpush1.bf16.msra.mxu0 %v1744
        %1793 = vmatprep.subr.bf16.mxu0 0
        %1794 = vmatpush1.bf16.msra.mxu0 %v1746
        %1795 = vmatprep.subr.bf16.mxu0 0
        %1796 = vmatpush1.bf16.msra.mxu0 %v1748
        %1797 = vmatprep.subr.bf16.mxu0 0
        %1798 = vmatpush1.bf16.msra.mxu0 %v1750
        %1799 = vmatprep.subr.bf16.mxu0 0
        %1800 = vmatpush1.bf16.msra.mxu0 %v1752
        %1801 = vmatprep.subr.bf16.mxu0 0
        %1802 = vmatpush1.bf16.msra.mxu0 %v1754
        %1803 = vmatprep.subr.bf16.mxu0 0
        %1804 = vmatpush1.bf16.msra.mxu0 %v1756
        %1805 = vmatprep.subr.bf16.mxu0 0
        %1806 = vmatpush1.bf16.msra.mxu0 %v1758
        %1807 = vmatprep.subr.bf16.mxu0 0
        %1808 = vmatpush1.bf16.msra.mxu0 %v1760
        %1809 = vmatprep.subr.bf16.mxu0 0
        %1810 = vmatpush1.bf16.msra.mxu0 %v1762
        %1811 = vmatprep.subr.bf16.mxu0 0
        %1812 = vmatpush1.bf16.msra.mxu0 %v1764
        %1813 = vmatprep.subr.bf16.mxu0 0
        %1814 = vmatpush1.bf16.msra.mxu0 %v1766
        %1815 = vmatprep.subr.bf16.mxu0 0
        %1816 = vmatpush1.bf16.msra.mxu0 %v1768
        %1817 = vmatprep.subr.bf16.mxu0 0
        %1818 = vmatpush1.bf16.msra.mxu0 %v1770
        %1819 = vmatprep.mubr.bf16.mxu0 %v1724
        %1820 = vmatmul.mubr.bf16.gmra.mrb[0].mxu0 %v1723
        %v1821 = vpop.f32.mrb[0].mxu0
        %v1822 = vadd.f32 0.0, %v1821
        %v1823 = vpop.f32.mrb[0].mxu0
        %v1824 = vpop.f32.mrb[0].mxu0
        %v1825 = vadd.f32 0.0, %v1824
        %v1826 = vpop.f32.mrb[0].mxu0
        %1827 = vmatprep.mubr.bf16.mxu0 %v1726
        %1828 = vmatmul.mubr.bf16.gmra.mrb[0].mxu0 %v1725
        %v1829 = vpop.f32.mrb[0].mxu0
        %v1830 = vadd.f32 0.0, %v1829
        %v1831 = vpop.f32.mrb[0].mxu0
        %v1832 = vpop.f32.mrb[0].mxu0
        %v1833 = vadd.f32 0.0, %v1832
        %v1834 = vpop.f32.mrb[0].mxu0
        %1835 = vmatprep.mubr.bf16.mxu0 %v1728
        %1836 = vmatmul.mubr.bf16.gmra.mrb[0].mxu0 %v1727
        %v1837 = vpop.f32.mrb[0].mxu0
        %v1838 = vadd.f32 0.0, %v1837
        %v1839 = vpop.f32.mrb[0].mxu0
        %v1840 = vpop.f32.mrb[0].mxu0
        %v1841 = vadd.f32 0.0, %v1840
        %v1842 = vpop.f32.mrb[0].mxu0
        %1843 = vmatprep.mubr.bf16.mxu0 %v1730
        %1844 = vmatmul.mubr.bf16.gmra.mrb[0].mxu0 %v1729
        %v1845 = vpop.f32.mrb[0].mxu0
        %v1846 = vadd.f32 0.0, %v1845
        %v1847 = vpop.f32.mrb[0].mxu0
        %v1848 = vpop.f32.mrb[0].mxu0
        %v1849 = vadd.f32 0.0, %v1848
        %v1850 = vpop.f32.mrb[0].mxu0
        %1851 = vdwg.mxu0
        %v1852 = vadd.f32 %v1683, %v1822
        %v1853 = vadd.f32 %v1684, %v1825
        %v1854 = vadd.f32 %v1685, %v1830
        %v1855 = vadd.f32 %v1686, %v1833
        %v1856 = vadd.f32 %v1687, %v1838
        %v1857 = vadd.f32 %v1688, %v1841
        %v1858 = vadd.f32 %v1689, %v1846
        %v1859 = vadd.f32 %v1690, %v1849
        %v1860 = vld [vmem:[%s2 + $0x20] sm:$0xf]
        %v1861 = vld [vmem:[%s2 + $0x44] sm:$0xf]
        %v1862 = vld [vmem:[%s2 + $0x68] sm:$0xf]
        %v1863 = vld [vmem:[%s2 + $0x8c] sm:$0xf]
        %v1864 = vld [vmem:[%s2 + $0xb0] sm:$0xf]
        %v1865 = vld [vmem:[%s2 + $0xd4] sm:$0xf]
        %v1866 = vld [vmem:[%s2 + $0xf8] sm:$0xf]
        %v1867 = vld [vmem:[%s2 + $0x11c] sm:$0xf]
        %v1876 = vunpack.c.l.b16 %v1860
        %v1877 = vunpack.c.l.b16 %v1861
        %v1878 = vunpack.c.l.b16 %v1862
        %v1879 = vunpack.c.l.b16 %v1863
        %v1880 = vunpack.c.l.b16 %v1864
        %v1881 = vunpack.c.l.b16 %v1865
        %v1882 = vunpack.c.l.b16 %v1866
        %v1883 = vunpack.c.l.b16 %v1867
        %v1884 = vpack.c.b16 %v1877, %v1876
        %v1885 = vpack.c.b16 %v1879, %v1878
        %v1886 = vpack.c.b16 %v1881, %v1880
        %v1887 = vpack.c.b16 %v1883, %v1882
        %1892 = vrot.lane.b32.xlu0 %v1168, 116
        %v1893 = vpop.permute.xlu0 %1892
        %1894 = vrot.lane.b32.xlu0 %v1169, 116
        %v1895 = vpop.permute.xlu0 %1894
        %1896 = vrot.lane.b32.xlu0 %v1170, 116
        %v1897 = vpop.permute.xlu0 %1896
        %1898 = vrot.lane.b32.xlu0 %v1171, 116
        %v1899 = vpop.permute.xlu0 %1898
        %1900 = vrot.lane.b32.xlu0 %v1172, 116
        %v1901 = vpop.permute.xlu0 %1900
        %1902 = vrot.lane.b32.xlu0 %v1173, 116
        %v1903 = vpop.permute.xlu0 %1902
        %1904 = vrot.lane.b32.xlu0 %v1174, 116
        %v1905 = vpop.permute.xlu0 %1904
        %1906 = vrot.lane.b32.xlu0 %v1175, 116
        %v1907 = vpop.permute.xlu0 %1906
        %1916 = vmatprep.subr.bf16.mxu0 0
        %1917 = vmatpush1.bf16.msra.mxu0 %v1893
        %1918 = vmatprep.subr.bf16.mxu0 0
        %1919 = vmatpush1.bf16.msra.mxu0 %v1895
        %1920 = vmatprep.subr.bf16.mxu0 0
        %1921 = vmatpush1.bf16.msra.mxu0 %v1897
        %1922 = vmatprep.subr.bf16.mxu0 0
        %1923 = vmatpush1.bf16.msra.mxu0 %v1899
        %1924 = vmatprep.subr.bf16.mxu0 0
        %1925 = vmatpush1.bf16.msra.mxu0 %v1901
        %1926 = vmatprep.subr.bf16.mxu0 0
        %1927 = vmatpush1.bf16.msra.mxu0 %v1903
        %1928 = vmatprep.subr.bf16.mxu0 0
        %1929 = vmatpush1.bf16.msra.mxu0 %v1905
        %1930 = vmatprep.subr.bf16.mxu0 0
        %1931 = vmatpush1.bf16.msra.mxu0 %v1907
        %1932 = vmatprep.subr.bf16.mxu0 0
        %1933 = vmatpush1.bf16.msra.mxu0 0
        %1934 = vmatprep.subr.bf16.mxu0 0
        %1935 = vmatpush1.bf16.msra.mxu0 0
        %1936 = vmatprep.subr.bf16.mxu0 0
        %1937 = vmatpush1.bf16.msra.mxu0 0
        %1938 = vmatprep.subr.bf16.mxu0 0
        %1939 = vmatpush1.bf16.msra.mxu0 0
        %1940 = vmatprep.subr.bf16.mxu0 0
        %1941 = vmatpush1.bf16.msra.mxu0 0
        %1942 = vmatprep.subr.bf16.mxu0 0
        %1943 = vmatpush1.bf16.msra.mxu0 0
        %1944 = vmatprep.subr.bf16.mxu0 0
        %1945 = vmatpush1.bf16.msra.mxu0 0
        %1946 = vmatprep.subr.bf16.mxu0 0
        %1947 = vmatpush1.bf16.msra.mxu0 0
        %1948 = vmatprep.mubr.bf16.mxu0 0
        %1949 = vmatmul.mubr.bf16.gmra.mrb[0].mxu0 %v1884
        %v1950 = vpop.f32.mrb[0].mxu0
        %v1951 = vadd.f32 0.0, %v1950
        %v1952 = vpop.f32.mrb[0].mxu0
        %v1953 = vpop.f32.mrb[0].mxu0
        %v1954 = vadd.f32 0.0, %v1953
        %v1955 = vpop.f32.mrb[0].mxu0
        %1956 = vmatprep.mubr.bf16.mxu0 0
        %1957 = vmatmul.mubr.bf16.gmra.mrb[0].mxu0 %v1885
        %v1958 = vpop.f32.mrb[0].mxu0
        %v1959 = vadd.f32 0.0, %v1958
        %v1960 = vpop.f32.mrb[0].mxu0
        %v1961 = vpop.f32.mrb[0].mxu0
        %v1962 = vadd.f32 0.0, %v1961
        %v1963 = vpop.f32.mrb[0].mxu0
        %1964 = vmatprep.mubr.bf16.mxu0 0
        %1965 = vmatmul.mubr.bf16.gmra.mrb[0].mxu0 %v1886
        %v1966 = vpop.f32.mrb[0].mxu0
        %v1967 = vadd.f32 0.0, %v1966
        %v1968 = vpop.f32.mrb[0].mxu0
        %v1969 = vpop.f32.mrb[0].mxu0
        %v1970 = vadd.f32 0.0, %v1969
        %v1971 = vpop.f32.mrb[0].mxu0
        %1972 = vmatprep.mubr.bf16.mxu0 0
        %1973 = vmatmul.mubr.bf16.gmra.mrb[0].mxu0 %v1887
        %v1974 = vpop.f32.mrb[0].mxu0
        %v1975 = vadd.f32 0.0, %v1974
        %v1976 = vpop.f32.mrb[0].mxu0
        %v1977 = vpop.f32.mrb[0].mxu0
        %v1978 = vadd.f32 0.0, %v1977
        %v1979 = vpop.f32.mrb[0].mxu0
        %1980 = vdwg.mxu0
        %v1981 = vadd.f32 %v1852, %v1951
        %v1982 = vadd.f32 %v1853, %v1954
        %v1983 = vadd.f32 %v1854, %v1959
        %v1984 = vadd.f32 %v1855, %v1962
        %v1985 = vadd.f32 %v1856, %v1967
        %v1986 = vadd.f32 %v1857, %v1970
        %v1987 = vadd.f32 %v1858, %v1975
        %v1988 = vadd.f32 %v1859, %v1978
        %v1989 = vld [vmem:[%s7] sm:$0xff]
        %v1990 = vld [vmem:[%s7 + $0x8] sm:$0xff]
        %v1991 = vld [vmem:[%s7 + $0x10] sm:$0xff]
        %v1992 = vld [vmem:[%s7 + $0x18] sm:$0xff]
        %v1993 = vld [vmem:[%s7 + $0x20] sm:$0xff]
        %v1994 = vld [vmem:[%s7 + $0x28] sm:$0xff]
        %v1995 = vld [vmem:[%s7 + $0x30] sm:$0xff]
        %v1996 = vld [vmem:[%s7 + $0x38] sm:$0xff]
        %1998 = vset.pattern.permute.xlu0 0
        %1999 = vperm.xlu0 %1998, %v1989
        %v2000 = vpop.permute.xlu0 %1999
        %2003 = vset.pattern.permute.xlu0 0
        %2004 = vperm.xlu0 %2003, %v1990
        %v2005 = vpop.permute.xlu0 %2004
        %2008 = vset.pattern.permute.xlu0 0
        %2009 = vperm.xlu0 %2008, %v1991
        %v2010 = vpop.permute.xlu0 %2009
        %2013 = vset.pattern.permute.xlu0 0
        %2014 = vperm.xlu0 %2013, %v1992
        %v2015 = vpop.permute.xlu0 %2014
        %2018 = vset.pattern.permute.xlu0 0
        %2019 = vperm.xlu0 %2018, %v1993
        %v2020 = vpop.permute.xlu0 %2019
        %2023 = vset.pattern.permute.xlu0 0
        %2024 = vperm.xlu0 %2023, %v1994
        %v2025 = vpop.permute.xlu0 %2024
        %2028 = vset.pattern.permute.xlu0 0
        %2029 = vperm.xlu0 %2028, %v1995
        %v2030 = vpop.permute.xlu0 %2029
        %2033 = vset.pattern.permute.xlu0 0
        %2034 = vperm.xlu0 %2033, %v1996
        %v2035 = vpop.permute.xlu0 %2034
        %v2037 = vadd.f32 %v1981, %v2000
        %v2038 = vadd.f32 %v1982, %v2005
        %v2039 = vadd.f32 %v1983, %v2010
        %v2040 = vadd.f32 %v1984, %v2015
        %v2041 = vadd.f32 %v1985, %v2020
        %v2042 = vadd.f32 %v1986, %v2025
        %v2043 = vadd.f32 %v1987, %v2030
        %v2044 = vadd.f32 %v1988, %v2035
        %v2045 = vmax.f32 %v2037, 0.0
        %v2046 = vmax.f32 %v2038, 0.0
        %v2047 = vmax.f32 %v2039, 0.0
        %v2048 = vmax.f32 %v2040, 0.0
        %v2049 = vmax.f32 %v2041, 0.0
        %v2050 = vmax.f32 %v2042, 0.0
        %v2051 = vmax.f32 %v2043, 0.0
        %v2052 = vmax.f32 %v2044, 0.0
        %2061 = vrot.lane.b32.xlu0 %v2045, 8
        %v2062 = vpop.permute.xlu0 %2061
        %2063 = vrot.lane.b32.xlu0 %v2046, 8
        %v2064 = vpop.permute.xlu0 %2063
        %2065 = vrot.lane.b32.xlu0 %v2047, 8
        %v2066 = vpop.permute.xlu0 %2065
        %2067 = vrot.lane.b32.xlu0 %v2048, 8
        %v2068 = vpop.permute.xlu0 %2067
        %2069 = vrot.lane.b32.xlu0 %v2049, 8
        %v2070 = vpop.permute.xlu0 %2069
        %2071 = vrot.lane.b32.xlu0 %v2050, 8
        %v2072 = vpop.permute.xlu0 %2071
        %2073 = vrot.lane.b32.xlu0 %v2051, 8
        %v2074 = vpop.permute.xlu0 %2073
        %2075 = vrot.lane.b32.xlu0 %v2052, 8
        %v2076 = vpop.permute.xlu0 %2075
        %v2085 = vsel %vm1087, %v2062, 0.0
        %v2086 = vsel %vm1087, %v2064, 0.0
        %v2087 = vsel %vm1087, %v2066, 0.0
        %v2088 = vsel %vm1087, %v2068, 0.0
        %v2089 = vsel %vm1087, %v2070, 0.0
        %v2090 = vsel %vm1087, %v2072, 0.0
        %v2091 = vsel %vm1087, %v2074, 0.0
        %v2092 = vsel %vm1087, %v2076, 0.0
        %v2093 = vpack.c.bf16 %v2086, %v2085
        %v2094 = vpack.c.bf16 %v2088, %v2087
        %v2095 = vpack.c.bf16 %v2090, %v2089
        %v2096 = vpack.c.bf16 %v2092, %v2091
        %2101 = vrot.lane.b32.xlu0 %v2093, 127
        %v2102 = vpop.permute.xlu0 %2101
        %2103 = vrot.lane.b32.xlu0 %v2094, 127
        %v2104 = vpop.permute.xlu0 %2103
        %2105 = vrot.lane.b32.xlu0 %v2095, 127
        %v2106 = vpop.permute.xlu0 %2105
        %2107 = vrot.lane.b32.xlu0 %v2096, 127
        %v2108 = vpop.permute.xlu0 %2107
        %2109 = vrot.lane.b32.xlu0 %v2093, 126
        %v2110 = vpop.permute.xlu0 %2109
        %2111 = vrot.lane.b32.xlu0 %v2094, 126
        %v2112 = vpop.permute.xlu0 %2111
        %2113 = vrot.lane.b32.xlu0 %v2095, 126
        %v2114 = vpop.permute.xlu0 %2113
        %2115 = vrot.lane.b32.xlu0 %v2096, 126
        %v2116 = vpop.permute.xlu0 %2115
        %2117 = vrot.lane.b32.xlu0 %v2093, 125
        %v2118 = vpop.permute.xlu0 %2117
        %2119 = vrot.lane.b32.xlu0 %v2094, 125
        %v2120 = vpop.permute.xlu0 %2119
        %2121 = vrot.lane.b32.xlu0 %v2095, 125
        %v2122 = vpop.permute.xlu0 %2121
        %2123 = vrot.lane.b32.xlu0 %v2096, 125
        %v2124 = vpop.permute.xlu0 %2123
        %v2125 = vld [vmem:[%s3] sm:$0xff]
        %v2126 = vld [vmem:[%s3 + $0x14] sm:$0xff]
        %v2127 = vld [vmem:[%s3 + $0x28] sm:$0xff]
        %v2128 = vld [vmem:[%s3 + $0x3c] sm:$0xff]
        %v2129 = vld [vmem:[%s3 + $0x50] sm:$0xff]
        %v2130 = vld [vmem:[%s3 + $0x64] sm:$0xff]
        %v2131 = vld [vmem:[%s3 + $0x78] sm:$0xff]
        %v2132 = vld [vmem:[%s3 + $0x8c] sm:$0xff]
        %v2133 = vld [vmem:[%s3 + $0xa0] sm:$0xff]
        %v2134 = vld [vmem:[%s3 + $0xb4] sm:$0xff]
        %v2135 = vld [vmem:[%s3 + $0xc8] sm:$0xff]
        %v2136 = vld [vmem:[%s3 + $0xdc] sm:$0xff]
        %v2137 = vld [vmem:[%s3 + $0xf0] sm:$0xff]
        %v2138 = vld [vmem:[%s3 + $0x104] sm:$0xff]
        %v2139 = vld [vmem:[%s3 + $0x118] sm:$0xff]
        %v2140 = vld [vmem:[%s3 + $0x12c] sm:$0xff]
        %v2141 = vld [vmem:[%s3 + $0x8] sm:$0xff]
        %v2142 = vld [vmem:[%s3 + $0x1c] sm:$0xff]
        %v2143 = vld [vmem:[%s3 + $0x30] sm:$0xff]
        %v2144 = vld [vmem:[%s3 + $0x44] sm:$0xff]
        %v2145 = vld [vmem:[%s3 + $0x58] sm:$0xff]
        %v2146 = vld [vmem:[%s3 + $0x6c] sm:$0xff]
        %v2147 = vld [vmem:[%s3 + $0x80] sm:$0xff]
        %v2148 = vld [vmem:[%s3 + $0x94] sm:$0xff]
        %v2149 = vld [vmem:[%s3 + $0xa8] sm:$0xff]
        %v2150 = vld [vmem:[%s3 + $0xbc] sm:$0xff]
        %v2151 = vld [vmem:[%s3 + $0xd0] sm:$0xff]
        %v2152 = vld [vmem:[%s3 + $0xe4] sm:$0xff]
        %v2153 = vld [vmem:[%s3 + $0xf8] sm:$0xff]
        %v2154 = vld [vmem:[%s3 + $0x10c] sm:$0xff]
        %v2155 = vld [vmem:[%s3 + $0x120] sm:$0xff]
        %v2156 = vld [vmem:[%s3 + $0x134] sm:$0xff]
        %v2173 = vunpack.c.l.b16 %v2141
        %v2174 = vunpack.c.h.b16 %v2141
        %v2175 = vunpack.c.l.b16 %v2142
        %v2176 = vunpack.c.h.b16 %v2142
        %v2177 = vunpack.c.l.b16 %v2143
        %v2178 = vunpack.c.h.b16 %v2143
        %v2179 = vunpack.c.l.b16 %v2144
        %v2180 = vunpack.c.h.b16 %v2144
        %v2181 = vunpack.c.l.b16 %v2145
        %v2182 = vunpack.c.h.b16 %v2145
        %v2183 = vunpack.c.l.b16 %v2146
        %v2184 = vunpack.c.h.b16 %v2146
        %v2185 = vunpack.c.l.b16 %v2147
        %v2186 = vunpack.c.h.b16 %v2147
        %v2187 = vunpack.c.l.b16 %v2148
        %v2188 = vunpack.c.h.b16 %v2148
        %v2189 = vunpack.c.l.b16 %v2149
        %v2190 = vunpack.c.h.b16 %v2149
        %v2191 = vunpack.c.l.b16 %v2150
        %v2192 = vunpack.c.h.b16 %v2150
        %v2193 = vunpack.c.l.b16 %v2151
        %v2194 = vunpack.c.h.b16 %v2151
        %v2195 = vunpack.c.l.b16 %v2152
        %v2196 = vunpack.c.h.b16 %v2152
        %v2197 = vunpack.c.l.b16 %v2153
        %v2198 = vunpack.c.h.b16 %v2153
        %v2199 = vunpack.c.l.b16 %v2154
        %v2200 = vunpack.c.h.b16 %v2154
        %v2201 = vunpack.c.l.b16 %v2155
        %v2202 = vunpack.c.h.b16 %v2155
        %v2203 = vunpack.c.l.b16 %v2156
        %v2204 = vunpack.c.h.b16 %v2156
        %v2205 = vpack.c.b16 %v2175, %v2173
        %v2206 = vpack.c.b16 %v2176, %v2174
        %v2207 = vpack.c.b16 %v2179, %v2177
        %v2208 = vpack.c.b16 %v2180, %v2178
        %v2209 = vpack.c.b16 %v2183, %v2181
        %v2210 = vpack.c.b16 %v2184, %v2182
        %v2211 = vpack.c.b16 %v2187, %v2185
        %v2212 = vpack.c.b16 %v2188, %v2186
        %v2213 = vpack.c.b16 %v2191, %v2189
        %v2214 = vpack.c.b16 %v2192, %v2190
        %v2215 = vpack.c.b16 %v2195, %v2193
        %v2216 = vpack.c.b16 %v2196, %v2194
        %v2217 = vpack.c.b16 %v2199, %v2197
        %v2218 = vpack.c.b16 %v2200, %v2198
        %v2219 = vpack.c.b16 %v2203, %v2201
        %v2220 = vpack.c.b16 %v2204, %v2202
        %2237 = vrot.lane.b32.xlu0 %v2093, 116
        %v2238 = vpop.permute.xlu0 %2237
        %2239 = vrot.lane.b32.xlu0 %v2094, 116
        %v2240 = vpop.permute.xlu0 %2239
        %2241 = vrot.lane.b32.xlu0 %v2095, 116
        %v2242 = vpop.permute.xlu0 %2241
        %2243 = vrot.lane.b32.xlu0 %v2096, 116
        %v2244 = vpop.permute.xlu0 %2243
        %2245 = vrot.lane.b32.xlu0 %v2102, 116
        %v2246 = vpop.permute.xlu0 %2245
        %2247 = vrot.lane.b32.xlu0 %v2104, 116
        %v2248 = vpop.permute.xlu0 %2247
        %2249 = vrot.lane.b32.xlu0 %v2106, 116
        %v2250 = vpop.permute.xlu0 %2249
        %2251 = vrot.lane.b32.xlu0 %v2108, 116
        %v2252 = vpop.permute.xlu0 %2251
        %2253 = vrot.lane.b32.xlu0 %v2110, 116
        %v2254 = vpop.permute.xlu0 %2253
        %2255 = vrot.lane.b32.xlu0 %v2112, 116
        %v2256 = vpop.permute.xlu0 %2255
        %2257 = vrot.lane.b32.xlu0 %v2114, 116
        %v2258 = vpop.permute.xlu0 %2257
        %2259 = vrot.lane.b32.xlu0 %v2116, 116
        %v2260 = vpop.permute.xlu0 %2259
        %2261 = vrot.lane.b32.xlu0 %v2118, 116
        %v2262 = vpop.permute.xlu0 %2261
        %2263 = vrot.lane.b32.xlu0 %v2120, 116
        %v2264 = vpop.permute.xlu0 %2263
        %2265 = vrot.lane.b32.xlu0 %v2122, 116
        %v2266 = vpop.permute.xlu0 %2265
        %2267 = vrot.lane.b32.xlu0 %v2124, 116
        %v2268 = vpop.permute.xlu0 %2267
        %2285 = vmatprep.subr.bf16.mxu0 0
        %2286 = vmatpush1.bf16.msra.mxu0 %v2238
        %2287 = vmatprep.subr.bf16.mxu0 0
        %2288 = vmatpush1.bf16.msra.mxu0 %v2240
        %2289 = vmatprep.subr.bf16.mxu0 0
        %2290 = vmatpush1.bf16.msra.mxu0 %v2242
        %2291 = vmatprep.subr.bf16.mxu0 0
        %2292 = vmatpush1.bf16.msra.mxu0 %v2244
        %2293 = vmatprep.subr.bf16.mxu0 0
        %2294 = vmatpush1.bf16.msra.mxu0 %v2246
        %2295 = vmatprep.subr.bf16.mxu0 0
        %2296 = vmatpush1.bf16.msra.mxu0 %v2248
        %2297 = vmatprep.subr.bf16.mxu0 0
        %2298 = vmatpush1.bf16.msra.mxu0 %v2250
        %2299 = vmatprep.subr.bf16.mxu0 0
        %2300 = vmatpush1.bf16.msra.mxu0 %v2252
        %2301 = vmatprep.subr.bf16.mxu0 0
        %2302 = vmatpush1.bf16.msra.mxu0 %v2254
        %2303 = vmatprep.subr.bf16.mxu0 0
        %2304 = vmatpush1.bf16.msra.mxu0 %v2256
        %2305 = vmatprep.subr.bf16.mxu0 0
        %2306 = vmatpush1.bf16.msra.mxu0 %v2258
        %2307 = vmatprep.subr.bf16.mxu0 0
        %2308 = vmatpush1.bf16.msra.mxu0 %v2260
        %2309 = vmatprep.subr.bf16.mxu0 0
        %2310 = vmatpush1.bf16.msra.mxu0 %v2262
        %2311 = vmatprep.subr.bf16.mxu0 0
        %2312 = vmatpush1.bf16.msra.mxu0 %v2264
        %2313 = vmatprep.subr.bf16.mxu0 0
        %2314 = vmatpush1.bf16.msra.mxu0 %v2266
        %2315 = vmatprep.subr.bf16.mxu0 0
        %2316 = vmatpush1.bf16.msra.mxu0 %v2268
        %2317 = vmatprep.mubr.bf16.mxu0 %v2206
        %2318 = vmatmul.mubr.bf16.gmra.mrb[0].mxu0 %v2205
        %v2319 = vpop.f32.mrb[0].mxu0
        %v2320 = vadd.f32 0.0, %v2319
        %v2321 = vpop.f32.mrb[0].mxu0
        %v2322 = vpop.f32.mrb[0].mxu0
        %v2323 = vadd.f32 0.0, %v2322
        %v2324 = vpop.f32.mrb[0].mxu0
        %2325 = vmatprep.mubr.bf16.mxu0 %v2208
        %2326 = vmatmul.mubr.bf16.gmra.mrb[0].mxu0 %v2207
        %v2327 = vpop.f32.mrb[0].mxu0
        %v2328 = vadd.f32 0.0, %v2327
        %v2329 = vpop.f32.mrb[0].mxu0
        %v2330 = vpop.f32.mrb[0].mxu0
        %v2331 = vadd.f32 0.0, %v2330
        %v2332 = vpop.f32.mrb[0].mxu0
        %2333 = vmatprep.mubr.bf16.mxu0 %v2210
        %2334 = vmatmul.mubr.bf16.gmra.mrb[0].mxu0 %v2209
        %v2335 = vpop.f32.mrb[0].mxu0
        %v2336 = vadd.f32 0.0, %v2335
        %v2337 = vpop.f32.mrb[0].mxu0
        %v2338 = vpop.f32.mrb[0].mxu0
        %v2339 = vadd.f32 0.0, %v2338
        %v2340 = vpop.f32.mrb[0].mxu0
        %2341 = vmatprep.mubr.bf16.mxu0 %v2212
        %2342 = vmatmul.mubr.bf16.gmra.mrb[0].mxu0 %v2211
        %v2343 = vpop.f32.mrb[0].mxu0
        %v2344 = vadd.f32 0.0, %v2343
        %v2345 = vpop.f32.mrb[0].mxu0
        %v2346 = vpop.f32.mrb[0].mxu0
        %v2347 = vadd.f32 0.0, %v2346
        %v2348 = vpop.f32.mrb[0].mxu0
        %2349 = vmatprep.mubr.bf16.mxu0 %v2214
        %2350 = vmatmul.mubr.bf16.gmra.mrb[0].mxu0 %v2213
        %v2351 = vpop.f32.mrb[0].mxu0
        %v2352 = vadd.f32 0.0, %v2351
        %v2353 = vpop.f32.mrb[0].mxu0
        %v2354 = vpop.f32.mrb[0].mxu0
        %v2355 = vadd.f32 0.0, %v2354
        %v2356 = vpop.f32.mrb[0].mxu0
        %2357 = vmatprep.mubr.bf16.mxu0 %v2216
        %2358 = vmatmul.mubr.bf16.gmra.mrb[0].mxu0 %v2215
        %v2359 = vpop.f32.mrb[0].mxu0
        %v2360 = vadd.f32 0.0, %v2359
        %v2361 = vpop.f32.mrb[0].mxu0
        %v2362 = vpop.f32.mrb[0].mxu0
        %v2363 = vadd.f32 0.0, %v2362
        %v2364 = vpop.f32.mrb[0].mxu0
        %2365 = vmatprep.mubr.bf16.mxu0 %v2218
        %2366 = vmatmul.mubr.bf16.gmra.mrb[0].mxu0 %v2217
        %v2367 = vpop.f32.mrb[0].mxu0
        %v2368 = vadd.f32 0.0, %v2367
        %v2369 = vpop.f32.mrb[0].mxu0
        %v2370 = vpop.f32.mrb[0].mxu0
        %v2371 = vadd.f32 0.0, %v2370
        %v2372 = vpop.f32.mrb[0].mxu0
        %2373 = vmatprep.mubr.bf16.mxu0 %v2220
        %2374 = vmatmul.mubr.bf16.gmra.mrb[0].mxu0 %v2219
        %v2375 = vpop.f32.mrb[0].mxu0
        %v2376 = vadd.f32 0.0, %v2375
        %v2377 = vpop.f32.mrb[0].mxu0
        %v2378 = vpop.f32.mrb[0].mxu0
        %v2379 = vadd.f32 0.0, %v2378
        %v2380 = vpop.f32.mrb[0].mxu0
        %2381 = vdwg.mxu0
        %v2398 = vunpack.c.l.b16 %v2125
        %v2399 = vunpack.c.h.b16 %v2125
        %v2400 = vunpack.c.l.b16 %v2126
        %v2401 = vunpack.c.h.b16 %v2126
        %v2402 = vunpack.c.l.b16 %v2127
        %v2403 = vunpack.c.h.b16 %v2127
        %v2404 = vunpack.c.l.b16 %v2128
        %v2405 = vunpack.c.h.b16 %v2128
        %v2406 = vunpack.c.l.b16 %v2129
        %v2407 = vunpack.c.h.b16 %v2129
        %v2408 = vunpack.c.l.b16 %v2130
        %v2409 = vunpack.c.h.b16 %v2130
        %v2410 = vunpack.c.l.b16 %v2131
        %v2411 = vunpack.c.h.b16 %v2131
        %v2412 = vunpack.c.l.b16 %v2132
        %v2413 = vunpack.c.h.b16 %v2132
        %v2414 = vunpack.c.l.b16 %v2133
        %v2415 = vunpack.c.h.b16 %v2133
        %v2416 = vunpack.c.l.b16 %v2134
        %v2417 = vunpack.c.h.b16 %v2134
        %v2418 = vunpack.c.l.b16 %v2135
        %v2419 = vunpack.c.h.b16 %v2135
        %v2420 = vunpack.c.l.b16 %v2136
        %v2421 = vunpack.c.h.b16 %v2136
        %v2422 = vunpack.c.l.b16 %v2137
        %v2423 = vunpack.c.h.b16 %v2137
        %v2424 = vunpack.c.l.b16 %v2138
        %v2425 = vunpack.c.h.b16 %v2138
        %v2426 = vunpack.c.l.b16 %v2139
        %v2427 = vunpack.c.h.b16 %v2139
        %v2428 = vunpack.c.l.b16 %v2140
        %v2429 = vunpack.c.h.b16 %v2140
        %v2430 = vpack.c.b16 %v2400, %v2398
        %v2431 = vpack.c.b16 %v2401, %v2399
        %v2432 = vpack.c.b16 %v2404, %v2402
        %v2433 = vpack.c.b16 %v2405, %v2403
        %v2434 = vpack.c.b16 %v2408, %v2406
        %v2435 = vpack.c.b16 %v2409, %v2407
        %v2436 = vpack.c.b16 %v2412, %v2410
        %v2437 = vpack.c.b16 %v2413, %v2411
        %v2438 = vpack.c.b16 %v2416, %v2414
        %v2439 = vpack.c.b16 %v2417, %v2415
        %v2440 = vpack.c.b16 %v2420, %v2418
        %v2441 = vpack.c.b16 %v2421, %v2419
        %v2442 = vpack.c.b16 %v2424, %v2422
        %v2443 = vpack.c.b16 %v2425, %v2423
        %v2444 = vpack.c.b16 %v2428, %v2426
        %v2445 = vpack.c.b16 %v2429, %v2427
        %2462 = vrot.lane.b32.xlu0 %v2093, 120
        %v2463 = vpop.permute.xlu0 %2462
        %2464 = vrot.lane.b32.xlu0 %v2094, 120
        %v2465 = vpop.permute.xlu0 %2464
        %2466 = vrot.lane.b32.xlu0 %v2095, 120
        %v2467 = vpop.permute.xlu0 %2466
        %2468 = vrot.lane.b32.xlu0 %v2096, 120
        %v2469 = vpop.permute.xlu0 %2468
        %2470 = vrot.lane.b32.xlu0 %v2102, 120
        %v2471 = vpop.permute.xlu0 %2470
        %2472 = vrot.lane.b32.xlu0 %v2104, 120
        %v2473 = vpop.permute.xlu0 %2472
        %2474 = vrot.lane.b32.xlu0 %v2106, 120
        %v2475 = vpop.permute.xlu0 %2474
        %2476 = vrot.lane.b32.xlu0 %v2108, 120
        %v2477 = vpop.permute.xlu0 %2476
        %2478 = vrot.lane.b32.xlu0 %v2110, 120
        %v2479 = vpop.permute.xlu0 %2478
        %2480 = vrot.lane.b32.xlu0 %v2112, 120
        %v2481 = vpop.permute.xlu0 %2480
        %2482 = vrot.lane.b32.xlu0 %v2114, 120
        %v2483 = vpop.permute.xlu0 %2482
        %2484 = vrot.lane.b32.xlu0 %v2116, 120
        %v2485 = vpop.permute.xlu0 %2484
        %2486 = vrot.lane.b32.xlu0 %v2118, 120
        %v2487 = vpop.permute.xlu0 %2486
        %2488 = vrot.lane.b32.xlu0 %v2120, 120
        %v2489 = vpop.permute.xlu0 %2488
        %2490 = vrot.lane.b32.xlu0 %v2122, 120
        %v2491 = vpop.permute.xlu0 %2490
        %2492 = vrot.lane.b32.xlu0 %v2124, 120
        %v2493 = vpop.permute.xlu0 %2492
        %2510 = vmatprep.subr.bf16.mxu0 0
        %2511 = vmatpush1.bf16.msra.mxu0 %v2463
        %2512 = vmatprep.subr.bf16.mxu0 0
        %2513 = vmatpush1.bf16.msra.mxu0 %v2465
        %2514 = vmatprep.subr.bf16.mxu0 0
        %2515 = vmatpush1.bf16.msra.mxu0 %v2467
        %2516 = vmatprep.subr.bf16.mxu0 0
        %2517 = vmatpush1.bf16.msra.mxu0 %v2469
        %2518 = vmatprep.subr.bf16.mxu0 0
        %2519 = vmatpush1.bf16.msra.mxu0 %v2471
        %2520 = vmatprep.subr.bf16.mxu0 0
        %2521 = vmatpush1.bf16.msra.mxu0 %v2473
        %2522 = vmatprep.subr.bf16.mxu0 0
        %2523 = vmatpush1.bf16.msra.mxu0 %v2475
        %2524 = vmatprep.subr.bf16.mxu0 0
        %2525 = vmatpush1.bf16.msra.mxu0 %v2477
        %2526 = vmatprep.subr.bf16.mxu0 0
        %2527 = vmatpush1.bf16.msra.mxu0 %v2479
        %2528 = vmatprep.subr.bf16.mxu0 0
        %2529 = vmatpush1.bf16.msra.mxu0 %v2481
        %2530 = vmatprep.subr.bf16.mxu0 0
        %2531 = vmatpush1.bf16.msra.mxu0 %v2483
        %2532 = vmatprep.subr.bf16.mxu0 0
        %2533 = vmatpush1.bf16.msra.mxu0 %v2485
        %2534 = vmatprep.subr.bf16.mxu0 0
        %2535 = vmatpush1.bf16.msra.mxu0 %v2487
        %2536 = vmatprep.subr.bf16.mxu0 0
        %2537 = vmatpush1.bf16.msra.mxu0 %v2489
        %2538 = vmatprep.subr.bf16.mxu0 0
        %2539 = vmatpush1.bf16.msra.mxu0 %v2491
        %2540 = vmatprep.subr.bf16.mxu0 0
        %2541 = vmatpush1.bf16.msra.mxu0 %v2493
        %2542 = vmatprep.mubr.bf16.mxu0 %v2431
        %2543 = vmatmul.mubr.bf16.gmra.mrb[0].mxu0 %v2430
        %v2544 = vpop.f32.mrb[0].mxu0
        %v2545 = vadd.f32 %v2320, %v2544
        %v2546 = vpop.f32.mrb[0].mxu0
        %v2547 = vpop.f32.mrb[0].mxu0
        %v2548 = vadd.f32 %v2323, %v2547
        %v2549 = vpop.f32.mrb[0].mxu0
        %2550 = vmatprep.mubr.bf16.mxu0 %v2433
        %2551 = vmatmul.mubr.bf16.gmra.mrb[0].mxu0 %v2432
        %v2552 = vpop.f32.mrb[0].mxu0
        %v2553 = vadd.f32 %v2328, %v2552
        %v2554 = vpop.f32.mrb[0].mxu0
        %v2555 = vpop.f32.mrb[0].mxu0
        %v2556 = vadd.f32 %v2331, %v2555
        %v2557 = vpop.f32.mrb[0].mxu0
        %2558 = vmatprep.mubr.bf16.mxu0 %v2435
        %2559 = vmatmul.mubr.bf16.gmra.mrb[0].mxu0 %v2434
        %v2560 = vpop.f32.mrb[0].mxu0
        %v2561 = vadd.f32 %v2336, %v2560
        %v2562 = vpop.f32.mrb[0].mxu0
        %v2563 = vpop.f32.mrb[0].mxu0
        %v2564 = vadd.f32 %v2339, %v2563
        %v2565 = vpop.f32.mrb[0].mxu0
        %2566 = vmatprep.mubr.bf16.mxu0 %v2437
        %2567 = vmatmul.mubr.bf16.gmra.mrb[0].mxu0 %v2436
        %v2568 = vpop.f32.mrb[0].mxu0
        %v2569 = vadd.f32 %v2344, %v2568
        %v2570 = vpop.f32.mrb[0].mxu0
        %v2571 = vpop.f32.mrb[0].mxu0
        %v2572 = vadd.f32 %v2347, %v2571
        %v2573 = vpop.f32.mrb[0].mxu0
        %2574 = vmatprep.mubr.bf16.mxu0 %v2439
        %2575 = vmatmul.mubr.bf16.gmra.mrb[0].mxu0 %v2438
        %v2576 = vpop.f32.mrb[0].mxu0
        %v2577 = vadd.f32 %v2352, %v2576
        %v2578 = vpop.f32.mrb[0].mxu0
        %v2579 = vpop.f32.mrb[0].mxu0
        %v2580 = vadd.f32 %v2355, %v2579
        %v2581 = vpop.f32.mrb[0].mxu0
        %2582 = vmatprep.mubr.bf16.mxu0 %v2441
        %2583 = vmatmul.mubr.bf16.gmra.mrb[0].mxu0 %v2440
        %v2584 = vpop.f32.mrb[0].mxu0
        %v2585 = vadd.f32 %v2360, %v2584
        %v2586 = vpop.f32.mrb[0].mxu0
        %v2587 = vpop.f32.mrb[0].mxu0
        %v2588 = vadd.f32 %v2363, %v2587
        %v2589 = vpop.f32.mrb[0].mxu0
        %2590 = vmatprep.mubr.bf16.mxu0 %v2443
        %2591 = vmatmul.mubr.bf16.gmra.mrb[0].mxu0 %v2442
        %v2592 = vpop.f32.mrb[0].mxu0
        %v2593 = vadd.f32 %v2368, %v2592
        %v2594 = vpop.f32.mrb[0].mxu0
        %v2595 = vpop.f32.mrb[0].mxu0
        %v2596 = vadd.f32 %v2371, %v2595
        %v2597 = vpop.f32.mrb[0].mxu0
        %2598 = vmatprep.mubr.bf16.mxu0 %v2445
        %2599 = vmatmul.mubr.bf16.gmra.mrb[0].mxu0 %v2444
        %v2600 = vpop.f32.mrb[0].mxu0
        %v2601 = vadd.f32 %v2376, %v2600
        %v2602 = vpop.f32.mrb[0].mxu0
        %v2603 = vpop.f32.mrb[0].mxu0
        %v2604 = vadd.f32 %v2379, %v2603
        %v2605 = vpop.f32.mrb[0].mxu0
        %2606 = vdwg.mxu0
        %v2607 = vld [vmem:[%s3 + $0x10] sm:$0xf]
        %v2608 = vld [vmem:[%s3 + $0x24] sm:$0xf]
        %v2609 = vld [vmem:[%s3 + $0x38] sm:$0xf]
        %v2610 = vld [vmem:[%s3 + $0x4c] sm:$0xf]
        %v2611 = vld [vmem:[%s3 + $0x60] sm:$0xf]
        %v2612 = vld [vmem:[%s3 + $0x74] sm:$0xf]
        %v2613 = vld [vmem:[%s3 + $0x88] sm:$0xf]
        %v2614 = vld [vmem:[%s3 + $0x9c] sm:$0xf]
        %v2615 = vld [vmem:[%s3 + $0xb0] sm:$0xf]
        %v2616 = vld [vmem:[%s3 + $0xc4] sm:$0xf]
        %v2617 = vld [vmem:[%s3 + $0xd8] sm:$0xf]
        %v2618 = vld [vmem:[%s3 + $0xec] sm:$0xf]
        %v2619 = vld [vmem:[%s3 + $0x100] sm:$0xf]
        %v2620 = vld [vmem:[%s3 + $0x114] sm:$0xf]
        %v2621 = vld [vmem:[%s3 + $0x128] sm:$0xf]
        %v2622 = vld [vmem:[%s3 + $0x13c] sm:$0xf]
        %v2639 = vunpack.c.l.b16 %v2607
        %v2640 = vunpack.c.l.b16 %v2608
        %v2641 = vunpack.c.l.b16 %v2609
        %v2642 = vunpack.c.l.b16 %v2610
        %v2643 = vunpack.c.l.b16 %v2611
        %v2644 = vunpack.c.l.b16 %v2612
        %v2645 = vunpack.c.l.b16 %v2613
        %v2646 = vunpack.c.l.b16 %v2614
        %v2647 = vunpack.c.l.b16 %v2615
        %v2648 = vunpack.c.l.b16 %v2616
        %v2649 = vunpack.c.l.b16 %v2617
        %v2650 = vunpack.c.l.b16 %v2618
        %v2651 = vunpack.c.l.b16 %v2619
        %v2652 = vunpack.c.l.b16 %v2620
        %v2653 = vunpack.c.l.b16 %v2621
        %v2654 = vunpack.c.l.b16 %v2622
        %v2655 = vpack.c.b16 %v2640, %v2639
        %v2656 = vpack.c.b16 %v2642, %v2641
        %v2657 = vpack.c.b16 %v2644, %v2643
        %v2658 = vpack.c.b16 %v2646, %v2645
        %v2659 = vpack.c.b16 %v2648, %v2647
        %v2660 = vpack.c.b16 %v2650, %v2649
        %v2661 = vpack.c.b16 %v2652, %v2651
        %v2662 = vpack.c.b16 %v2654, %v2653
        %2663 = vrot.lane.b32.xlu0 %v2093, 112
        %v2664 = vpop.permute.xlu0 %2663
        %2665 = vrot.lane.b32.xlu0 %v2094, 112
        %v2666 = vpop.permute.xlu0 %2665
        %2667 = vrot.lane.b32.xlu0 %v2095, 112
        %v2668 = vpop.permute.xlu0 %2667
        %2669 = vrot.lane.b32.xlu0 %v2096, 112
        %v2670 = vpop.permute.xlu0 %2669
        %vm2675 = vcmask 523264
        %v2677 = vsel %vm2675, %v2655, 0
        %v2680 = vsel %vm2675, %v2656, 0
        %v2683 = vsel %vm2675, %v2657, 0
        %v2686 = vsel %vm2675, %v2658, 0
        %v2689 = vsel %vm2675, %v2659, 0
        %v2692 = vsel %vm2675, %v2660, 0
        %v2695 = vsel %vm2675, %v2661, 0
        %v2698 = vsel %vm2675, %v2662, 0
        %2700 = vmatprep.subr.bf16.mxu0 0
        %2701 = vmatpush1.bf16.msra.mxu0 %v2664
        %2702 = vmatprep.subr.bf16.mxu0 0
        %2703 = vmatpush1.bf16.msra.mxu0 %v2666
        %2704 = vmatprep.subr.bf16.mxu0 0
        %2705 = vmatpush1.bf16.msra.mxu0 %v2668
        %2706 = vmatprep.subr.bf16.mxu0 0
        %2707 = vmatpush1.bf16.msra.mxu0 %v2670
        %2708 = vmatprep.subr.bf16.mxu0 0
        %2709 = vmatpush1.bf16.msra.mxu0 0
        %2710 = vmatprep.subr.bf16.mxu0 0
        %2711 = vmatpush1.bf16.msra.mxu0 0
        %2712 = vmatprep.subr.bf16.mxu0 0
        %2713 = vmatpush1.bf16.msra.mxu0 0
        %2714 = vmatprep.subr.bf16.mxu0 0
        %2715 = vmatpush1.bf16.msra.mxu0 0
        %2716 = vmatprep.subr.bf16.mxu0 0
        %2717 = vmatpush1.bf16.msra.mxu0 0
        %2718 = vmatprep.subr.bf16.mxu0 0
        %2719 = vmatpush1.bf16.msra.mxu0 0
        %2720 = vmatprep.subr.bf16.mxu0 0
        %2721 = vmatpush1.bf16.msra.mxu0 0
        %2722 = vmatprep.subr.bf16.mxu0 0
        %2723 = vmatpush1.bf16.msra.mxu0 0
        %2724 = vmatprep.subr.bf16.mxu0 0
        %2725 = vmatpush1.bf16.msra.mxu0 0
        %2726 = vmatprep.subr.bf16.mxu0 0
        %2727 = vmatpush1.bf16.msra.mxu0 0
        %2728 = vmatprep.subr.bf16.mxu0 0
        %2729 = vmatpush1.bf16.msra.mxu0 0
        %2730 = vmatprep.subr.bf16.mxu0 0
        %2731 = vmatpush1.bf16.msra.mxu0 0
        %2732 = vmatprep.mubr.bf16.mxu0 0
        %2733 = vmatmul.mubr.bf16.gmra.mrb[0].mxu0 %v2677
        %v2734 = vpop.f32.mrb[0].mxu0
        %v2735 = vadd.f32 0.0, %v2734
        %v2736 = vpop.f32.mrb[0].mxu0
        %v2737 = vpop.f32.mrb[0].mxu0
        %v2738 = vadd.f32 0.0, %v2737
        %v2739 = vpop.f32.mrb[0].mxu0
        %2740 = vmatprep.mubr.bf16.mxu0 0
        %2741 = vmatmul.mubr.bf16.gmra.mrb[0].mxu0 %v2680
        %v2742 = vpop.f32.mrb[0].mxu0
        %v2743 = vadd.f32 0.0, %v2742
        %v2744 = vpop.f32.mrb[0].mxu0
        %v2745 = vpop.f32.mrb[0].mxu0
        %v2746 = vadd.f32 0.0, %v2745
        %v2747 = vpop.f32.mrb[0].mxu0
        %2748 = vmatprep.mubr.bf16.mxu0 0
        %2749 = vmatmul.mubr.bf16.gmra.mrb[0].mxu0 %v2683
        %v2750 = vpop.f32.mrb[0].mxu0
        %v2751 = vadd.f32 0.0, %v2750
        %v2752 = vpop.f32.mrb[0].mxu0
        %v2753 = vpop.f32.mrb[0].mxu0
        %v2754 = vadd.f32 0.0, %v2753
        %v2755 = vpop.f32.mrb[0].mxu0
        %2756 = vmatprep.mubr.bf16.mxu0 0
        %2757 = vmatmul.mubr.bf16.gmra.mrb[0].mxu0 %v2686
        %v2758 = vpop.f32.mrb[0].mxu0
        %v2759 = vadd.f32 0.0, %v2758
        %v2760 = vpop.f32.mrb[0].mxu0
        %v2761 = vpop.f32.mrb[0].mxu0
        %v2762 = vadd.f32 0.0, %v2761
        %v2763 = vpop.f32.mrb[0].mxu0
        %2764 = vmatprep.mubr.bf16.mxu0 0
        %2765 = vmatmul.mubr.bf16.gmra.mrb[0].mxu0 %v2689
        %v2766 = vpop.f32.mrb[0].mxu0
        %v2767 = vadd.f32 0.0, %v2766
        %v2768 = vpop.f32.mrb[0].mxu0
        %v2769 = vpop.f32.mrb[0].mxu0
        %v2770 = vadd.f32 0.0, %v2769
        %v2771 = vpop.f32.mrb[0].mxu0
        %2772 = vmatprep.mubr.bf16.mxu0 0
        %2773 = vmatmul.mubr.bf16.gmra.mrb[0].mxu0 %v2692
        %v2774 = vpop.f32.mrb[0].mxu0
        %v2775 = vadd.f32 0.0, %v2774
        %v2776 = vpop.f32.mrb[0].mxu0
        %v2777 = vpop.f32.mrb[0].mxu0
        %v2778 = vadd.f32 0.0, %v2777
        %v2779 = vpop.f32.mrb[0].mxu0
        %2780 = vmatprep.mubr.bf16.mxu0 0
        %2781 = vmatmul.mubr.bf16.gmra.mrb[0].mxu0 %v2695
        %v2782 = vpop.f32.mrb[0].mxu0
        %v2783 = vadd.f32 0.0, %v2782
        %v2784 = vpop.f32.mrb[0].mxu0
        %v2785 = vpop.f32.mrb[0].mxu0
        %v2786 = vadd.f32 0.0, %v2785
        %v2787 = vpop.f32.mrb[0].mxu0
        %2788 = vmatprep.mubr.bf16.mxu0 0
        %2789 = vmatmul.mubr.bf16.gmra.mrb[0].mxu0 %v2698
        %v2790 = vpop.f32.mrb[0].mxu0
        %v2791 = vadd.f32 0.0, %v2790
        %v2792 = vpop.f32.mrb[0].mxu0
        %v2793 = vpop.f32.mrb[0].mxu0
        %v2794 = vadd.f32 0.0, %v2793
        %v2795 = vpop.f32.mrb[0].mxu0
        %2796 = vdwg.mxu0
        %v2797 = vadd.f32 %v2545, %v2735
        %v2798 = vadd.f32 %v2548, %v2738
        %v2799 = vadd.f32 %v2553, %v2743
        %v2800 = vadd.f32 %v2556, %v2746
        %v2801 = vadd.f32 %v2561, %v2751
        %v2802 = vadd.f32 %v2564, %v2754
        %v2803 = vadd.f32 %v2569, %v2759
        %v2804 = vadd.f32 %v2572, %v2762
        %v2805 = vadd.f32 %v2577, %v2767
        %v2806 = vadd.f32 %v2580, %v2770
        %v2807 = vadd.f32 %v2585, %v2775
        %v2808 = vadd.f32 %v2588, %v2778
        %v2809 = vadd.f32 %v2593, %v2783
        %v2810 = vadd.f32 %v2596, %v2786
        %v2811 = vadd.f32 %v2601, %v2791
        %v2812 = vadd.f32 %v2604, %v2794
        %v2813 = vld [vmem:[%s8] sm:$0xff]
        %v2814 = vld [vmem:[%s8 + $0x8] sm:$0xff]
        %v2815 = vld [vmem:[%s8 + $0x10] sm:$0xff]
        %v2816 = vld [vmem:[%s8 + $0x18] sm:$0xff]
        %v2817 = vld [vmem:[%s8 + $0x20] sm:$0xff]
        %v2818 = vld [vmem:[%s8 + $0x28] sm:$0xff]
        %v2819 = vld [vmem:[%s8 + $0x30] sm:$0xff]
        %v2820 = vld [vmem:[%s8 + $0x38] sm:$0xff]
        %v2821 = vld [vmem:[%s8 + $0x40] sm:$0xff]
        %v2822 = vld [vmem:[%s8 + $0x48] sm:$0xff]
        %v2823 = vld [vmem:[%s8 + $0x50] sm:$0xff]
        %v2824 = vld [vmem:[%s8 + $0x58] sm:$0xff]
        %v2825 = vld [vmem:[%s8 + $0x60] sm:$0xff]
        %v2826 = vld [vmem:[%s8 + $0x68] sm:$0xff]
        %v2827 = vld [vmem:[%s8 + $0x70] sm:$0xff]
        %v2828 = vld [vmem:[%s8 + $0x78] sm:$0xff]
        %2830 = vset.pattern.permute.xlu0 0
        %2831 = vperm.xlu0 %2830, %v2813
        %v2832 = vpop.permute.xlu0 %2831
        %2835 = vset.pattern.permute.xlu0 0
        %2836 = vperm.xlu0 %2835, %v2814
        %v2837 = vpop.permute.xlu0 %2836
        %2840 = vset.pattern.permute.xlu0 0
        %2841 = vperm.xlu0 %2840, %v2815
        %v2842 = vpop.permute.xlu0 %2841
        %2845 = vset.pattern.permute.xlu0 0
        %2846 = vperm.xlu0 %2845, %v2816
        %v2847 = vpop.permute.xlu0 %2846
        %2850 = vset.pattern.permute.xlu0 0
        %2851 = vperm.xlu0 %2850, %v2817
        %v2852 = vpop.permute.xlu0 %2851
        %2855 = vset.pattern.permute.xlu0 0
        %2856 = vperm.xlu0 %2855, %v2818
        %v2857 = vpop.permute.xlu0 %2856
        %2860 = vset.pattern.permute.xlu0 0
        %2861 = vperm.xlu0 %2860, %v2819
        %v2862 = vpop.permute.xlu0 %2861
        %2865 = vset.pattern.permute.xlu0 0
        %2866 = vperm.xlu0 %2865, %v2820
        %v2867 = vpop.permute.xlu0 %2866
        %2870 = vset.pattern.permute.xlu0 0
        %2871 = vperm.xlu0 %2870, %v2821
        %v2872 = vpop.permute.xlu0 %2871
        %2875 = vset.pattern.permute.xlu0 0
        %2876 = vperm.xlu0 %2875, %v2822
        %v2877 = vpop.permute.xlu0 %2876
        %2880 = vset.pattern.permute.xlu0 0
        %2881 = vperm.xlu0 %2880, %v2823
        %v2882 = vpop.permute.xlu0 %2881
        %2885 = vset.pattern.permute.xlu0 0
        %2886 = vperm.xlu0 %2885, %v2824
        %v2887 = vpop.permute.xlu0 %2886
        %2890 = vset.pattern.permute.xlu0 0
        %2891 = vperm.xlu0 %2890, %v2825
        %v2892 = vpop.permute.xlu0 %2891
        %2895 = vset.pattern.permute.xlu0 0
        %2896 = vperm.xlu0 %2895, %v2826
        %v2897 = vpop.permute.xlu0 %2896
        %2900 = vset.pattern.permute.xlu0 0
        %2901 = vperm.xlu0 %2900, %v2827
        %v2902 = vpop.permute.xlu0 %2901
        %2905 = vset.pattern.permute.xlu0 0
        %2906 = vperm.xlu0 %2905, %v2828
        %v2907 = vpop.permute.xlu0 %2906
        %v2909 = vadd.f32 %v2797, %v2832
        %v2910 = vadd.f32 %v2798, %v2837
        %v2911 = vadd.f32 %v2799, %v2842
        %v2912 = vadd.f32 %v2800, %v2847
        %v2913 = vadd.f32 %v2801, %v2852
        %v2914 = vadd.f32 %v2802, %v2857
        %v2915 = vadd.f32 %v2803, %v2862
        %v2916 = vadd.f32 %v2804, %v2867
        %v2917 = vadd.f32 %v2805, %v2872
        %v2918 = vadd.f32 %v2806, %v2877
        %v2919 = vadd.f32 %v2807, %v2882
        %v2920 = vadd.f32 %v2808, %v2887
        %v2921 = vadd.f32 %v2809, %v2892
        %v2922 = vadd.f32 %v2810, %v2897
        %v2923 = vadd.f32 %v2811, %v2902
        %v2924 = vadd.f32 %v2812, %v2907
        %v2925 = vmax.f32 %v2909, 0.0
        %v2926 = vmax.f32 %v2910, 0.0
        %v2927 = vmax.f32 %v2911, 0.0
        %v2928 = vmax.f32 %v2912, 0.0
        %v2929 = vmax.f32 %v2913, 0.0
        %v2930 = vmax.f32 %v2914, 0.0
        %v2931 = vmax.f32 %v2915, 0.0
        %v2932 = vmax.f32 %v2916, 0.0
        %v2933 = vmax.f32 %v2917, 0.0
        %v2934 = vmax.f32 %v2918, 0.0
        %v2935 = vmax.f32 %v2919, 0.0
        %v2936 = vmax.f32 %v2920, 0.0
        %v2937 = vmax.f32 %v2921, 0.0
        %v2938 = vmax.f32 %v2922, 0.0
        %v2939 = vmax.f32 %v2923, 0.0
        %v2940 = vmax.f32 %v2924, 0.0
        %2957 = vrot.lane.b32.xlu0 %v2925, 12
        %v2958 = vpop.permute.xlu0 %2957
        %2959 = vrot.lane.b32.xlu0 %v2926, 12
        %v2960 = vpop.permute.xlu0 %2959
        %2961 = vrot.lane.b32.xlu0 %v2927, 12
        %v2962 = vpop.permute.xlu0 %2961
        %2963 = vrot.lane.b32.xlu0 %v2928, 12
        %v2964 = vpop.permute.xlu0 %2963
        %2965 = vrot.lane.b32.xlu0 %v2929, 12
        %v2966 = vpop.permute.xlu0 %2965
        %2967 = vrot.lane.b32.xlu0 %v2930, 12
        %v2968 = vpop.permute.xlu0 %2967
        %2969 = vrot.lane.b32.xlu0 %v2931, 12
        %v2970 = vpop.permute.xlu0 %2969
        %2971 = vrot.lane.b32.xlu0 %v2932, 12
        %v2972 = vpop.permute.xlu0 %2971
        %2973 = vrot.lane.b32.xlu0 %v2933, 12
        %v2974 = vpop.permute.xlu0 %2973
        %2975 = vrot.lane.b32.xlu0 %v2934, 12
        %v2976 = vpop.permute.xlu0 %2975
        %2977 = vrot.lane.b32.xlu0 %v2935, 12
        %v2978 = vpop.permute.xlu0 %2977
        %2979 = vrot.lane.b32.xlu0 %v2936, 12
        %v2980 = vpop.permute.xlu0 %2979
        %2981 = vrot.lane.b32.xlu0 %v2937, 12
        %v2982 = vpop.permute.xlu0 %2981
        %2983 = vrot.lane.b32.xlu0 %v2938, 12
        %v2984 = vpop.permute.xlu0 %2983
        %2985 = vrot.lane.b32.xlu0 %v2939, 12
        %v2986 = vpop.permute.xlu0 %2985
        %2987 = vrot.lane.b32.xlu0 %v2940, 12
        %v2988 = vpop.permute.xlu0 %2987
        %v3005 = vsel %vm1087, %v2958, 0.0
        %v3006 = vsel %vm1087, %v2960, 0.0
        %v3007 = vsel %vm1087, %v2962, 0.0
        %v3008 = vsel %vm1087, %v2964, 0.0
        %v3009 = vsel %vm1087, %v2966, 0.0
        %v3010 = vsel %vm1087, %v2968, 0.0
        %v3011 = vsel %vm1087, %v2970, 0.0
        %v3012 = vsel %vm1087, %v2972, 0.0
        %v3013 = vsel %vm1087, %v2974, 0.0
        %v3014 = vsel %vm1087, %v2976, 0.0
        %v3015 = vsel %vm1087, %v2978, 0.0
        %v3016 = vsel %vm1087, %v2980, 0.0
        %v3017 = vsel %vm1087, %v2982, 0.0
        %v3018 = vsel %vm1087, %v2984, 0.0
        %v3019 = vsel %vm1087, %v2986, 0.0
        %v3020 = vsel %vm1087, %v2988, 0.0
        %v3021 = vpack.c.bf16 %v3006, %v3005
        %v3022 = vpack.c.bf16 %v3008, %v3007
        %v3023 = vpack.c.bf16 %v3010, %v3009
        %v3024 = vpack.c.bf16 %v3012, %v3011
        %v3025 = vpack.c.bf16 %v3014, %v3013
        %v3026 = vpack.c.bf16 %v3016, %v3015
        %v3027 = vpack.c.bf16 %v3018, %v3017
        %v3028 = vpack.c.bf16 %v3020, %v3019
        %3037 = vrot.lane.b32.xlu0 %v3021, 127
        %v3038 = vpop.permute.xlu0 %3037
        %3039 = vrot.lane.b32.xlu0 %v3022, 127
        %v3040 = vpop.permute.xlu0 %3039
        %3041 = vrot.lane.b32.xlu0 %v3023, 127
        %v3042 = vpop.permute.xlu0 %3041
        %3043 = vrot.lane.b32.xlu0 %v3024, 127
        %v3044 = vpop.permute.xlu0 %3043
        %3045 = vrot.lane.b32.xlu0 %v3025, 127
        %v3046 = vpop.permute.xlu0 %3045
        %3047 = vrot.lane.b32.xlu0 %v3026, 127
        %v3048 = vpop.permute.xlu0 %3047
        %3049 = vrot.lane.b32.xlu0 %v3027, 127
        %v3050 = vpop.permute.xlu0 %3049
        %3051 = vrot.lane.b32.xlu0 %v3028, 127
        %v3052 = vpop.permute.xlu0 %3051
        %v3053 = vld [vmem:[%s4] sm:$0xff]
        %v3054 = vld [vmem:[%s4 + $0x24] sm:$0xff]
        %v3055 = vld [vmem:[%s4 + $0x48] sm:$0xff]
        %v3056 = vld [vmem:[%s4 + $0x6c] sm:$0xff]
        %v3057 = vld [vmem:[%s4 + $0x90] sm:$0xff]
        %v3058 = vld [vmem:[%s4 + $0xb4] sm:$0xff]
        %v3059 = vld [vmem:[%s4 + $0xd8] sm:$0xff]
        %v3060 = vld [vmem:[%s4 + $0xfc] sm:$0xff]
        %v3061 = vld [vmem:[%s4 + $0x8] sm:$0xff]
        %v3062 = vld [vmem:[%s4 + $0x2c] sm:$0xff]
        %v3063 = vld [vmem:[%s4 + $0x50] sm:$0xff]
        %v3064 = vld [vmem:[%s4 + $0x74] sm:$0xff]
        %v3065 = vld [vmem:[%s4 + $0x98] sm:$0xff]
        %v3066 = vld [vmem:[%s4 + $0xbc] sm:$0xff]
        %v3067 = vld [vmem:[%s4 + $0xe0] sm:$0xff]
        %v3068 = vld [vmem:[%s4 + $0x104] sm:$0xff]
        %v3077 = vunpack.c.l.b16 %v3061
        %v3078 = vunpack.c.h.b16 %v3061
        %v3079 = vunpack.c.l.b16 %v3062
        %v3080 = vunpack.c.h.b16 %v3062
        %v3081 = vunpack.c.l.b16 %v3063
        %v3082 = vunpack.c.h.b16 %v3063
        %v3083 = vunpack.c.l.b16 %v3064
        %v3084 = vunpack.c.h.b16 %v3064
        %v3085 = vunpack.c.l.b16 %v3065
        %v3086 = vunpack.c.h.b16 %v3065
        %v3087 = vunpack.c.l.b16 %v3066
        %v3088 = vunpack.c.h.b16 %v3066
        %v3089 = vunpack.c.l.b16 %v3067
        %v3090 = vunpack.c.h.b16 %v3067
        %v3091 = vunpack.c.l.b16 %v3068
        %v3092 = vunpack.c.h.b16 %v3068
        %v3093 = vpack.c.b16 %v3079, %v3077
        %v3094 = vpack.c.b16 %v3080, %v3078
        %v3095 = vpack.c.b16 %v3083, %v3081
        %v3096 = vpack.c.b16 %v3084, %v3082
        %v3097 = vpack.c.b16 %v3087, %v3085
        %v3098 = vpack.c.b16 %v3088, %v3086
        %v3099 = vpack.c.b16 %v3091, %v3089
        %v3100 = vpack.c.b16 %v3092, %v3090
        %3109 = vrot.lane.b32.xlu0 %v3021, 114
        %v3110 = vpop.permute.xlu0 %3109
        %3111 = vrot.lane.b32.xlu0 %v3022, 114
        %v3112 = vpop.permute.xlu0 %3111
        %3113 = vrot.lane.b32.xlu0 %v3023, 114
        %v3114 = vpop.permute.xlu0 %3113
        %3115 = vrot.lane.b32.xlu0 %v3024, 114
        %v3116 = vpop.permute.xlu0 %3115
        %3117 = vrot.lane.b32.xlu0 %v3025, 114
        %v3118 = vpop.permute.xlu0 %3117
        %3119 = vrot.lane.b32.xlu0 %v3026, 114
        %v3120 = vpop.permute.xlu0 %3119
        %3121 = vrot.lane.b32.xlu0 %v3027, 114
        %v3122 = vpop.permute.xlu0 %3121
        %3123 = vrot.lane.b32.xlu0 %v3028, 114
        %v3124 = vpop.permute.xlu0 %3123
        %3125 = vrot.lane.b32.xlu0 %v3038, 114
        %v3126 = vpop.permute.xlu0 %3125
        %3127 = vrot.lane.b32.xlu0 %v3040, 114
        %v3128 = vpop.permute.xlu0 %3127
        %3129 = vrot.lane.b32.xlu0 %v3042, 114
        %v3130 = vpop.permute.xlu0 %3129
        %3131 = vrot.lane.b32.xlu0 %v3044, 114
        %v3132 = vpop.permute.xlu0 %3131
        %3133 = vrot.lane.b32.xlu0 %v3046, 114
        %v3134 = vpop.permute.xlu0 %3133
        %3135 = vrot.lane.b32.xlu0 %v3048, 114
        %v3136 = vpop.permute.xlu0 %3135
        %3137 = vrot.lane.b32.xlu0 %v3050, 114
        %v3138 = vpop.permute.xlu0 %3137
        %3139 = vrot.lane.b32.xlu0 %v3052, 114
        %v3140 = vpop.permute.xlu0 %3139
        %3157 = vmatprep.subr.bf16.mxu0 0
        %3158 = vmatpush1.bf16.msra.mxu0 %v3110
        %3159 = vmatprep.subr.bf16.mxu0 0
        %3160 = vmatpush1.bf16.msra.mxu0 %v3112
        %3161 = vmatprep.subr.bf16.mxu0 0
        %3162 = vmatpush1.bf16.msra.mxu0 %v3114
        %3163 = vmatprep.subr.bf16.mxu0 0
        %3164 = vmatpush1.bf16.msra.mxu0 %v3116
        %3165 = vmatprep.subr.bf16.mxu0 0
        %3166 = vmatpush1.bf16.msra.mxu0 %v3118
        %3167 = vmatprep.subr.bf16.mxu0 0
        %3168 = vmatpush1.bf16.msra.mxu0 %v3120
        %3169 = vmatprep.subr.bf16.mxu0 0
        %3170 = vmatpush1.bf16.msra.mxu0 %v3122
        %3171 = vmatprep.subr.bf16.mxu0 0
        %3172 = vmatpush1.bf16.msra.mxu0 %v3124
        %3173 = vmatprep.subr.bf16.mxu0 0
        %3174 = vmatpush1.bf16.msra.mxu0 %v3126
        %3175 = vmatprep.subr.bf16.mxu0 0
        %3176 = vmatpush1.bf16.msra.mxu0 %v3128
        %3177 = vmatprep.subr.bf16.mxu0 0
        %3178 = vmatpush1.bf16.msra.mxu0 %v3130
        %3179 = vmatprep.subr.bf16.mxu0 0
        %3180 = vmatpush1.bf16.msra.mxu0 %v3132
        %3181 = vmatprep.subr.bf16.mxu0 0
        %3182 = vmatpush1.bf16.msra.mxu0 %v3134
        %3183 = vmatprep.subr.bf16.mxu0 0
        %3184 = vmatpush1.bf16.msra.mxu0 %v3136
        %3185 = vmatprep.subr.bf16.mxu0 0
        %3186 = vmatpush1.bf16.msra.mxu0 %v3138
        %3187 = vmatprep.subr.bf16.mxu0 0
        %3188 = vmatpush1.bf16.msra.mxu0 %v3140
        %3189 = vmatprep.mubr.bf16.mxu0 %v3094
        %3190 = vmatmul.mubr.bf16.gmra.mrb[0].mxu0 %v3093
        %v3191 = vpop.f32.mrb[0].mxu0
        %v3192 = vadd.f32 0.0, %v3191
        %v3193 = vpop.f32.mrb[0].mxu0
        %v3194 = vpop.f32.mrb[0].mxu0
        %v3195 = vadd.f32 0.0, %v3194
        %v3196 = vpop.f32.mrb[0].mxu0
        %3197 = vmatprep.mubr.bf16.mxu0 %v3096
        %3198 = vmatmul.mubr.bf16.gmra.mrb[0].mxu0 %v3095
        %v3199 = vpop.f32.mrb[0].mxu0
        %v3200 = vadd.f32 0.0, %v3199
        %v3201 = vpop.f32.mrb[0].mxu0
        %v3202 = vpop.f32.mrb[0].mxu0
        %v3203 = vadd.f32 0.0, %v3202
        %v3204 = vpop.f32.mrb[0].mxu0
        %3205 = vmatprep.mubr.bf16.mxu0 %v3098
        %3206 = vmatmul.mubr.bf16.gmra.mrb[0].mxu0 %v3097
        %v3207 = vpop.f32.mrb[0].mxu0
        %v3208 = vadd.f32 0.0, %v3207
        %v3209 = vpop.f32.mrb[0].mxu0
        %v3210 = vpop.f32.mrb[0].mxu0
        %v3211 = vadd.f32 0.0, %v3210
        %v3212 = vpop.f32.mrb[0].mxu0
        %3213 = vmatprep.mubr.bf16.mxu0 %v3100
        %3214 = vmatmul.mubr.bf16.gmra.mrb[0].mxu0 %v3099
        %v3215 = vpop.f32.mrb[0].mxu0
        %v3216 = vadd.f32 0.0, %v3215
        %v3217 = vpop.f32.mrb[0].mxu0
        %v3218 = vpop.f32.mrb[0].mxu0
        %v3219 = vadd.f32 0.0, %v3218
        %v3220 = vpop.f32.mrb[0].mxu0
        %3221 = vdwg.mxu0
        %v3230 = vunpack.c.l.b16 %v3053
        %v3231 = vunpack.c.h.b16 %v3053
        %v3232 = vunpack.c.l.b16 %v3054
        %v3233 = vunpack.c.h.b16 %v3054
        %v3234 = vunpack.c.l.b16 %v3055
        %v3235 = vunpack.c.h.b16 %v3055
        %v3236 = vunpack.c.l.b16 %v3056
        %v3237 = vunpack.c.h.b16 %v3056
        %v3238 = vunpack.c.l.b16 %v3057
        %v3239 = vunpack.c.h.b16 %v3057
        %v3240 = vunpack.c.l.b16 %v3058
        %v3241 = vunpack.c.h.b16 %v3058
        %v3242 = vunpack.c.l.b16 %v3059
        %v3243 = vunpack.c.h.b16 %v3059
        %v3244 = vunpack.c.l.b16 %v3060
        %v3245 = vunpack.c.h.b16 %v3060
        %v3246 = vpack.c.b16 %v3232, %v3230
        %v3247 = vpack.c.b16 %v3233, %v3231
        %v3248 = vpack.c.b16 %v3236, %v3234
        %v3249 = vpack.c.b16 %v3237, %v3235
        %v3250 = vpack.c.b16 %v3240, %v3238
        %v3251 = vpack.c.b16 %v3241, %v3239
        %v3252 = vpack.c.b16 %v3244, %v3242
        %v3253 = vpack.c.b16 %v3245, %v3243
        %3262 = vrot.lane.b32.xlu0 %v3021, 116
        %v3263 = vpop.permute.xlu0 %3262
        %3264 = vrot.lane.b32.xlu0 %v3022, 116
        %v3265 = vpop.permute.xlu0 %3264
        %3266 = vrot.lane.b32.xlu0 %v3023, 116
        %v3267 = vpop.permute.xlu0 %3266
        %3268 = vrot.lane.b32.xlu0 %v3024, 116
        %v3269 = vpop.permute.xlu0 %3268
        %3270 = vrot.lane.b32.xlu0 %v3025, 116
        %v3271 = vpop.permute.xlu0 %3270
        %3272 = vrot.lane.b32.xlu0 %v3026, 116
        %v3273 = vpop.permute.xlu0 %3272
        %3274 = vrot.lane.b32.xlu0 %v3027, 116
        %v3275 = vpop.permute.xlu0 %3274
        %3276 = vrot.lane.b32.xlu0 %v3028, 116
        %v3277 = vpop.permute.xlu0 %3276
        %3278 = vrot.lane.b32.xlu0 %v3038, 116
        %v3279 = vpop.permute.xlu0 %3278
        %3280 = vrot.lane.b32.xlu0 %v3040, 116
        %v3281 = vpop.permute.xlu0 %3280
        %3282 = vrot.lane.b32.xlu0 %v3042, 116
        %v3283 = vpop.permute.xlu0 %3282
        %3284 = vrot.lane.b32.xlu0 %v3044, 116
        %v3285 = vpop.permute.xlu0 %3284
        %3286 = vrot.lane.b32.xlu0 %v3046, 116
        %v3287 = vpop.permute.xlu0 %3286
        %3288 = vrot.lane.b32.xlu0 %v3048, 116
        %v3289 = vpop.permute.xlu0 %3288
        %3290 = vrot.lane.b32.xlu0 %v3050, 116
        %v3291 = vpop.permute.xlu0 %3290
        %3292 = vrot.lane.b32.xlu0 %v3052, 116
        %v3293 = vpop.permute.xlu0 %3292
        %3310 = vmatprep.subr.bf16.mxu0 0
        %3311 = vmatpush1.bf16.msra.mxu0 %v3263
        %3312 = vmatprep.subr.bf16.mxu0 0
        %3313 = vmatpush1.bf16.msra.mxu0 %v3265
        %3314 = vmatprep.subr.bf16.mxu0 0
        %3315 = vmatpush1.bf16.msra.mxu0 %v3267
        %3316 = vmatprep.subr.bf16.mxu0 0
        %3317 = vmatpush1.bf16.msra.mxu0 %v3269
        %3318 = vmatprep.subr.bf16.mxu0 0
        %3319 = vmatpush1.bf16.msra.mxu0 %v3271
        %3320 = vmatprep.subr.bf16.mxu0 0
        %3321 = vmatpush1.bf16.msra.mxu0 %v3273
        %3322 = vmatprep.subr.bf16.mxu0 0
        %3323 = vmatpush1.bf16.msra.mxu0 %v3275
        %3324 = vmatprep.subr.bf16.mxu0 0
        %3325 = vmatpush1.bf16.msra.mxu0 %v3277
        %3326 = vmatprep.subr.bf16.mxu0 0
        %3327 = vmatpush1.bf16.msra.mxu0 %v3279
        %3328 = vmatprep.subr.bf16.mxu0 0
        %3329 = vmatpush1.bf16.msra.mxu0 %v3281
        %3330 = vmatprep.subr.bf16.mxu0 0
        %3331 = vmatpush1.bf16.msra.mxu0 %v3283
        %3332 = vmatprep.subr.bf16.mxu0 0
        %3333 = vmatpush1.bf16.msra.mxu0 %v3285
        %3334 = vmatprep.subr.bf16.mxu0 0
        %3335 = vmatpush1.bf16.msra.mxu0 %v3287
        %3336 = vmatprep.subr.bf16.mxu0 0
        %3337 = vmatpush1.bf16.msra.mxu0 %v3289
        %3338 = vmatprep.subr.bf16.mxu0 0
        %3339 = vmatpush1.bf16.msra.mxu0 %v3291
        %3340 = vmatprep.subr.bf16.mxu0 0
        %3341 = vmatpush1.bf16.msra.mxu0 %v3293
        %3342 = vmatprep.mubr.bf16.mxu0 %v3247
        %3343 = vmatmul.mubr.bf16.gmra.mrb[0].mxu0 %v3246
        %v3344 = vpop.f32.mrb[0].mxu0
        %v3345 = vadd.f32 %v3192, %v3344
        %v3346 = vpop.f32.mrb[0].mxu0
        %v3347 = vpop.f32.mrb[0].mxu0
        %v3348 = vadd.f32 %v3195, %v3347
        %v3349 = vpop.f32.mrb[0].mxu0
        %3350 = vmatprep.mubr.bf16.mxu0 %v3249
        %3351 = vmatmul.mubr.bf16.gmra.mrb[0].mxu0 %v3248
        %v3352 = vpop.f32.mrb[0].mxu0
        %v3353 = vadd.f32 %v3200, %v3352
        %v3354 = vpop.f32.mrb[0].mxu0
        %v3355 = vpop.f32.mrb[0].mxu0
        %v3356 = vadd.f32 %v3203, %v3355
        %v3357 = vpop.f32.mrb[0].mxu0
        %3358 = vmatprep.mubr.bf16.mxu0 %v3251
        %3359 = vmatmul.mubr.bf16.gmra.mrb[0].mxu0 %v3250
        %v3360 = vpop.f32.mrb[0].mxu0
        %v3361 = vadd.f32 %v3208, %v3360
        %v3362 = vpop.f32.mrb[0].mxu0
        %v3363 = vpop.f32.mrb[0].mxu0
        %v3364 = vadd.f32 %v3211, %v3363
        %v3365 = vpop.f32.mrb[0].mxu0
        %3366 = vmatprep.mubr.bf16.mxu0 %v3253
        %3367 = vmatmul.mubr.bf16.gmra.mrb[0].mxu0 %v3252
        %v3368 = vpop.f32.mrb[0].mxu0
        %v3369 = vadd.f32 %v3216, %v3368
        %v3370 = vpop.f32.mrb[0].mxu0
        %v3371 = vpop.f32.mrb[0].mxu0
        %v3372 = vadd.f32 %v3219, %v3371
        %v3373 = vpop.f32.mrb[0].mxu0
        %3374 = vdwg.mxu0
        %v3375 = vld [vmem:[%s4 + $0x10] sm:$0xff]
        %v3376 = vld [vmem:[%s4 + $0x34] sm:$0xff]
        %v3377 = vld [vmem:[%s4 + $0x58] sm:$0xff]
        %v3378 = vld [vmem:[%s4 + $0x7c] sm:$0xff]
        %v3379 = vld [vmem:[%s4 + $0xa0] sm:$0xff]
        %v3380 = vld [vmem:[%s4 + $0xc4] sm:$0xff]
        %v3381 = vld [vmem:[%s4 + $0xe8] sm:$0xff]
        %v3382 = vld [vmem:[%s4 + $0x10c] sm:$0xff]
        %v3391 = vunpack.c.l.b16 %v3375
        %v3392 = vunpack.c.h.b16 %v3375
        %v3393 = vunpack.c.l.b16 %v3376
        %v3394 = vunpack.c.h.b16 %v3376
        %v3395 = vunpack.c.l.b16 %v3377
        %v3396 = vunpack.c.h.b16 %v3377
        %v3397 = vunpack.c.l.b16 %v3378
        %v3398 = vunpack.c.h.b16 %v3378
        %v3399 = vunpack.c.l.b16 %v3379
        %v3400 = vunpack.c.h.b16 %v3379
        %v3401 = vunpack.c.l.b16 %v3380
        %v3402 = vunpack.c.h.b16 %v3380
        %v3403 = vunpack.c.l.b16 %v3381
        %v3404 = vunpack.c.h.b16 %v3381
        %v3405 = vunpack.c.l.b16 %v3382
        %v3406 = vunpack.c.h.b16 %v3382
        %v3407 = vpack.c.b16 %v3393, %v3391
        %v3408 = vpack.c.b16 %v3394, %v3392
        %v3409 = vpack.c.b16 %v3397, %v3395
        %v3410 = vpack.c.b16 %v3398, %v3396
        %v3411 = vpack.c.b16 %v3401, %v3399
        %v3412 = vpack.c.b16 %v3402, %v3400
        %v3413 = vpack.c.b16 %v3405, %v3403
        %v3414 = vpack.c.b16 %v3406, %v3404
        %3423 = vrot.lane.b32.xlu0 %v3021, 112
        %v3424 = vpop.permute.xlu0 %3423
        %3425 = vrot.lane.b32.xlu0 %v3022, 112
        %v3426 = vpop.permute.xlu0 %3425
        %3427 = vrot.lane.b32.xlu0 %v3023, 112
        %v3428 = vpop.permute.xlu0 %3427
        %3429 = vrot.lane.b32.xlu0 %v3024, 112
        %v3430 = vpop.permute.xlu0 %3429
        %3431 = vrot.lane.b32.xlu0 %v3025, 112
        %v3432 = vpop.permute.xlu0 %3431
        %3433 = vrot.lane.b32.xlu0 %v3026, 112
        %v3434 = vpop.permute.xlu0 %3433
        %3435 = vrot.lane.b32.xlu0 %v3027, 112
        %v3436 = vpop.permute.xlu0 %3435
        %3437 = vrot.lane.b32.xlu0 %v3028, 112
        %v3438 = vpop.permute.xlu0 %3437
        %3439 = vrot.lane.b32.xlu0 %v3038, 112
        %v3440 = vpop.permute.xlu0 %3439
        %3441 = vrot.lane.b32.xlu0 %v3040, 112
        %v3442 = vpop.permute.xlu0 %3441
        %3443 = vrot.lane.b32.xlu0 %v3042, 112
        %v3444 = vpop.permute.xlu0 %3443
        %3445 = vrot.lane.b32.xlu0 %v3044, 112
        %v3446 = vpop.permute.xlu0 %3445
        %3447 = vrot.lane.b32.xlu0 %v3046, 112
        %v3448 = vpop.permute.xlu0 %3447
        %3449 = vrot.lane.b32.xlu0 %v3048, 112
        %v3450 = vpop.permute.xlu0 %3449
        %3451 = vrot.lane.b32.xlu0 %v3050, 112
        %v3452 = vpop.permute.xlu0 %3451
        %3453 = vrot.lane.b32.xlu0 %v3052, 112
        %v3454 = vpop.permute.xlu0 %3453
        %3471 = vmatprep.subr.bf16.mxu0 0
        %3472 = vmatpush1.bf16.msra.mxu0 %v3424
        %3473 = vmatprep.subr.bf16.mxu0 0
        %3474 = vmatpush1.bf16.msra.mxu0 %v3426
        %3475 = vmatprep.subr.bf16.mxu0 0
        %3476 = vmatpush1.bf16.msra.mxu0 %v3428
        %3477 = vmatprep.subr.bf16.mxu0 0
        %3478 = vmatpush1.bf16.msra.mxu0 %v3430
        %3479 = vmatprep.subr.bf16.mxu0 0
        %3480 = vmatpush1.bf16.msra.mxu0 %v3432
        %3481 = vmatprep.subr.bf16.mxu0 0
        %3482 = vmatpush1.bf16.msra.mxu0 %v3434
        %3483 = vmatprep.subr.bf16.mxu0 0
        %3484 = vmatpush1.bf16.msra.mxu0 %v3436
        %3485 = vmatprep.subr.bf16.mxu0 0
        %3486 = vmatpush1.bf16.msra.mxu0 %v3438
        %3487 = vmatprep.subr.bf16.mxu0 0
        %3488 = vmatpush1.bf16.msra.mxu0 %v3440
        %3489 = vmatprep.subr.bf16.mxu0 0
        %3490 = vmatpush1.bf16.msra.mxu0 %v3442
        %3491 = vmatprep.subr.bf16.mxu0 0
        %3492 = vmatpush1.bf16.msra.mxu0 %v3444
        %3493 = vmatprep.subr.bf16.mxu0 0
        %3494 = vmatpush1.bf16.msra.mxu0 %v3446
        %3495 = vmatprep.subr.bf16.mxu0 0
        %3496 = vmatpush1.bf16.msra.mxu0 %v3448
        %3497 = vmatprep.subr.bf16.mxu0 0
        %3498 = vmatpush1.bf16.msra.mxu0 %v3450
        %3499 = vmatprep.subr.bf16.mxu0 0
        %3500 = vmatpush1.bf16.msra.mxu0 %v3452
        %3501 = vmatprep.subr.bf16.mxu0 0
        %3502 = vmatpush1.bf16.msra.mxu0 %v3454
        %3503 = vmatprep.mubr.bf16.mxu0 %v3408
        %3504 = vmatmul.mubr.bf16.gmra.mrb[0].mxu0 %v3407
        %v3505 = vpop.f32.mrb[0].mxu0
        %v3506 = vadd.f32 0.0, %v3505
        %v3507 = vpop.f32.mrb[0].mxu0
        %v3508 = vpop.f32.mrb[0].mxu0
        %v3509 = vadd.f32 0.0, %v3508
        %v3510 = vpop.f32.mrb[0].mxu0
        %3511 = vmatprep.mubr.bf16.mxu0 %v3410
        %3512 = vmatmul.mubr.bf16.gmra.mrb[0].mxu0 %v3409
        %v3513 = vpop.f32.mrb[0].mxu0
        %v3514 = vadd.f32 0.0, %v3513
        %v3515 = vpop.f32.mrb[0].mxu0
        %v3516 = vpop.f32.mrb[0].mxu0
        %v3517 = vadd.f32 0.0, %v3516
        %v3518 = vpop.f32.mrb[0].mxu0
        %3519 = vmatprep.mubr.bf16.mxu0 %v3412
        %3520 = vmatmul.mubr.bf16.gmra.mrb[0].mxu0 %v3411
        %v3521 = vpop.f32.mrb[0].mxu0
        %v3522 = vadd.f32 0.0, %v3521
        %v3523 = vpop.f32.mrb[0].mxu0
        %v3524 = vpop.f32.mrb[0].mxu0
        %v3525 = vadd.f32 0.0, %v3524
        %v3526 = vpop.f32.mrb[0].mxu0
        %3527 = vmatprep.mubr.bf16.mxu0 %v3414
        %3528 = vmatmul.mubr.bf16.gmra.mrb[0].mxu0 %v3413
        %v3529 = vpop.f32.mrb[0].mxu0
        %v3530 = vadd.f32 0.0, %v3529
        %v3531 = vpop.f32.mrb[0].mxu0
        %v3532 = vpop.f32.mrb[0].mxu0
        %v3533 = vadd.f32 0.0, %v3532
        %v3534 = vpop.f32.mrb[0].mxu0
        %3535 = vdwg.mxu0
        %v3536 = vadd.f32 %v3345, %v3506
        %v3537 = vadd.f32 %v3348, %v3509
        %v3538 = vadd.f32 %v3353, %v3514
        %v3539 = vadd.f32 %v3356, %v3517
        %v3540 = vadd.f32 %v3361, %v3522
        %v3541 = vadd.f32 %v3364, %v3525
        %v3542 = vadd.f32 %v3369, %v3530
        %v3543 = vadd.f32 %v3372, %v3533
        %v3544 = vld [vmem:[%s4 + $0x18] sm:$0xff]
        %v3545 = vld [vmem:[%s4 + $0x3c] sm:$0xff]
        %v3546 = vld [vmem:[%s4 + $0x60] sm:$0xff]
        %v3547 = vld [vmem:[%s4 + $0x84] sm:$0xff]
        %v3548 = vld [vmem:[%s4 + $0xa8] sm:$0xff]
        %v3549 = vld [vmem:[%s4 + $0xcc] sm:$0xff]
        %v3550 = vld [vmem:[%s4 + $0xf0] sm:$0xff]
        %v3551 = vld [vmem:[%s4 + $0x114] sm:$0xff]
        %v3560 = vunpack.c.l.b16 %v3544
        %v3561 = vunpack.c.h.b16 %v3544
        %v3562 = vunpack.c.l.b16 %v3545
        %v3563 = vunpack.c.h.b16 %v3545
        %v3564 = vunpack.c.l.b16 %v3546
        %v3565 = vunpack.c.h.b16 %v3546
        %v3566 = vunpack.c.l.b16 %v3547
        %v3567 = vunpack.c.h.b16 %v3547
        %v3568 = vunpack.c.l.b16 %v3548
        %v3569 = vunpack.c.h.b16 %v3548
        %v3570 = vunpack.c.l.b16 %v3549
        %v3571 = vunpack.c.h.b16 %v3549
        %v3572 = vunpack.c.l.b16 %v3550
        %v3573 = vunpack.c.h.b16 %v3550
        %v3574 = vunpack.c.l.b16 %v3551
        %v3575 = vunpack.c.h.b16 %v3551
        %v3576 = vpack.c.b16 %v3562, %v3560
        %v3577 = vpack.c.b16 %v3563, %v3561
        %v3578 = vpack.c.b16 %v3566, %v3564
        %v3579 = vpack.c.b16 %v3567, %v3565
        %v3580 = vpack.c.b16 %v3570, %v3568
        %v3581 = vpack.c.b16 %v3571, %v3569
        %v3582 = vpack.c.b16 %v3574, %v3572
        %v3583 = vpack.c.b16 %v3575, %v3573
        %3592 = vrot.lane.b32.xlu0 %v3021, 110
        %v3593 = vpop.permute.xlu0 %3592
        %3594 = vrot.lane.b32.xlu0 %v3022, 110
        %v3595 = vpop.permute.xlu0 %3594
        %3596 = vrot.lane.b32.xlu0 %v3023, 110
        %v3597 = vpop.permute.xlu0 %3596
        %3598 = vrot.lane.b32.xlu0 %v3024, 110
        %v3599 = vpop.permute.xlu0 %3598
        %3600 = vrot.lane.b32.xlu0 %v3025, 110
        %v3601 = vpop.permute.xlu0 %3600
        %3602 = vrot.lane.b32.xlu0 %v3026, 110
        %v3603 = vpop.permute.xlu0 %3602
        %3604 = vrot.lane.b32.xlu0 %v3027, 110
        %v3605 = vpop.permute.xlu0 %3604
        %3606 = vrot.lane.b32.xlu0 %v3028, 110
        %v3607 = vpop.permute.xlu0 %3606
        %3608 = vrot.lane.b32.xlu0 %v3038, 110
        %v3609 = vpop.permute.xlu0 %3608
        %3610 = vrot.lane.b32.xlu0 %v3040, 110
        %v3611 = vpop.permute.xlu0 %3610
        %3612 = vrot.lane.b32.xlu0 %v3042, 110
        %v3613 = vpop.permute.xlu0 %3612
        %3614 = vrot.lane.b32.xlu0 %v3044, 110
        %v3615 = vpop.permute.xlu0 %3614
        %3616 = vrot.lane.b32.xlu0 %v3046, 110
        %v3617 = vpop.permute.xlu0 %3616
        %3618 = vrot.lane.b32.xlu0 %v3048, 110
        %v3619 = vpop.permute.xlu0 %3618
        %3620 = vrot.lane.b32.xlu0 %v3050, 110
        %v3621 = vpop.permute.xlu0 %3620
        %3622 = vrot.lane.b32.xlu0 %v3052, 110
        %v3623 = vpop.permute.xlu0 %3622
        %3640 = vmatprep.subr.bf16.mxu0 0
        %3641 = vmatpush1.bf16.msra.mxu0 %v3593
        %3642 = vmatprep.subr.bf16.mxu0 0
        %3643 = vmatpush1.bf16.msra.mxu0 %v3595
        %3644 = vmatprep.subr.bf16.mxu0 0
        %3645 = vmatpush1.bf16.msra.mxu0 %v3597
        %3646 = vmatprep.subr.bf16.mxu0 0
        %3647 = vmatpush1.bf16.msra.mxu0 %v3599
        %3648 = vmatprep.subr.bf16.mxu0 0
        %3649 = vmatpush1.bf16.msra.mxu0 %v3601
        %3650 = vmatprep.subr.bf16.mxu0 0
        %3651 = vmatpush1.bf16.msra.mxu0 %v3603
        %3652 = vmatprep.subr.bf16.mxu0 0
        %3653 = vmatpush1.bf16.msra.mxu0 %v3605
        %3654 = vmatprep.subr.bf16.mxu0 0
        %3655 = vmatpush1.bf16.msra.mxu0 %v3607
        %3656 = vmatprep.subr.bf16.mxu0 0
        %3657 = vmatpush1.bf16.msra.mxu0 %v3609
        %3658 = vmatprep.subr.bf16.mxu0 0
        %3659 = vmatpush1.bf16.msra.mxu0 %v3611
        %3660 = vmatprep.subr.bf16.mxu0 0
        %3661 = vmatpush1.bf16.msra.mxu0 %v3613
        %3662 = vmatprep.subr.bf16.mxu0 0
        %3663 = vmatpush1.bf16.msra.mxu0 %v3615
        %3664 = vmatprep.subr.bf16.mxu0 0
        %3665 = vmatpush1.bf16.msra.mxu0 %v3617
        %3666 = vmatprep.subr.bf16.mxu0 0
        %3667 = vmatpush1.bf16.msra.mxu0 %v3619
        %3668 = vmatprep.subr.bf16.mxu0 0
        %3669 = vmatpush1.bf16.msra.mxu0 %v3621
        %3670 = vmatprep.subr.bf16.mxu0 0
        %3671 = vmatpush1.bf16.msra.mxu0 %v3623
        %3672 = vmatprep.mubr.bf16.mxu0 %v3577
        %3673 = vmatmul.mubr.bf16.gmra.mrb[0].mxu0 %v3576
        %v3674 = vpop.f32.mrb[0].mxu0
        %v3675 = vadd.f32 0.0, %v3674
        %v3676 = vpop.f32.mrb[0].mxu0
        %v3677 = vpop.f32.mrb[0].mxu0
        %v3678 = vadd.f32 0.0, %v3677
        %v3679 = vpop.f32.mrb[0].mxu0
        %3680 = vmatprep.mubr.bf16.mxu0 %v3579
        %3681 = vmatmul.mubr.bf16.gmra.mrb[0].mxu0 %v3578
        %v3682 = vpop.f32.mrb[0].mxu0
        %v3683 = vadd.f32 0.0, %v3682
        %v3684 = vpop.f32.mrb[0].mxu0
        %v3685 = vpop.f32.mrb[0].mxu0
        %v3686 = vadd.f32 0.0, %v3685
        %v3687 = vpop.f32.mrb[0].mxu0
        %3688 = vmatprep.mubr.bf16.mxu0 %v3581
        %3689 = vmatmul.mubr.bf16.gmra.mrb[0].mxu0 %v3580
        %v3690 = vpop.f32.mrb[0].mxu0
        %v3691 = vadd.f32 0.0, %v3690
        %v3692 = vpop.f32.mrb[0].mxu0
        %v3693 = vpop.f32.mrb[0].mxu0
        %v3694 = vadd.f32 0.0, %v3693
        %v3695 = vpop.f32.mrb[0].mxu0
        %3696 = vmatprep.mubr.bf16.mxu0 %v3583
        %3697 = vmatmul.mubr.bf16.gmra.mrb[0].mxu0 %v3582
        %v3698 = vpop.f32.mrb[0].mxu0
        %v3699 = vadd.f32 0.0, %v3698
        %v3700 = vpop.f32.mrb[0].mxu0
        %v3701 = vpop.f32.mrb[0].mxu0
        %v3702 = vadd.f32 0.0, %v3701
        %v3703 = vpop.f32.mrb[0].mxu0
        %3704 = vdwg.mxu0
        %v3705 = vadd.f32 %v3536, %v3675
        %v3706 = vadd.f32 %v3537, %v3678
        %v3707 = vadd.f32 %v3538, %v3683
        %v3708 = vadd.f32 %v3539, %v3686
        %v3709 = vadd.f32 %v3540, %v3691
        %v3710 = vadd.f32 %v3541, %v3694
        %v3711 = vadd.f32 %v3542, %v3699
        %v3712 = vadd.f32 %v3543, %v3702
        %v3713 = vld [vmem:[%s4 + $0x20] sm:$0xf]
        %v3714 = vld [vmem:[%s4 + $0x44] sm:$0xf]
        %v3715 = vld [vmem:[%s4 + $0x68] sm:$0xf]
        %v3716 = vld [vmem:[%s4 + $0x8c] sm:$0xf]
        %v3717 = vld [vmem:[%s4 + $0xb0] sm:$0xf]
        %v3718 = vld [vmem:[%s4 + $0xd4] sm:$0xf]
        %v3719 = vld [vmem:[%s4 + $0xf8] sm:$0xf]
        %v3720 = vld [vmem:[%s4 + $0x11c] sm:$0xf]
        %v3729 = vunpack.c.l.b16 %v3713
        %v3730 = vunpack.c.l.b16 %v3714
        %v3731 = vunpack.c.l.b16 %v3715
        %v3732 = vunpack.c.l.b16 %v3716
        %v3733 = vunpack.c.l.b16 %v3717
        %v3734 = vunpack.c.l.b16 %v3718
        %v3735 = vunpack.c.l.b16 %v3719
        %v3736 = vunpack.c.l.b16 %v3720
        %v3737 = vpack.c.b16 %v3730, %v3729
        %v3738 = vpack.c.b16 %v3732, %v3731
        %v3739 = vpack.c.b16 %v3734, %v3733
        %v3740 = vpack.c.b16 %v3736, %v3735
        %3745 = vrot.lane.b32.xlu0 %v3021, 108
        %v3746 = vpop.permute.xlu0 %3745
        %3747 = vrot.lane.b32.xlu0 %v3022, 108
        %v3748 = vpop.permute.xlu0 %3747
        %3749 = vrot.lane.b32.xlu0 %v3023, 108
        %v3750 = vpop.permute.xlu0 %3749
        %3751 = vrot.lane.b32.xlu0 %v3024, 108
        %v3752 = vpop.permute.xlu0 %3751
        %3753 = vrot.lane.b32.xlu0 %v3025, 108
        %v3754 = vpop.permute.xlu0 %3753
        %3755 = vrot.lane.b32.xlu0 %v3026, 108
        %v3756 = vpop.permute.xlu0 %3755
        %3757 = vrot.lane.b32.xlu0 %v3027, 108
        %v3758 = vpop.permute.xlu0 %3757
        %3759 = vrot.lane.b32.xlu0 %v3028, 108
        %v3760 = vpop.permute.xlu0 %3759
        %3769 = vmatprep.subr.bf16.mxu0 0
        %3770 = vmatpush1.bf16.msra.mxu0 %v3746
        %3771 = vmatprep.subr.bf16.mxu0 0
        %3772 = vmatpush1.bf16.msra.mxu0 %v3748
        %3773 = vmatprep.subr.bf16.mxu0 0
        %3774 = vmatpush1.bf16.msra.mxu0 %v3750
        %3775 = vmatprep.subr.bf16.mxu0 0
        %3776 = vmatpush1.bf16.msra.mxu0 %v3752
        %3777 = vmatprep.subr.bf16.mxu0 0
        %3778 = vmatpush1.bf16.msra.mxu0 %v3754
        %3779 = vmatprep.subr.bf16.mxu0 0
        %3780 = vmatpush1.bf16.msra.mxu0 %v3756
        %3781 = vmatprep.subr.bf16.mxu0 0
        %3782 = vmatpush1.bf16.msra.mxu0 %v3758
        %3783 = vmatprep.subr.bf16.mxu0 0
        %3784 = vmatpush1.bf16.msra.mxu0 %v3760
        %3785 = vmatprep.subr.bf16.mxu0 0
        %3786 = vmatpush1.bf16.msra.mxu0 0
        %3787 = vmatprep.subr.bf16.mxu0 0
        %3788 = vmatpush1.bf16.msra.mxu0 0
        %3789 = vmatprep.subr.bf16.mxu0 0
        %3790 = vmatpush1.bf16.msra.mxu0 0
        %3791 = vmatprep.subr.bf16.mxu0 0
        %3792 = vmatpush1.bf16.msra.mxu0 0
        %3793 = vmatprep.subr.bf16.mxu0 0
        %3794 = vmatpush1.bf16.msra.mxu0 0
        %3795 = vmatprep.subr.bf16.mxu0 0
        %3796 = vmatpush1.bf16.msra.mxu0 0
        %3797 = vmatprep.subr.bf16.mxu0 0
        %3798 = vmatpush1.bf16.msra.mxu0 0
        %3799 = vmatprep.subr.bf16.mxu0 0
        %3800 = vmatpush1.bf16.msra.mxu0 0
        %3801 = vmatprep.mubr.bf16.mxu0 0
        %3802 = vmatmul.mubr.bf16.gmra.mrb[0].mxu0 %v3737
        %v3803 = vpop.f32.mrb[0].mxu0
        %v3804 = vadd.f32 0.0, %v3803
        %v3805 = vpop.f32.mrb[0].mxu0
        %v3806 = vpop.f32.mrb[0].mxu0
        %v3807 = vadd.f32 0.0, %v3806
        %v3808 = vpop.f32.mrb[0].mxu0
        %3809 = vmatprep.mubr.bf16.mxu0 0
        %3810 = vmatmul.mubr.bf16.gmra.mrb[0].mxu0 %v3738
        %v3811 = vpop.f32.mrb[0].mxu0
        %v3812 = vadd.f32 0.0, %v3811
        %v3813 = vpop.f32.mrb[0].mxu0
        %v3814 = vpop.f32.mrb[0].mxu0
        %v3815 = vadd.f32 0.0, %v3814
        %v3816 = vpop.f32.mrb[0].mxu0
        %3817 = vmatprep.mubr.bf16.mxu0 0
        %3818 = vmatmul.mubr.bf16.gmra.mrb[0].mxu0 %v3739
        %v3819 = vpop.f32.mrb[0].mxu0
        %v3820 = vadd.f32 0.0, %v3819
        %v3821 = vpop.f32.mrb[0].mxu0
        %v3822 = vpop.f32.mrb[0].mxu0
        %v3823 = vadd.f32 0.0, %v3822
        %v3824 = vpop.f32.mrb[0].mxu0
        %3825 = vmatprep.mubr.bf16.mxu0 0
        %3826 = vmatmul.mubr.bf16.gmra.mrb[0].mxu0 %v3740
        %v3827 = vpop.f32.mrb[0].mxu0
        %v3828 = vadd.f32 0.0, %v3827
        %v3829 = vpop.f32.mrb[0].mxu0
        %v3830 = vpop.f32.mrb[0].mxu0
        %v3831 = vadd.f32 0.0, %v3830
        %v3832 = vpop.f32.mrb[0].mxu0
        %3833 = vdwg.mxu0
        %v3834 = vadd.f32 %v3705, %v3804
        %v3835 = vadd.f32 %v3706, %v3807
        %v3836 = vadd.f32 %v3707, %v3812
        %v3837 = vadd.f32 %v3708, %v3815
        %v3838 = vadd.f32 %v3709, %v3820
        %v3839 = vadd.f32 %v3710, %v3823
        %v3840 = vadd.f32 %v3711, %v3828
        %v3841 = vadd.f32 %v3712, %v3831
        %v3842 = vld [vmem:[%s9] sm:$0xff]
        %v3843 = vld [vmem:[%s9 + $0x8] sm:$0xff]
        %v3844 = vld [vmem:[%s9 + $0x10] sm:$0xff]
        %v3845 = vld [vmem:[%s9 + $0x18] sm:$0xff]
        %v3846 = vld [vmem:[%s9 + $0x20] sm:$0xff]
        %v3847 = vld [vmem:[%s9 + $0x28] sm:$0xff]
        %v3848 = vld [vmem:[%s9 + $0x30] sm:$0xff]
        %v3849 = vld [vmem:[%s9 + $0x38] sm:$0xff]
        %3851 = vset.pattern.permute.xlu0 0
        %3852 = vperm.xlu0 %3851, %v3842
        %v3853 = vpop.permute.xlu0 %3852
        %3856 = vset.pattern.permute.xlu0 0
        %3857 = vperm.xlu0 %3856, %v3843
        %v3858 = vpop.permute.xlu0 %3857
        %3861 = vset.pattern.permute.xlu0 0
        %3862 = vperm.xlu0 %3861, %v3844
        %v3863 = vpop.permute.xlu0 %3862
        %3866 = vset.pattern.permute.xlu0 0
        %3867 = vperm.xlu0 %3866, %v3845
        %v3868 = vpop.permute.xlu0 %3867
        %3871 = vset.pattern.permute.xlu0 0
        %3872 = vperm.xlu0 %3871, %v3846
        %v3873 = vpop.permute.xlu0 %3872
        %3876 = vset.pattern.permute.xlu0 0
        %3877 = vperm.xlu0 %3876, %v3847
        %v3878 = vpop.permute.xlu0 %3877
        %3881 = vset.pattern.permute.xlu0 0
        %3882 = vperm.xlu0 %3881, %v3848
        %v3883 = vpop.permute.xlu0 %3882
        %3886 = vset.pattern.permute.xlu0 0
        %3887 = vperm.xlu0 %3886, %v3849
        %v3888 = vpop.permute.xlu0 %3887
        %v3890 = vadd.f32 %v3834, %v3853
        %v3891 = vadd.f32 %v3835, %v3858
        %v3892 = vadd.f32 %v3836, %v3863
        %v3893 = vadd.f32 %v3837, %v3868
        %v3894 = vadd.f32 %v3838, %v3873
        %v3895 = vadd.f32 %v3839, %v3878
        %v3896 = vadd.f32 %v3840, %v3883
        %v3897 = vadd.f32 %v3841, %v3888
        %v3898 = vmax.f32 %v3890, 0.0
        %v3899 = vmax.f32 %v3891, 0.0
        %v3900 = vmax.f32 %v3892, 0.0
        %v3901 = vmax.f32 %v3893, 0.0
        %v3902 = vmax.f32 %v3894, 0.0
        %v3903 = vmax.f32 %v3895, 0.0
        %v3904 = vmax.f32 %v3896, 0.0
        %v3905 = vmax.f32 %v3897, 0.0
        %3914 = vrot.lane.b32.xlu0 %v3898, 16
        %v3915 = vpop.permute.xlu0 %3914
        %3916 = vrot.lane.b32.xlu0 %v3899, 16
        %v3917 = vpop.permute.xlu0 %3916
        %3918 = vrot.lane.b32.xlu0 %v3900, 16
        %v3919 = vpop.permute.xlu0 %3918
        %3920 = vrot.lane.b32.xlu0 %v3901, 16
        %v3921 = vpop.permute.xlu0 %3920
        %3922 = vrot.lane.b32.xlu0 %v3902, 16
        %v3923 = vpop.permute.xlu0 %3922
        %3924 = vrot.lane.b32.xlu0 %v3903, 16
        %v3925 = vpop.permute.xlu0 %3924
        %3926 = vrot.lane.b32.xlu0 %v3904, 16
        %v3927 = vpop.permute.xlu0 %3926
        %3928 = vrot.lane.b32.xlu0 %v3905, 16
        %v3929 = vpop.permute.xlu0 %3928
        %v3938 = vsel %vm1087, %v3915, 0.0
        %v3939 = vsel %vm1087, %v3917, 0.0
        %v3940 = vsel %vm1087, %v3919, 0.0
        %v3941 = vsel %vm1087, %v3921, 0.0
        %v3942 = vsel %vm1087, %v3923, 0.0
        %v3943 = vsel %vm1087, %v3925, 0.0
        %v3944 = vsel %vm1087, %v3927, 0.0
        %v3945 = vsel %vm1087, %v3929, 0.0
        %v3946 = vpack.c.bf16 %v3939, %v3938
        %v3947 = vpack.c.bf16 %v3941, %v3940
        %v3948 = vpack.c.bf16 %v3943, %v3942
        %v3949 = vpack.c.bf16 %v3945, %v3944
        %3954 = vrot.lane.b32.xlu0 %v3946, 127
        %v3955 = vpop.permute.xlu0 %3954
        %3956 = vrot.lane.b32.xlu0 %v3947, 127
        %v3957 = vpop.permute.xlu0 %3956
        %3958 = vrot.lane.b32.xlu0 %v3948, 127
        %v3959 = vpop.permute.xlu0 %3958
        %3960 = vrot.lane.b32.xlu0 %v3949, 127
        %v3961 = vpop.permute.xlu0 %3960
        %3962 = vrot.lane.b32.xlu0 %v3946, 126
        %v3963 = vpop.permute.xlu0 %3962
        %3964 = vrot.lane.b32.xlu0 %v3947, 126
        %v3965 = vpop.permute.xlu0 %3964
        %3966 = vrot.lane.b32.xlu0 %v3948, 126
        %v3967 = vpop.permute.xlu0 %3966
        %3968 = vrot.lane.b32.xlu0 %v3949, 126
        %v3969 = vpop.permute.xlu0 %3968
        %3970 = vrot.lane.b32.xlu0 %v3946, 125
        %v3971 = vpop.permute.xlu0 %3970
        %3972 = vrot.lane.b32.xlu0 %v3947, 125
        %v3973 = vpop.permute.xlu0 %3972
        %3974 = vrot.lane.b32.xlu0 %v3948, 125
        %v3975 = vpop.permute.xlu0 %3974
        %3976 = vrot.lane.b32.xlu0 %v3949, 125
        %v3977 = vpop.permute.xlu0 %3976
        %v3978 = vld [vmem:[%s5] sm:$0xff]
        %v3979 = vld [vmem:[%s5 + $0x8] sm:$0xff]
        %v3981 = vunpack.c.l.b16 %v3979
        %v3982 = vunpack.c.h.b16 %v3979
        %v3983 = vpack.c.b16 %v3981, %v3981
        %v3984 = vpack.c.b16 %v3982, %v3982
        %3987 = vrot.lane.b32.xlu0 %v3946, 108
        %v3988 = vpop.permute.xlu0 %3987
        %3989 = vrot.lane.b32.xlu0 %v3947, 108
        %v3990 = vpop.permute.xlu0 %3989
        %3991 = vrot.lane.b32.xlu0 %v3948, 108
        %v3992 = vpop.permute.xlu0 %3991
        %3993 = vrot.lane.b32.xlu0 %v3949, 108
        %v3994 = vpop.permute.xlu0 %3993
        %3995 = vrot.lane.b32.xlu0 %v3955, 108
        %v3996 = vpop.permute.xlu0 %3995
        %3997 = vrot.lane.b32.xlu0 %v3957, 108
        %v3998 = vpop.permute.xlu0 %3997
        %3999 = vrot.lane.b32.xlu0 %v3959, 108
        %v4000 = vpop.permute.xlu0 %3999
        %4001 = vrot.lane.b32.xlu0 %v3961, 108
        %v4002 = vpop.permute.xlu0 %4001
        %4003 = vrot.lane.b32.xlu0 %v3963, 108
        %v4004 = vpop.permute.xlu0 %4003
        %4005 = vrot.lane.b32.xlu0 %v3965, 108
        %v4006 = vpop.permute.xlu0 %4005
        %4007 = vrot.lane.b32.xlu0 %v3967, 108
        %v4008 = vpop.permute.xlu0 %4007
        %4009 = vrot.lane.b32.xlu0 %v3969, 108
        %v4010 = vpop.permute.xlu0 %4009
        %4011 = vrot.lane.b32.xlu0 %v3971, 108
        %v4012 = vpop.permute.xlu0 %4011
        %4013 = vrot.lane.b32.xlu0 %v3973, 108
        %v4014 = vpop.permute.xlu0 %4013
        %4015 = vrot.lane.b32.xlu0 %v3975, 108
        %v4016 = vpop.permute.xlu0 %4015
        %4017 = vrot.lane.b32.xlu0 %v3977, 108
        %v4018 = vpop.permute.xlu0 %4017
        %4035 = vmatprep.subr.bf16.mxu0 0
        %4036 = vmatpush1.bf16.msra.mxu0 %v3988
        %4037 = vmatprep.subr.bf16.mxu0 0
        %4038 = vmatpush1.bf16.msra.mxu0 %v3990
        %4039 = vmatprep.subr.bf16.mxu0 0
        %4040 = vmatpush1.bf16.msra.mxu0 %v3992
        %4041 = vmatprep.subr.bf16.mxu0 0
        %4042 = vmatpush1.bf16.msra.mxu0 %v3994
        %4043 = vmatprep.subr.bf16.mxu0 0
        %4044 = vmatpush1.bf16.msra.mxu0 %v3996
        %4045 = vmatprep.subr.bf16.mxu0 0
        %4046 = vmatpush1.bf16.msra.mxu0 %v3998
        %4047 = vmatprep.subr.bf16.mxu0 0
        %4048 = vmatpush1.bf16.msra.mxu0 %v4000
        %4049 = vmatprep.subr.bf16.mxu0 0
        %4050 = vmatpush1.bf16.msra.mxu0 %v4002
        %4051 = vmatprep.subr.bf16.mxu0 0
        %4052 = vmatpush1.bf16.msra.mxu0 %v4004
        %4053 = vmatprep.subr.bf16.mxu0 0
        %4054 = vmatpush1.bf16.msra.mxu0 %v4006
        %4055 = vmatprep.subr.bf16.mxu0 0
        %4056 = vmatpush1.bf16.msra.mxu0 %v4008
        %4057 = vmatprep.subr.bf16.mxu0 0
        %4058 = vmatpush1.bf16.msra.mxu0 %v4010
        %4059 = vmatprep.subr.bf16.mxu0 0
        %4060 = vmatpush1.bf16.msra.mxu0 %v4012
        %4061 = vmatprep.subr.bf16.mxu0 0
        %4062 = vmatpush1.bf16.msra.mxu0 %v4014
        %4063 = vmatprep.subr.bf16.mxu0 0
        %4064 = vmatpush1.bf16.msra.mxu0 %v4016
        %4065 = vmatprep.subr.bf16.mxu0 0
        %4066 = vmatpush1.bf16.msra.mxu0 %v4018
        %4067 = vmatprep.mubr.bf16.mxu0 %v3984
        %4068 = vmatmul.mubr.bf16.gmra.mrb[0].mxu0 %v3983
        %v4069 = vpop.f32.mrb[0].mxu0
        %v4070 = vadd.f32 0.0, %v4069
        %v4071 = vpop.f32.mrb[0].mxu0
        %v4072 = vpop.f32.mrb[0].mxu0
        %v4073 = vpop.f32.mrb[0].mxu0
        %4074 = vdwg.mxu0
        %v4076 = vunpack.c.l.b16 %v3978
        %v4077 = vunpack.c.h.b16 %v3978
        %v4078 = vpack.c.b16 %v4076, %v4076
        %v4079 = vpack.c.b16 %v4077, %v4077
        %4082 = vrot.lane.b32.xlu0 %v3946, 112
        %v4083 = vpop.permute.xlu0 %4082
        %4084 = vrot.lane.b32.xlu0 %v3947, 112
        %v4085 = vpop.permute.xlu0 %4084
        %4086 = vrot.lane.b32.xlu0 %v3948, 112
        %v4087 = vpop.permute.xlu0 %4086
        %4088 = vrot.lane.b32.xlu0 %v3949, 112
        %v4089 = vpop.permute.xlu0 %4088
        %4090 = vrot.lane.b32.xlu0 %v3955, 112
        %v4091 = vpop.permute.xlu0 %4090
        %4092 = vrot.lane.b32.xlu0 %v3957, 112
        %v4093 = vpop.permute.xlu0 %4092
        %4094 = vrot.lane.b32.xlu0 %v3959, 112
        %v4095 = vpop.permute.xlu0 %4094
        %4096 = vrot.lane.b32.xlu0 %v3961, 112
        %v4097 = vpop.permute.xlu0 %4096
        %4098 = vrot.lane.b32.xlu0 %v3963, 112
        %v4099 = vpop.permute.xlu0 %4098
        %4100 = vrot.lane.b32.xlu0 %v3965, 112
        %v4101 = vpop.permute.xlu0 %4100
        %4102 = vrot.lane.b32.xlu0 %v3967, 112
        %v4103 = vpop.permute.xlu0 %4102
        %4104 = vrot.lane.b32.xlu0 %v3969, 112
        %v4105 = vpop.permute.xlu0 %4104
        %4106 = vrot.lane.b32.xlu0 %v3971, 112
        %v4107 = vpop.permute.xlu0 %4106
        %4108 = vrot.lane.b32.xlu0 %v3973, 112
        %v4109 = vpop.permute.xlu0 %4108
        %4110 = vrot.lane.b32.xlu0 %v3975, 112
        %v4111 = vpop.permute.xlu0 %4110
        %4112 = vrot.lane.b32.xlu0 %v3977, 112
        %v4113 = vpop.permute.xlu0 %4112
        %4130 = vmatprep.subr.bf16.mxu0 0
        %4131 = vmatpush1.bf16.msra.mxu0 %v4083
        %4132 = vmatprep.subr.bf16.mxu0 0
        %4133 = vmatpush1.bf16.msra.mxu0 %v4085
        %4134 = vmatprep.subr.bf16.mxu0 0
        %4135 = vmatpush1.bf16.msra.mxu0 %v4087
        %4136 = vmatprep.subr.bf16.mxu0 0
        %4137 = vmatpush1.bf16.msra.mxu0 %v4089
        %4138 = vmatprep.subr.bf16.mxu0 0
        %4139 = vmatpush1.bf16.msra.mxu0 %v4091
        %4140 = vmatprep.subr.bf16.mxu0 0
        %4141 = vmatpush1.bf16.msra.mxu0 %v4093
        %4142 = vmatprep.subr.bf16.mxu0 0
        %4143 = vmatpush1.bf16.msra.mxu0 %v4095
        %4144 = vmatprep.subr.bf16.mxu0 0
        %4145 = vmatpush1.bf16.msra.mxu0 %v4097
        %4146 = vmatprep.subr.bf16.mxu0 0
        %4147 = vmatpush1.bf16.msra.mxu0 %v4099
        %4148 = vmatprep.subr.bf16.mxu0 0
        %4149 = vmatpush1.bf16.msra.mxu0 %v4101
        %4150 = vmatprep.subr.bf16.mxu0 0
        %4151 = vmatpush1.bf16.msra.mxu0 %v4103
        %4152 = vmatprep.subr.bf16.mxu0 0
        %4153 = vmatpush1.bf16.msra.mxu0 %v4105
        %4154 = vmatprep.subr.bf16.mxu0 0
        %4155 = vmatpush1.bf16.msra.mxu0 %v4107
        %4156 = vmatprep.subr.bf16.mxu0 0
        %4157 = vmatpush1.bf16.msra.mxu0 %v4109
        %4158 = vmatprep.subr.bf16.mxu0 0
        %4159 = vmatpush1.bf16.msra.mxu0 %v4111
        %4160 = vmatprep.subr.bf16.mxu0 0
        %4161 = vmatpush1.bf16.msra.mxu0 %v4113
        %4162 = vmatprep.mubr.bf16.mxu0 %v4079
        %4163 = vmatmul.mubr.bf16.gmra.mrb[0].mxu0 %v4078
        %v4164 = vpop.f32.mrb[0].mxu0
        %v4165 = vadd.f32 %v4070, %v4164
        %v4166 = vpop.f32.mrb[0].mxu0
        %v4167 = vpop.f32.mrb[0].mxu0
        %v4168 = vpop.f32.mrb[0].mxu0
        %4169 = vdwg.mxu0
        %v4170 = vld [vmem:[%s5 + $0x10] sm:$0xf]
        %4171 = vrot.lane.b32.xlu0 %v3946, 104
        %v4172 = vpop.permute.xlu0 %4171
        %4173 = vrot.lane.b32.xlu0 %v3947, 104
        %v4174 = vpop.permute.xlu0 %4173
        %4175 = vrot.lane.b32.xlu0 %v3948, 104
        %v4176 = vpop.permute.xlu0 %4175
        %4177 = vrot.lane.b32.xlu0 %v3949, 104
        %v4178 = vpop.permute.xlu0 %4177
        %v4184 = vsel %vm2675, %v4170, 0
        %4186 = vmatprep.subr.bf16.mxu0 0
        %4187 = vmatpush1.bf16.msra.mxu0 %v4172
        %4188 = vmatprep.subr.bf16.mxu0 0
        %4189 = vmatpush1.bf16.msra.mxu0 %v4174
        %4190 = vmatprep.subr.bf16.mxu0 0
        %4191 = vmatpush1.bf16.msra.mxu0 %v4176
        %4192 = vmatprep.subr.bf16.mxu0 0
        %4193 = vmatpush1.bf16.msra.mxu0 %v4178
        %4194 = vmatprep.subr.bf16.mxu0 0
        %4195 = vmatpush1.bf16.msra.mxu0 0
        %4196 = vmatprep.subr.bf16.mxu0 0
        %4197 = vmatpush1.bf16.msra.mxu0 0
        %4198 = vmatprep.subr.bf16.mxu0 0
        %4199 = vmatpush1.bf16.msra.mxu0 0
        %4200 = vmatprep.subr.bf16.mxu0 0
        %4201 = vmatpush1.bf16.msra.mxu0 0
        %4202 = vmatprep.subr.bf16.mxu0 0
        %4203 = vmatpush1.bf16.msra.mxu0 0
        %4204 = vmatprep.subr.bf16.mxu0 0
        %4205 = vmatpush1.bf16.msra.mxu0 0
        %4206 = vmatprep.subr.bf16.mxu0 0
        %4207 = vmatpush1.bf16.msra.mxu0 0
        %4208 = vmatprep.subr.bf16.mxu0 0
        %4209 = vmatpush1.bf16.msra.mxu0 0
        %4210 = vmatprep.subr.bf16.mxu0 0
        %4211 = vmatpush1.bf16.msra.mxu0 0
        %4212 = vmatprep.subr.bf16.mxu0 0
        %4213 = vmatpush1.bf16.msra.mxu0 0
        %4214 = vmatprep.subr.bf16.mxu0 0
        %4215 = vmatpush1.bf16.msra.mxu0 0
        %4216 = vmatprep.subr.bf16.mxu0 0
        %4217 = vmatpush1.bf16.msra.mxu0 0
        %4218 = vmatprep.mubr.bf16.mxu0 0
        %4219 = vmatmul.mubr.bf16.gmra.mrb[0].mxu0 %v4184
        %v4220 = vpop.f32.mrb[0].mxu0
        %v4221 = vadd.f32 0.0, %v4220
        %v4222 = vpop.f32.mrb[0].mxu0
        %v4223 = vpop.f32.mrb[0].mxu0
        %v4224 = vpop.f32.mrb[0].mxu0
        %4225 = vdwg.mxu0
        %v4226 = vadd.f32 %v4165, %v4221
        %v4227 = vld [vmem:[%s10] sm:$0xff]
        %4229 = vset.pattern.permute.xlu0 0
        %4230 = vperm.xlu0 %4229, %v4227
        %v4231 = vpop.permute.xlu0 %4230
        %v4233 = vadd.f32 %v4226, %v4231
        %v4234 = vmax.f32 %v4233, 0.0
        %vm4235 = vcmask 130048
        %4236 = vst.msk [vmem:[%s352] sm:$0xff] %vm4235, %v4234
        %s4237 = sand.u32 %s257, 1
        %s4238 = scalar_lea.sflag [#allocation5], %s4237
        %s4239 = sand.u32 %s257, 1
        %s4240 = smul.addr %s4239, 8
        %s4241 = scalar_lea.vmem [#allocation4], %s4240
        // Predicated region
        $region98: #{basic_conv_forward.1} parent=59 // pred_check
          %p4242 = pneg %p267
        $region99: #{basic_conv_forward.1} parent=59 // pred_check_branch
          %4244 = sbr.rel (%p4242) target = $region101
        $region100: #{basic_conv_forward.1} parent=59 // pred_region
          %s4246 = ssub.s32 128, 128
          %4247 = vsyncadd %s4238, %s4246
          %s4248 = sadd.s32 %s30, %s29
          %s4249 = smul.addr %s4248, 128
          %s4250 = scalar_lea.hbm %s11, %s4249
          %s4252 = sshll.u32 %s4241, 4
          %s4253 = int_to_ptr.vmem [resolvable:$true] %s4252
          %4255 = dma.vmem_to_hbm [thread:$0]  %s4253, 128, %s4250, %s4238
        $region101: #{basic_conv_forward.1} parent=59 // pred_fallthru
          _
      $region60: #{basic_conv_forward.1} parent=5 // pred_fallthru
        _
      %p4256 = scmp.le.s32.totalorder 2, %s20
      // Predicated region
      $region102: #{basic_conv_forward.1} parent=5 // pred_check
        %p4257 = pneg %p4256
      $region103: #{basic_conv_forward.1} parent=5 // pred_check_branch
        %4259 = sbr.rel (%p4257) target = $region105
      $region104: #{basic_conv_forward.1} parent=5 // pred_region
        %s4260 = ssub.s32 %s20, 2
        // Predicated region
        $region106: #{basic_conv_forward.1} parent=104 // pred_check
          %p4261 = pneg %p273
        $region107: #{basic_conv_forward.1} parent=104 // pred_check_branch
          %4263 = sbr.rel (%p4261) target = $region109
        $region108: #{basic_conv_forward.1} parent=104 // pred_region
          %s4264 = sand.u32 %s258, 1
          %s4265 = scalar_lea.sflag [#allocation5], %s4264
          %s4266 = sand.u32 %s258, 1
          %s4267 = smul.addr %s4266, 8
          %s4268 = scalar_lea.vmem [#allocation4], %s4267
          %4269 = dma.done %s4265, 128
        $region109: #{basic_conv_forward.1} parent=104 // pred_fallthru
          _
      $region105: #{basic_conv_forward.1} parent=5 // pred_fallthru
        _
    $region6: #{basic_conv_forward.1} parent=1 // loop_footer
      %s24 = sadd.s32 1, %s20
    $region7: #{basic_conv_forward.1} parent=1 // loop_footer_branch
      %19 = sbr.rel target = $region3
    $region8: #{basic_conv_forward.1} parent=1 // loop_exit
      _
    %4270 = vsyncpa [#allocation5], 1
    %s4271 = scalar_lea.sflag [#allocation5], 1
    %4272 = vsyncpa %s4271, 1
  %4273 = vsyncmov [#allocation3]
  %s4274 = vpop.sfrf %4273
  %p4275 = scmp.eq.s32.totalorder %s4274, 0
  %p4276 = pneg %p4275
  %4278 = shalt.err (%p4276)

</llo_original>
